<compile_context>
chip_gen: v6e
topology: v6e:2x2x1
jax: 0.10.0
libtpu: 0.0.40
codegen_flags: <defaults>
</compile_context>

<pallas_src>
import functools

import jax
import jax.numpy as jnp
from jax.experimental import pallas as pl
from jax.experimental.pallas import tpu as pltpu


_MIB = 1024 * 1024


def _dtype_bytes(dt):
    return jnp.dtype(dt).itemsize


def _vmem_capacity_bytes():
    """Generation-aware VMEM size (v5e/v6e: 128 MiB, v7x: 64 MiB)."""
    try:
        return int(pltpu.get_tpu_info().vmem_capacity_bytes)
    except Exception:
        return 64 * _MIB          # conservative (v7x is the smallest)


def _pick_batch_tile(T, cap=128):
    """Batch tile: multiple of 8, prefer >=2 grid steps (v7x has 2 TCs)."""
    if T <= 8:
        return T
    for c in (256, 128, 64, 32, 16, 8):
        if c <= cap and 2 * c <= T and T % c == 0:
            return c
    for c in (256, 128, 64, 32, 16, 8):
        if c <= cap and c <= T and T % c == 0:
            return c
    return min(T, cap)


# ---------------------------------------------------------------------------
# Fused kernel: all GraphFilterFC layers (+ReLU) + flatten + fused MLP head.
# ---------------------------------------------------------------------------
def _fused_arch_kernel(*refs, n_gf, n_fc, has_mlp_feat, out_relu, mxu_dtype):
    it = iter(refs)
    x_ref = next(it)                                        # [tT, F0, N]  (cdt)
    s_ref = next(it)                                        # [N, N]       (cdt)
    gf_refs = [(next(it), next(it)) for _ in range(n_gf)]   # ([K*Fin,Fout],[1,Fout] f32)
    fc_refs = []
    mf_ref = wmf_ref = None
    if n_fc > 0:
        w0_ref, b0_ref = next(it), next(it)                 # [F_last*N, M0], [1, M0]
        if has_mlp_feat:
            mf_ref, wmf_ref = next(it), next(it)            # [tT, n_feat], [n_feat, M0]
        fc_refs.append((w0_ref, b0_ref))
        for _ in range(n_fc - 1):
            fc_refs.append((next(it), next(it)))            # [Din, Dout], [1, Dout]
    out_ref = next(it)                                      # [tT, out_cols] f32
    zcat = next(it)                                         # [tT, maxKF, N] (cdt)

    tT, F0, N = x_ref.shape
    S = s_ref[...]                                          # resident, compute dtype

    # ---- graph-filter stack (every layer, ReLU fused) ----------------------
    y = x_ref[...]                                          # feature-major [tT, Fin, N]
    for wc_ref, b_ref in gf_refs:
        KF, Fout = wc_ref.shape
        Fin = y.shape[1]
        K = KF // Fin

        # K diffusion taps; each hop is ONE 2-D MXU matmul [tT*Fin, N] @ [N, N].
        zcat[:, 0:Fin, :] = y                               # k = 0 (identity tap)
        z = y.reshape(tT * Fin, N)
        for k in range(1, K):
            zf = jnp.dot(z, S, preferred_element_type=jnp.float32)
            z = zf.astype(mxu_dtype)
            zcat[:, k * Fin:(k + 1) * Fin, :] = z.reshape(tT, Fin, N)

        # Single feature-mix matmul with a K*Fin contraction (node-major rows).
        zc = zcat[:, 0:KF, :]
        zc = jnp.transpose(zc, (0, 2, 1)).reshape(tT * N, KF)
        mix = jnp.dot(zc, wc_ref[...], preferred_element_type=jnp.float32)
        mix = jnp.maximum(mix + b_ref[...], 0.0)            # fp32 bias + fused ReLU
        y = jnp.transpose(mix.reshape(tT, N, Fout), (0, 2, 1)).astype(mxu_dtype)

    f_last = y.shape[1]

    if n_fc == 0:
        # No MLP head: emit the torch-order flatten (column = f*N + n).
        # TODO(synk): sub-128-lane slab stores; for large f_last*N permute the
        #             columns outside the kernel for a single lane-dense store.
        for f in range(f_last):
            out_ref[:, f * N:(f + 1) * N] = y[:, f, :].astype(out_ref.dtype)
        return

    # ---- first Linear: torch flatten folded into per-feature matmuls -------
    # out[t,m] = sum_f sum_n y[t,f,n] * W0[f*N+n, m]  -> no flatten scratch, no
    # transpose relayout, no masked slab stores (static ref row-slices only).
    w0_ref, b0_ref = fc_refs[0]
    h = jnp.dot(y[:, 0, :], w0_ref[0:N, :], preferred_element_type=jnp.float32)
    for f in range(1, f_last):
        h += jnp.dot(y[:, f, :], w0_ref[f * N:(f + 1) * N, :],
                     preferred_element_type=jnp.float32)
    if has_mlp_feat:
        # Algebraically identical to torch.cat((flat, mlp_features), 1) @ W0.
        h += jnp.dot(mf_ref[...], wmf_ref[...], preferred_element_type=jnp.float32)
    h = h + b0_ref[...]

    # ---- remaining fused Linear layers (nonlin_mlp=ReLU, Dropout=identity) --
    for w_ref, b_ref in fc_refs[1:]:
        h = jnp.maximum(h, 0.0)
        h = jnp.dot(h.astype(mxu_dtype), w_ref[...],
                    preferred_element_type=jnp.float32) + b_ref[...]
    if out_relu:                                            # un-fused Linear follows
        h = jnp.maximum(h, 0.0)
    out_ref[...] = h.astype(out_ref.dtype)


def fused_forward(x, S, gf_params, fc_params, mlp_features, *, n_fc_fused,
                  out_relu, compute_dtype=jnp.float32, batch_tile=128):
    """Whole GFL stack + flatten + (fused part of) the MLP head in one kernel."""
    T, F0, N = map(int, x.shape)
    n_gf = len(gf_params)
    cdt = compute_dtype
    csz = _dtype_bytes(cdt)

    f_dims = [F0] + [int(W.shape[2]) for (W, _) in gf_params]
    f_last = f_dims[-1]
    max_kf = max([1] + [int(W.shape[0]) * int(W.shape[1]) for (W, _) in gf_params])

    has_mf = (n_fc_fused > 0) and (mlp_features is not None)
    n_feat = int(mlp_features.shape[1]) if has_mf else 0

    if n_fc_fused > 0:
        out_cols = int(fc_params[n_fc_fused - 1][0].shape[1])
    else:
        out_cols = f_last * N

    # ---- VMEM plan (generation-aware): pick tT, set an explicit limit ------
    w_bytes = N * N * csz
    for (W, b) in gf_params:
        w_bytes += int(W.size) * csz + int(b.size) * 4
    for i in range(n_fc_fused):
        W, b = fc_params[i]
        w_bytes += int(W.size) * csz + int(b.size) * 4
    w_bytes *= 2                                    # default double-buffering
    row_bytes = (2 * F0 * N * csz                   # x block (double-buffered)
                 + 2 * out_cols * 4                 # out block
                 + 2 * n_feat * csz                 # mlp_features block
                 + max_kf * N * csz)                # zcat scratch
    vmem_cap = _vmem_capacity_bytes()
    budget = int(0.55 * vmem_cap)

    tT = _pick_batch_tile(T, batch_tile)
    while tT > 8 and w_bytes + tT * row_bytes > budget:
        tT = max(8, (tT // 2 + 7) // 8 * 8)
    est = w_bytes + tT * row_bytes
    vmem_limit = int(min(max(int(est * 1.5), 32 * _MIB), int(0.8 * vmem_cap)))
    grid = (pl.cdiv(T, tT),)

    # ---- inputs: everything the MXU touches is pre-cast to compute_dtype ---
    inputs = [jnp.asarray(x, cdt), jnp.asarray(S, cdt)]
    in_specs = [pl.BlockSpec((tT, F0, N), lambda i: (i, 0, 0)),
                pl.BlockSpec((N, N), lambda i: (0, 0))]
    flops = 0
    for (W, b) in gf_params:
        K, fin, fout = map(int, W.shape)
        inputs += [W.reshape(K * fin, fout).astype(cdt),
                   jnp.asarray(b, jnp.float32).reshape(1, fout)]
        in_specs += [pl.BlockSpec((K * fin, fout), lambda i: (0, 0)),
                     pl.BlockSpec((1, fout), lambda i: (0, 0))]
        flops += (K - 1) * 2 * T * fin * N * N + 2 * T * N * K * fin * fout

    if n_fc_fused > 0:
        W0, b0 = fc_params[0]
        m0 = int(W0.shape[1])
        inputs += [W0[:f_last * N, :].astype(cdt),
                   jnp.asarray(b0, jnp.float32).reshape(1, m0)]
        in_specs += [pl.BlockSpec((f_last * N, m0), lambda i: (0, 0)),
                     pl.BlockSpec((1, m0), lambda i: (0, 0))]
        flops += 2 * T * f_last * N * m0
        if has_mf:
            inputs += [jnp.asarray(mlp_features, cdt),
                       W0[f_last * N:, :].astype(cdt)]
            in_specs += [pl.BlockSpec((tT, n_feat), lambda i: (i, 0)),
                         pl.BlockSpec((n_feat, m0), lambda i: (0, 0))]
            flops += 2 * T * n_feat * m0
        for i in range(1, n_fc_fused):
            W, b = fc_params[i]
            din, dout = map(int, W.shape)
            inputs += [jnp.asarray(W, cdt),
                       jnp.asarray(b, jnp.float32).reshape(1, dout)]
            in_specs += [pl.BlockSpec((din, dout), lambda i: (0, 0)),
                         pl.BlockSpec((1, dout), lambda i: (0, 0))]
            flops += 2 * T * din * dout

    bytes_accessed = sum(int(a.size) * _dtype_bytes(a.dtype) for a in inputs)
    bytes_accessed += T * out_cols * 4

    kernel = functools.partial(
        _fused_arch_kernel, n_gf=n_gf, n_fc=n_fc_fused, has_mlp_feat=has_mf,
        out_relu=out_relu, mxu_dtype=cdt)

    return pl.pallas_call(
        kernel,
        out_shape=jax.ShapeDtypeStruct((T, out_cols), jnp.float32),
        grid=grid,
        in_specs=in_specs,
        out_specs=pl.BlockSpec((tT, out_cols), lambda i: (i, 0)),
        scratch_shapes=[pltpu.VMEM((tT, max_kf, N), cdt)],   # stacked diffusion taps
        compiler_params=pltpu.CompilerParams(
            dimension_semantics=("parallel",),
            vmem_limit_bytes=vmem_limit),
        cost_estimate=pl.CostEstimate(flops=int(flops), transcendentals=0,
                                      bytes_accessed=int(bytes_accessed)),
    )(*inputs)


# ---------------------------------------------------------------------------
# Fallback tiled Linear kernel (only used if the MLP tail is too large to keep
# resident inside the fused kernel): fp32 VMEM accumulator + fused epilogue.
# ---------------------------------------------------------------------------
def _linear_tiled_kernel(x_ref, w_ref, b_ref, o_ref, acc_ref, *, apply_relu):
    k = pl.program_id(2)

    @pl.when(k == 0)
    def _init():
        acc_ref[...] = jnp.zeros_like(acc_ref)

    acc_ref[...] += jnp.dot(x_ref[...], w_ref[...],
                            preferred_element_type=jnp.float32)

    @pl.when(k == pl.num_programs(2) - 1)
    def _finalize():
        y = acc_ref[...] + b_ref[...]
        if apply_relu:
            y = jnp.maximum(y, 0.0)
        o_ref[...] = y.astype(o_ref.dtype)


def _pick_tile(dim, candidates, prefer_split=False):
    if prefer_split:
        for c in candidates:
            if dim % c == 0 and 2 * c <= dim:
                return c
    for c in candidates:
        if dim % c == 0 and c <= dim:
            return c
    return dim


def linear(x, W, b, *, apply_relu, compute_dtype=jnp.float32):
    T, Din = map(int, x.shape)
    Dout = int(W.shape[1])
    cdt = compute_dtype
    csz = _dtype_bytes(cdt)
    tm = _pick_tile(T, (256, 128, 64, 32, 16, 8), prefer_split=True)
    tn = _pick_tile(Dout, (256, 128))
    tk = _pick_tile(Din, (512, 256, 128))
    grid = (T // tm, Dout // tn, Din // tk)

    est = 2 * (tm * tk * csz + tk * tn * csz + tn * 4 + tm * tn * 4) + tm * tn * 4
    vmem_limit = int(min(max(2 * est, 32 * _MIB), int(0.8 * _vmem_capacity_bytes())))

    kernel = functools.partial(_linear_tiled_kernel, apply_relu=apply_relu)
    return pl.pallas_call(
        kernel,
        out_shape=jax.ShapeDtypeStruct((T, Dout), jnp.float32),
        grid=grid,
        in_specs=[pl.BlockSpec((tm, tk), lambda i, j, k: (i, k)),
                  pl.BlockSpec((tk, tn), lambda i, j, k: (k, j)),
                  pl.BlockSpec((1, tn), lambda i, j, k: (0, j))],
        out_specs=pl.BlockSpec((tm, tn), lambda i, j, k: (i, j)),
        scratch_shapes=[pltpu.VMEM((tm, tn), jnp.float32)],
        compiler_params=pltpu.CompilerParams(
            dimension_semantics=("parallel", "parallel", "arbitrary"),
            vmem_limit_bytes=vmem_limit),
        cost_estimate=pl.CostEstimate(
            flops=2 * T * Din * Dout, transcendentals=0,
            bytes_accessed=(T * Din + Din * Dout) * csz + (Dout + T * Dout) * 4),
    )(x.astype(cdt), jnp.asarray(W, cdt), jnp.asarray(b, jnp.float32).reshape(1, Dout))


# ---------------------------------------------------------------------------
# BasicArch in JAX/Pallas
# ---------------------------------------------------------------------------
class BasicArchPallas:
    """JAX/Pallas port of gnn/arch.py::BasicArch (ReLU nonlinearities).

    compute_dtype=jnp.bfloat16 is the production setting for v6e/v7x: all
    operands are pre-cast once in the wrappers (half DMA / half resident VMEM,
    bf16 MXU inputs with fp32 accumulation).  The default float32 keeps the
    strict self-check in __main__ exact.
    """

    def __init__(self, S, F, K, M, n_mlp_feat=0, *, key,
                 compute_dtype=jnp.float32):
        self.S = jnp.asarray(S, jnp.float32)
        self.N = int(self.S.shape[0])
        self.F = list(F)
        self.K = int(K)
        self.M = list(M)
        self.n_mlp_feat = int(n_mlp_feat)
        self.compute_dtype = compute_dtype

        self.gf_params = []   # (W [K, Fin, Fout], b [Fout])
        self.fc_params = []   # (W [Din, Dout],    b [Dout])

        for l in range(len(self.F) - 1):
            fin, fout = self.F[l], self.F[l + 1]
            key, k1, k2 = jax.random.split(key, 3)
            stdv = 1.0 / jnp.sqrt(jnp.float32(self.K * fin))
            W = jax.random.uniform(k1, (self.K, fin, fout), jnp.float32,
                                   -stdv, stdv)
            b = jax.random.uniform(k2, (fout,), jnp.float32, -stdv, stdv)
            self.gf_params.append((W, b))

        if len(self.F) > 0:
            first_in = self.N * self.F[-1] + self.n_mlp_feat
        else:
            first_in = self.N * 13 + self.n_mlp_feat
        dims = [first_in] + self.M
        for m in range(len(self.M)):
            din, dout = dims[m], dims[m + 1]
            key, k1, k2 = jax.random.split(key, 3)
            stdv = 1.0 / jnp.sqrt(jnp.float32(din))
            W = jax.random.uniform(k1, (din, dout), jnp.float32, -stdv, stdv)
            b = jax.random.uniform(k2, (dout,), jnp.float32, -stdv, stdv)
            self.fc_params.append((W, b))

    def __call__(self, x, mlp_features=None):
        x = jnp.asarray(x, jnp.float32)
        if x.ndim == 2:                       # [T, N] -> [T, 1, N]
            assert self.F[0] == 1
            x = x[:, None, :]
        T = int(x.shape[0])
        assert int(x.shape[2]) == self.N
        if self.n_mlp_feat > 0:
            assert mlp_features is not None
            assert mlp_features.shape == (T, self.n_mlp_feat)
            mlp_features = jnp.asarray(mlp_features, jnp.float32)
        else:
            mlp_features = None

        n_fc = len(self.fc_params)

        # Fuse as many FC layers into the single kernel as the resident-weight
        # VMEM budget allows (all of them for typical GNN heads).
        csz = _dtype_bytes(self.compute_dtype)
        budget = int(0.35 * _vmem_capacity_bytes())
        resident = 2 * (int(self.S.size) * csz
                        + sum(int(W.size) * csz + int(b.size) * 4
                              for (W, b) in self.gf_params))
        n_fused = 0
        for i, (W, b) in enumerate(self.fc_params):
            resident += 2 * (int(W.size) * csz + int(b.size) * 4)
            if i == 0 or resident <= budget:
                n_fused = i + 1
            else:
                break

        y = fused_forward(x, self.S, self.gf_params, self.fc_params,
                          mlp_features, n_fc_fused=n_fused,
                          out_relu=(0 < n_fused < n_fc),
                          compute_dtype=self.compute_dtype)

        if n_fc == 0:
            if mlp_features is not None:
                y = jnp.concatenate([y, mlp_features], axis=1)
            return y

        # Fallback path: FC layers that did not fit the fused kernel's budget.
        for i in range(n_fused, n_fc):
            W, b = self.fc_params[i]
            y = linear(y, W, b, apply_relu=(i < n_fc - 1),
                       compute_dtype=self.compute_dtype)
        return y


# ---------------------------------------------------------------------------
# Pure-JAX reference (same math, no Pallas) for correctness checking.
# ---------------------------------------------------------------------------
def reference_forward(model, x, mlp_features=None):
    x = jnp.asarray(x, jnp.float32)
    if x.ndim == 2:
        x = x[:, None, :]
    y = x
    for (W, b) in model.gf_params:
        K = W.shape[0]
        z = y
        acc = jnp.einsum("tfn,fg->tgn", z, W[0])
        for k in range(1, K):
            z = jnp.einsum("tfn,nm->tfm", z, model.S)
            acc = acc + jnp.einsum("tfn,fg->tgn", z, W[k])
        y = jnp.maximum(acc + b[None, :, None], 0.0)
    T = y.shape[0]
    y = y.reshape(T, -1)
    if mlp_features is not None:
        y = jnp.concatenate([y, jnp.asarray(mlp_features, jnp.float32)], axis=1)
    n_fc = len(model.fc_params)
    for i, (W, b) in enumerate(model.fc_params):
        y = y @ W + b
        if i < n_fc - 1:
            y = jnp.maximum(y, 0.0)
    return y


# ---------------------------------------------------------------------------
if __name__ == "__main__":
    key = jax.random.PRNGKey(0)

    N = 16                 # graph nodes
    F = [2, 4, 8]          # feature widths per graph-filter layer
    K = 3                  # filter taps
    M = [32, 16]           # MLP widths
    T = 8                  # batch
    n_mlp_feat = 5         # extra per-sample MLP features

    key, ks, kx, km, kf = jax.random.split(key, 5)
    A = jax.random.uniform(ks, (N, N), jnp.float32)
    S = (A + A.T) / 2.0 / jnp.float32(N)      # symmetric, crudely normalized

    x = jax.random.normal(kx, (T, F[0], N), jnp.float32)
    mf = jax.random.normal(kf, (T, n_mlp_feat), jnp.float32)

    # Model with extra MLP features (fp32 exact path).
    model = BasicArchPallas(S, F, K, M, n_mlp_feat=n_mlp_feat, key=km)
    out = jax.block_until_ready(model(x, mf))
    ref = jax.block_until_ready(reference_forward(model, x, mf))
    assert out.shape == (T, M[-1]), out.shape
    assert jnp.allclose(out, ref, atol=1e-3, rtol=1e-3), \
        f"max abs err {jnp.max(jnp.abs(out - ref))}"

    # Model without extra MLP features.
    model2 = BasicArchPallas(S, F, K, M, n_mlp_feat=0, key=km)
    out2 = jax.block_until_ready(model2(x))
    ref2 = jax.block_until_ready(reference_forward(model2, x))
    assert out2.shape == (T, M[-1]), out2.shape
    assert jnp.allclose(out2, ref2, atol=1e-3, rtol=1e-3), \
        f"max abs err {jnp.max(jnp.abs(out2 - ref2))}"

    print("KERNEL_OK")
</pallas_src>

<mosaic_0001>
module attributes {stable_mosaic.version = 11 : i64} {
  func.func @_fused_arch_kernel(%arg0: i32, %arg1: memref<8x2x16xf32, #tpu.memory_space<vmem>>, %arg2: memref<16x16xf32, #tpu.memory_space<vmem>>, %arg3: memref<6x4xf32, #tpu.memory_space<vmem>>, %arg4: memref<1x4xf32, #tpu.memory_space<vmem>>, %arg5: memref<12x8xf32, #tpu.memory_space<vmem>>, %arg6: memref<1x8xf32, #tpu.memory_space<vmem>>, %arg7: memref<128x32xf32, #tpu.memory_space<vmem>>, %arg8: memref<1x32xf32, #tpu.memory_space<vmem>>, %arg9: memref<8x5xf32, #tpu.memory_space<vmem>>, %arg10: memref<5x32xf32, #tpu.memory_space<vmem>>, %arg11: memref<32x16xf32, #tpu.memory_space<vmem>>, %arg12: memref<1x16xf32, #tpu.memory_space<vmem>>, %arg13: memref<8x16xf32, #tpu.memory_space<vmem>>, %arg14: memref<8x12x16xf32, #tpu.memory_space<vmem>>) attributes {dimension_semantics = [#tpu.dimension_semantics<parallel>], iteration_bounds = array<i64: 1>, scalar_prefetch = 0 : i64, scratch_operands = 1 : i64, tpu.core_type = #tpu.core_type<tc>, window_params = [{transform_indices = @transform_0, window_bounds = array<i64: 8, 2, 16>}, {pipeline_mode = #tpu.pipeline_mode<synchronous>, transform_indices = @transform_1, window_bounds = array<i64: 16, 16>}, {pipeline_mode = #tpu.pipeline_mode<synchronous>, transform_indices = @transform_2, window_bounds = array<i64: 6, 4>}, {pipeline_mode = #tpu.pipeline_mode<synchronous>, transform_indices = @transform_3, window_bounds = array<i64: 1, 4>}, {pipeline_mode = #tpu.pipeline_mode<synchronous>, transform_indices = @transform_4, window_bounds = array<i64: 12, 8>}, {pipeline_mode = #tpu.pipeline_mode<synchronous>, transform_indices = @transform_5, window_bounds = array<i64: 1, 8>}, {pipeline_mode = #tpu.pipeline_mode<synchronous>, transform_indices = @transform_6, window_bounds = array<i64: 128, 32>}, {pipeline_mode = #tpu.pipeline_mode<synchronous>, transform_indices = @transform_7, window_bounds = array<i64: 1, 32>}, {transform_indices = @transform_8, window_bounds = array<i64: 8, 5>}, {pipeline_mode = #tpu.pipeline_mode<synchronous>, transform_indices = @transform_9, window_bounds = array<i64: 5, 32>}, {pipeline_mode = #tpu.pipeline_mode<synchronous>, transform_indices = @transform_10, window_bounds = array<i64: 32, 16>}, {pipeline_mode = #tpu.pipeline_mode<synchronous>, transform_indices = @transform_11, window_bounds = array<i64: 1, 16>}, {transform_indices = @transform_12, window_bounds = array<i64: 8, 16>}]} {
    %c0 = arith.constant 0 : index
    %c0_0 = arith.constant 0 : index
    %0 = vector.load %arg2[%c0, %c0_0] : memref<16x16xf32, #tpu.memory_space<vmem>>, vector<16x16xf32>
    %c0_1 = arith.constant 0 : index
    %c0_2 = arith.constant 0 : index
    %c0_3 = arith.constant 0 : index
    %1 = vector.load %arg1[%c0_1, %c0_2, %c0_3] : memref<8x2x16xf32, #tpu.memory_space<vmem>>, vector<8x2x16xf32>
    %c0_4 = arith.constant 0 : index
    %c0_5 = arith.constant 0 : index
    %c0_6 = arith.constant 0 : index
    %2 = vector.load %arg14[%c0_4, %c0_5, %c0_6] : memref<8x12x16xf32, #tpu.memory_space<vmem>>, vector<8x2x16xf32>
    tpu.vector_store %arg14[%c0_4, %c0_5, %c0_6], %1 {strides = array<i32>} : memref<8x12x16xf32, #tpu.memory_space<vmem>>, vector<8x2x16xf32>,
    %3 = vector.shape_cast %1 : vector<8x2x16xf32> to vector<16x16xf32>
    %cst = arith.constant dense<0.000000e+00> : vector<16x16xf32>
    %4 = tpu.matmul %3, %0, %cst {dimension_numbers = #tpu.dot_dimension_numbers<[1], [0], [0], [1], [0, 0, 1, 1], [], []>} : vector<16x16xf32>, vector<16x16xf32>, vector<16x16xf32> -> vector<16x16xf32>
    %5 = vector.shape_cast %4 : vector<16x16xf32> to vector<8x2x16xf32>
    %c0_7 = arith.constant 0 : index
    %c2 = arith.constant 2 : index
    %c0_8 = arith.constant 0 : index
    %6 = vector.load %arg14[%c0_7, %c2, %c0_8] : memref<8x12x16xf32, #tpu.memory_space<vmem>>, vector<8x2x16xf32>
    tpu.vector_store %arg14[%c0_7, %c2, %c0_8], %5 {strides = array<i32>} : memref<8x12x16xf32, #tpu.memory_space<vmem>>, vector<8x2x16xf32>,
    %cst_9 = arith.constant dense<0.000000e+00> : vector<16x16xf32>
    %7 = tpu.matmul %4, %0, %cst_9 {dimension_numbers = #tpu.dot_dimension_numbers<[1], [0], [0], [1], [0, 0, 1, 1], [], []>} : vector<16x16xf32>, vector<16x16xf32>, vector<16x16xf32> -> vector<16x16xf32>
    %8 = vector.shape_cast %7 : vector<16x16xf32> to vector<8x2x16xf32>
    %c0_10 = arith.constant 0 : index
    %c4 = arith.constant 4 : index
    %c0_11 = arith.constant 0 : index
    %9 = vector.load %arg14[%c0_10, %c4, %c0_11] : memref<8x12x16xf32, #tpu.memory_space<vmem>>, vector<8x2x16xf32>
    tpu.vector_store %arg14[%c0_10, %c4, %c0_11], %8 {strides = array<i32>} : memref<8x12x16xf32, #tpu.memory_space<vmem>>, vector<8x2x16xf32>,
    %c0_12 = arith.constant 0 : index
    %c0_13 = arith.constant 0 : index
    %c0_14 = arith.constant 0 : index
    %10 = vector.load %arg14[%c0_12, %c0_13, %c0_14] : memref<8x12x16xf32, #tpu.memory_space<vmem>>, vector<8x6x16xf32>
    %11 = tpu.transpose %10, [0, 2, 1] : vector<8x6x16xf32> -> vector<8x16x6xf32>
    %12 = vector.shape_cast %11 : vector<8x16x6xf32> to vector<128x6xf32>
    %c0_15 = arith.constant 0 : index
    %c0_16 = arith.constant 0 : index
    %13 = vector.load %arg3[%c0_15, %c0_16] : memref<6x4xf32, #tpu.memory_space<vmem>>, vector<6x4xf32>
    %cst_17 = arith.constant dense<0.000000e+00> : vector<128x4xf32>
    %14 = tpu.matmul %12, %13, %cst_17 {dimension_numbers = #tpu.dot_dimension_numbers<[1], [0], [0], [1], [0, 0, 1, 1], [], []>} : vector<128x6xf32>, vector<6x4xf32>, vector<128x4xf32> -> vector<128x4xf32>
    %c0_18 = arith.constant 0 : index
    %c0_19 = arith.constant 0 : index
    %15 = vector.load %arg4[%c0_18, %c0_19] : memref<1x4xf32, #tpu.memory_space<vmem>>, vector<1x4xf32>
    %16 = vector.broadcast %15 : vector<1x4xf32> to vector<128x4xf32>
    %17 = arith.addf %14, %16 : vector<128x4xf32>
    %cst_20 = arith.constant 0.000000e+00 : f32
    %18 = vector.broadcast %cst_20 : f32 to vector<128x4xf32>
    %19 = arith.maximumf %17, %18 : vector<128x4xf32>
    %20 = vector.shape_cast %19 : vector<128x4xf32> to vector<8x16x4xf32>
    %21 = tpu.transpose %20, [0, 2, 1] : vector<8x16x4xf32> -> vector<8x4x16xf32>
    %c0_21 = arith.constant 0 : index
    %c0_22 = arith.constant 0 : index
    %c0_23 = arith.constant 0 : index
    %22 = vector.load %arg14[%c0_21, %c0_22, %c0_23] : memref<8x12x16xf32, #tpu.memory_space<vmem>>, vector<8x4x16xf32>
    tpu.vector_store %arg14[%c0_21, %c0_22, %c0_23], %21 {strides = array<i32>} : memref<8x12x16xf32, #tpu.memory_space<vmem>>, vector<8x4x16xf32>,
    %23 = vector.shape_cast %21 : vector<8x4x16xf32> to vector<32x16xf32>
    %cst_24 = arith.constant dense<0.000000e+00> : vector<32x16xf32>
    %24 = tpu.matmul %23, %0, %cst_24 {dimension_numbers = #tpu.dot_dimension_numbers<[1], [0], [0], [1], [0, 0, 1, 1], [], []>} : vector<32x16xf32>, vector<16x16xf32>, vector<32x16xf32> -> vector<32x16xf32>
    %25 = vector.shape_cast %24 : vector<32x16xf32> to vector<8x4x16xf32>
    %c0_25 = arith.constant 0 : index
    %c4_26 = arith.constant 4 : index
    %c0_27 = arith.constant 0 : index
    %26 = vector.load %arg14[%c0_25, %c4_26, %c0_27] : memref<8x12x16xf32, #tpu.memory_space<vmem>>, vector<8x4x16xf32>
    tpu.vector_store %arg14[%c0_25, %c4_26, %c0_27], %25 {strides = array<i32>} : memref<8x12x16xf32, #tpu.memory_space<vmem>>, vector<8x4x16xf32>,
    %cst_28 = arith.constant dense<0.000000e+00> : vector<32x16xf32>
    %27 = tpu.matmul %24, %0, %cst_28 {dimension_numbers = #tpu.dot_dimension_numbers<[1], [0], [0], [1], [0, 0, 1, 1], [], []>} : vector<32x16xf32>, vector<16x16xf32>, vector<32x16xf32> -> vector<32x16xf32>
    %28 = vector.shape_cast %27 : vector<32x16xf32> to vector<8x4x16xf32>
    %c0_29 = arith.constant 0 : index
    %c8 = arith.constant 8 : index
    %c0_30 = arith.constant 0 : index
    %29 = vector.load %arg14[%c0_29, %c8, %c0_30] : memref<8x12x16xf32, #tpu.memory_space<vmem>>, vector<8x4x16xf32>
    tpu.vector_store %arg14[%c0_29, %c8, %c0_30], %28 {strides = array<i32>} : memref<8x12x16xf32, #tpu.memory_space<vmem>>, vector<8x4x16xf32>,
    %c0_31 = arith.constant 0 : index
    %c0_32 = arith.constant 0 : index
    %c0_33 = arith.constant 0 : index
    %30 = vector.load %arg14[%c0_31, %c0_32, %c0_33] : memref<8x12x16xf32, #tpu.memory_space<vmem>>, vector<8x12x16xf32>
    %31 = tpu.transpose %30, [0, 2, 1] : vector<8x12x16xf32> -> vector<8x16x12xf32>
    %32 = vector.shape_cast %31 : vector<8x16x12xf32> to vector<128x12xf32>
    %c0_34 = arith.constant 0 : index
    %c0_35 = arith.constant 0 : index
    %33 = vector.load %arg5[%c0_34, %c0_35] : memref<12x8xf32, #tpu.memory_space<vmem>>, vector<12x8xf32>
    %cst_36 = arith.constant dense<0.000000e+00> : vector<128x8xf32>
    %34 = tpu.matmul %32, %33, %cst_36 {dimension_numbers = #tpu.dot_dimension_numbers<[1], [0], [0], [1], [0, 0, 1, 1], [], []>} : vector<128x12xf32>, vector<12x8xf32>, vector<128x8xf32> -> vector<128x8xf32>
    %c0_37 = arith.constant 0 : index
    %c0_38 = arith.constant 0 : index
    %35 = vector.load %arg6[%c0_37, %c0_38] : memref<1x8xf32, #tpu.memory_space<vmem>>, vector<1x8xf32>
    %36 = vector.broadcast %35 : vector<1x8xf32> to vector<128x8xf32>
    %37 = arith.addf %34, %36 : vector<128x8xf32>
    %cst_39 = arith.constant 0.000000e+00 : f32
    %38 = vector.broadcast %cst_39 : f32 to vector<128x8xf32>
    %39 = arith.maximumf %37, %38 : vector<128x8xf32>
    %40 = vector.shape_cast %39 : vector<128x8xf32> to vector<8x16x8xf32>
    %41 = tpu.transpose %40, [0, 2, 1] : vector<8x16x8xf32> -> vector<8x8x16xf32>
    %42 = vector.extract_strided_slice %41 {offsets = [0, 0, 0], sizes = [8, 1, 16], strides = [1, 1, 1]} : vector<8x8x16xf32> to vector<8x1x16xf32>
    %43 = vector.shape_cast %42 : vector<8x1x16xf32> to vector<8x16xf32>
    %c0_40 = arith.constant 0 : index
    %c0_41 = arith.constant 0 : index
    %44 = vector.load %arg7[%c0_40, %c0_41] : memref<128x32xf32, #tpu.memory_space<vmem>>, vector<16x32xf32>
    %cst_42 = arith.constant dense<0.000000e+00> : vector<8x32xf32>
    %45 = tpu.matmul %43, %44, %cst_42 {dimension_numbers = #tpu.dot_dimension_numbers<[1], [0], [0], [1], [0, 0, 1, 1], [], []>} : vector<8x16xf32>, vector<16x32xf32>, vector<8x32xf32> -> vector<8x32xf32>
    %46 = vector.extract_strided_slice %41 {offsets = [0, 1, 0], sizes = [8, 1, 16], strides = [1, 1, 1]} : vector<8x8x16xf32> to vector<8x1x16xf32>
    %47 = vector.shape_cast %46 : vector<8x1x16xf32> to vector<8x16xf32>
    %c16 = arith.constant 16 : index
    %c0_43 = arith.constant 0 : index
    %48 = vector.load %arg7[%c16, %c0_43] : memref<128x32xf32, #tpu.memory_space<vmem>>, vector<16x32xf32>
    %cst_44 = arith.constant dense<0.000000e+00> : vector<8x32xf32>
    %49 = tpu.matmul %47, %48, %cst_44 {dimension_numbers = #tpu.dot_dimension_numbers<[1], [0], [0], [1], [0, 0, 1, 1], [], []>} : vector<8x16xf32>, vector<16x32xf32>, vector<8x32xf32> -> vector<8x32xf32>
    %50 = arith.addf %45, %49 : vector<8x32xf32>
    %51 = vector.extract_strided_slice %41 {offsets = [0, 2, 0], sizes = [8, 1, 16], strides = [1, 1, 1]} : vector<8x8x16xf32> to vector<8x1x16xf32>
    %52 = vector.shape_cast %51 : vector<8x1x16xf32> to vector<8x16xf32>
    %c32 = arith.constant 32 : index
    %c0_45 = arith.constant 0 : index
    %53 = vector.load %arg7[%c32, %c0_45] : memref<128x32xf32, #tpu.memory_space<vmem>>, vector<16x32xf32>
    %cst_46 = arith.constant dense<0.000000e+00> : vector<8x32xf32>
    %54 = tpu.matmul %52, %53, %cst_46 {dimension_numbers = #tpu.dot_dimension_numbers<[1], [0], [0], [1], [0, 0, 1, 1], [], []>} : vector<8x16xf32>, vector<16x32xf32>, vector<8x32xf32> -> vector<8x32xf32>
    %55 = arith.addf %50, %54 : vector<8x32xf32>
    %56 = vector.extract_strided_slice %41 {offsets = [0, 3, 0], sizes = [8, 1, 16], strides = [1, 1, 1]} : vector<8x8x16xf32> to vector<8x1x16xf32>
    %57 = vector.shape_cast %56 : vector<8x1x16xf32> to vector<8x16xf32>
    %c48 = arith.constant 48 : index
    %c0_47 = arith.constant 0 : index
    %58 = vector.load %arg7[%c48, %c0_47] : memref<128x32xf32, #tpu.memory_space<vmem>>, vector<16x32xf32>
    %cst_48 = arith.constant dense<0.000000e+00> : vector<8x32xf32>
    %59 = tpu.matmul %57, %58, %cst_48 {dimension_numbers = #tpu.dot_dimension_numbers<[1], [0], [0], [1], [0, 0, 1, 1], [], []>} : vector<8x16xf32>, vector<16x32xf32>, vector<8x32xf32> -> vector<8x32xf32>
    %60 = arith.addf %55, %59 : vector<8x32xf32>
    %61 = vector.extract_strided_slice %41 {offsets = [0, 4, 0], sizes = [8, 1, 16], strides = [1, 1, 1]} : vector<8x8x16xf32> to vector<8x1x16xf32>
    %62 = vector.shape_cast %61 : vector<8x1x16xf32> to vector<8x16xf32>
    %c64 = arith.constant 64 : index
    %c0_49 = arith.constant 0 : index
    %63 = vector.load %arg7[%c64, %c0_49] : memref<128x32xf32, #tpu.memory_space<vmem>>, vector<16x32xf32>
    %cst_50 = arith.constant dense<0.000000e+00> : vector<8x32xf32>
    %64 = tpu.matmul %62, %63, %cst_50 {dimension_numbers = #tpu.dot_dimension_numbers<[1], [0], [0], [1], [0, 0, 1, 1], [], []>} : vector<8x16xf32>, vector<16x32xf32>, vector<8x32xf32> -> vector<8x32xf32>
    %65 = arith.addf %60, %64 : vector<8x32xf32>
    %66 = vector.extract_strided_slice %41 {offsets = [0, 5, 0], sizes = [8, 1, 16], strides = [1, 1, 1]} : vector<8x8x16xf32> to vector<8x1x16xf32>
    %67 = vector.shape_cast %66 : vector<8x1x16xf32> to vector<8x16xf32>
    %c80 = arith.constant 80 : index
    %c0_51 = arith.constant 0 : index
    %68 = vector.load %arg7[%c80, %c0_51] : memref<128x32xf32, #tpu.memory_space<vmem>>, vector<16x32xf32>
    %cst_52 = arith.constant dense<0.000000e+00> : vector<8x32xf32>
    %69 = tpu.matmul %67, %68, %cst_52 {dimension_numbers = #tpu.dot_dimension_numbers<[1], [0], [0], [1], [0, 0, 1, 1], [], []>} : vector<8x16xf32>, vector<16x32xf32>, vector<8x32xf32> -> vector<8x32xf32>
    %70 = arith.addf %65, %69 : vector<8x32xf32>
    %71 = vector.extract_strided_slice %41 {offsets = [0, 6, 0], sizes = [8, 1, 16], strides = [1, 1, 1]} : vector<8x8x16xf32> to vector<8x1x16xf32>
    %72 = vector.shape_cast %71 : vector<8x1x16xf32> to vector<8x16xf32>
    %c96 = arith.constant 96 : index
    %c0_53 = arith.constant 0 : index
    %73 = vector.load %arg7[%c96, %c0_53] : memref<128x32xf32, #tpu.memory_space<vmem>>, vector<16x32xf32>
    %cst_54 = arith.constant dense<0.000000e+00> : vector<8x32xf32>
    %74 = tpu.matmul %72, %73, %cst_54 {dimension_numbers = #tpu.dot_dimension_numbers<[1], [0], [0], [1], [0, 0, 1, 1], [], []>} : vector<8x16xf32>, vector<16x32xf32>, vector<8x32xf32> -> vector<8x32xf32>
    %75 = arith.addf %70, %74 : vector<8x32xf32>
    %76 = vector.extract_strided_slice %41 {offsets = [0, 7, 0], sizes = [8, 1, 16], strides = [1, 1, 1]} : vector<8x8x16xf32> to vector<8x1x16xf32>
    %77 = vector.shape_cast %76 : vector<8x1x16xf32> to vector<8x16xf32>
    %c112 = arith.constant 112 : index
    %c0_55 = arith.constant 0 : index
    %78 = vector.load %arg7[%c112, %c0_55] : memref<128x32xf32, #tpu.memory_space<vmem>>, vector<16x32xf32>
    %cst_56 = arith.constant dense<0.000000e+00> : vector<8x32xf32>
    %79 = tpu.matmul %77, %78, %cst_56 {dimension_numbers = #tpu.dot_dimension_numbers<[1], [0], [0], [1], [0, 0, 1, 1], [], []>} : vector<8x16xf32>, vector<16x32xf32>, vector<8x32xf32> -> vector<8x32xf32>
    %80 = arith.addf %75, %79 : vector<8x32xf32>
    %c0_57 = arith.constant 0 : index
    %c0_58 = arith.constant 0 : index
    %81 = vector.load %arg9[%c0_57, %c0_58] : memref<8x5xf32, #tpu.memory_space<vmem>>, vector<8x5xf32>
    %c0_59 = arith.constant 0 : index
    %c0_60 = arith.constant 0 : index
    %82 = vector.load %arg10[%c0_59, %c0_60] : memref<5x32xf32, #tpu.memory_space<vmem>>, vector<5x32xf32>
    %cst_61 = arith.constant dense<0.000000e+00> : vector<8x32xf32>
    %83 = tpu.matmul %81, %82, %cst_61 {dimension_numbers = #tpu.dot_dimension_numbers<[1], [0], [0], [1], [0, 0, 1, 1], [], []>} : vector<8x5xf32>, vector<5x32xf32>, vector<8x32xf32> -> vector<8x32xf32>
    %84 = arith.addf %80, %83 : vector<8x32xf32>
    %c0_62 = arith.constant 0 : index
    %c0_63 = arith.constant 0 : index
    %85 = vector.load %arg8[%c0_62, %c0_63] : memref<1x32xf32, #tpu.memory_space<vmem>>, vector<1x32xf32>
    %86 = vector.broadcast %85 : vector<1x32xf32> to vector<8x32xf32>
    %87 = arith.addf %84, %86 : vector<8x32xf32>
    %cst_64 = arith.constant 0.000000e+00 : f32
    %88 = vector.broadcast %cst_64 : f32 to vector<8x32xf32>
    %89 = arith.maximumf %87, %88 : vector<8x32xf32>
    %c0_65 = arith.constant 0 : index
    %c0_66 = arith.constant 0 : index
    %90 = vector.load %arg11[%c0_65, %c0_66] : memref<32x16xf32, #tpu.memory_space<vmem>>, vector<32x16xf32>
    %cst_67 = arith.constant dense<0.000000e+00> : vector<8x16xf32>
    %91 = tpu.matmul %89, %90, %cst_67 {dimension_numbers = #tpu.dot_dimension_numbers<[1], [0], [0], [1], [0, 0, 1, 1], [], []>} : vector<8x32xf32>, vector<32x16xf32>, vector<8x16xf32> -> vector<8x16xf32>
    %c0_68 = arith.constant 0 : index
    %c0_69 = arith.constant 0 : index
    %92 = vector.load %arg12[%c0_68, %c0_69] : memref<1x16xf32, #tpu.memory_space<vmem>>, vector<1x16xf32>
    %93 = vector.broadcast %92 : vector<1x16xf32> to vector<8x16xf32>
    %94 = arith.addf %91, %93 : vector<8x16xf32>
    %c0_70 = arith.constant 0 : index
    %c0_71 = arith.constant 0 : index
    %95 = vector.load %arg13[%c0_70, %c0_71] : memref<8x16xf32, #tpu.memory_space<vmem>>, vector<8x16xf32>
    tpu.vector_store %arg13[%c0_70, %c0_71], %94 {strides = array<i32>} : memref<8x16xf32, #tpu.memory_space<vmem>>, vector<8x16xf32>,
    return
  }
  func.func @transform_0(%arg0: i32) -> (i32, i32, i32) {
    %c0_i32 = arith.constant 0 : i32
    %c0_i32_0 = arith.constant 0 : i32
    %c0_i32_1 = arith.constant 0 : i32
    return %arg0, %c0_i32, %c0_i32_0 : i32, i32, i32
  }
  func.func @transform_1(%arg0: i32) -> (i32, i32) {
    %c0_i32 = arith.constant 0 : i32
    %c0_i32_0 = arith.constant 0 : i32
    %c0_i32_1 = arith.constant 0 : i32
    return %c0_i32, %c0_i32_0 : i32, i32
  }
  func.func @transform_2(%arg0: i32) -> (i32, i32) {
    %c0_i32 = arith.constant 0 : i32
    %c0_i32_0 = arith.constant 0 : i32
    %c0_i32_1 = arith.constant 0 : i32
    return %c0_i32, %c0_i32_0 : i32, i32
  }
  func.func @transform_3(%arg0: i32) -> (i32, i32) {
    %c0_i32 = arith.constant 0 : i32
    %c0_i32_0 = arith.constant 0 : i32
    %c0_i32_1 = arith.constant 0 : i32
    return %c0_i32, %c0_i32_0 : i32, i32
  }
  func.func @transform_4(%arg0: i32) -> (i32, i32) {
    %c0_i32 = arith.constant 0 : i32
    %c0_i32_0 = arith.constant 0 : i32
    %c0_i32_1 = arith.constant 0 : i32
    return %c0_i32, %c0_i32_0 : i32, i32
  }
  func.func @transform_5(%arg0: i32) -> (i32, i32) {
    %c0_i32 = arith.constant 0 : i32
    %c0_i32_0 = arith.constant 0 : i32
    %c0_i32_1 = arith.constant 0 : i32
    return %c0_i32, %c0_i32_0 : i32, i32
  }
  func.func @transform_6(%arg0: i32) -> (i32, i32) {
    %c0_i32 = arith.constant 0 : i32
    %c0_i32_0 = arith.constant 0 : i32
    %c0_i32_1 = arith.constant 0 : i32
    return %c0_i32, %c0_i32_0 : i32, i32
  }
  func.func @transform_7(%arg0: i32) -> (i32, i32) {
    %c0_i32 = arith.constant 0 : i32
    %c0_i32_0 = arith.constant 0 : i32
    %c0_i32_1 = arith.constant 0 : i32
    return %c0_i32, %c0_i32_0 : i32, i32
  }
  func.func @transform_8(%arg0: i32) -> (i32, i32) {
    %c0_i32 = arith.constant 0 : i32
    %c0_i32_0 = arith.constant 0 : i32
    return %arg0, %c0_i32 : i32, i32
  }
  func.func @transform_9(%arg0: i32) -> (i32, i32) {
    %c0_i32 = arith.constant 0 : i32
    %c0_i32_0 = arith.constant 0 : i32
    %c0_i32_1 = arith.constant 0 : i32
    return %c0_i32, %c0_i32_0 : i32, i32
  }
  func.func @transform_10(%arg0: i32) -> (i32, i32) {
    %c0_i32 = arith.constant 0 : i32
    %c0_i32_0 = arith.constant 0 : i32
    %c0_i32_1 = arith.constant 0 : i32
    return %c0_i32, %c0_i32_0 : i32, i32
  }
  func.func @transform_11(%arg0: i32) -> (i32, i32) {
    %c0_i32 = arith.constant 0 : i32
    %c0_i32_0 = arith.constant 0 : i32
    %c0_i32_1 = arith.constant 0 : i32
    return %c0_i32, %c0_i32_0 : i32, i32
  }
  func.func @transform_12(%arg0: i32) -> (i32, i32) {
    %c0_i32 = arith.constant 0 : i32
    %c0_i32_0 = arith.constant 0 : i32
    return %arg0, %c0_i32 : i32, i32
  }
}

</mosaic_0001>

<llo_original>
// kernel: tpu_custom_call.1
$region0: #{tpu_custom_call.1}
  #allocation0 [shape = 'u32[]', space=smem, size = 0x4, offset = 0x4, fixed_abs, tag = 'smem constant byte address 0x4 - core index']
  #allocation1 [shape = 'u32[144,128]{1,0:T(1,128)}', space=vmem, size = 0x12000, scoped, tag = 'internal scratch']
  #allocation2 [shape = 'f32[8,12,16]{2,1,0:T(8,128)}', space=vmem, size = 0x10000, scoped, tag = 'scratch operand']
  %s0 = inlined_call_operand.vmem [shape: f32[8,2,16], index: 0, kind: input, shape index: {}]
  %s1 = inlined_call_operand.vmem [shape: f32[16,16], index: 1, kind: input, shape index: {}]
  %s2 = inlined_call_operand.vmem [shape: f32[6,4], index: 2, kind: input, shape index: {}]
  %s3 = inlined_call_operand.vmem [shape: f32[1,4], index: 3, kind: input, shape index: {}]
  %s4 = inlined_call_operand.vmem [shape: f32[12,8], index: 4, kind: input, shape index: {}]
  %s5 = inlined_call_operand.vmem [shape: f32[1,8], index: 5, kind: input, shape index: {}]
  %s6 = inlined_call_operand.vmem [shape: f32[128,32], index: 6, kind: input, shape index: {}]
  %s7 = inlined_call_operand.vmem [shape: f32[1,32], index: 7, kind: input, shape index: {}]
  %s8 = inlined_call_operand.vmem [shape: f32[8,5], index: 8, kind: input, shape index: {}]
  %s9 = inlined_call_operand.vmem [shape: f32[5,32], index: 9, kind: input, shape index: {}]
  %s10 = inlined_call_operand.vmem [shape: f32[32,16], index: 10, kind: input, shape index: {}]
  %s11 = inlined_call_operand.vmem [shape: f32[1,16], index: 11, kind: input, shape index: {}]
  %s12 = inlined_call_operand.hbm [shape: f32[8,16], index: 12, kind: output, shape index: {}]
  %s13 = sld [smem:[#allocation0]]
  $region58: #{tpu_custom_call.1} parent=0
    _
  %s15 = ssub.s32 1, %s13
  %s16 = scalar_select 0, %s15, %s13
  $region1: #{tpu_custom_call.1} parent=0
    #allocation3 [shape = 'u8[4096]{0}', space=vmem, size = 0x1000, scoped, tag = 'output window, operand 0, single buffered']
    #allocation4 [shape = 's32[1]{0}', space=sflag, size = 0x4, scoped, tag = 'scoped memory for tpu_custom_call.1']
    %17 = vsyncpa [#allocation4], 0
    // Predicated region
    $region2: #{tpu_custom_call.1} parent=1 // pred_check
      _
    $region3: #{tpu_custom_call.1} parent=1 // pred_check_branch
      %19 = sbr.rel (0) target = $region5
    $region4: #{tpu_custom_call.1} parent=1 // pred_region
      _
    $region5: #{tpu_custom_call.1} parent=1 // pred_fallthru
      _
    // Predicated region
    $region6: #{tpu_custom_call.1} parent=1 // pred_check
      _
    $region7: #{tpu_custom_call.1} parent=1 // pred_check_branch
      %21 = sbr.rel (0) target = $region9
    $region8: #{tpu_custom_call.1} parent=1 // pred_region
      _
    $region9: #{tpu_custom_call.1} parent=1 // pred_fallthru
      _
    // Predicated region
    $region10: #{tpu_custom_call.1} parent=1 // pred_check
      _
    $region11: #{tpu_custom_call.1} parent=1 // pred_check_branch
      %23 = sbr.rel (0) target = $region13
    $region12: #{tpu_custom_call.1} parent=1 // pred_region
      _
    $region13: #{tpu_custom_call.1} parent=1 // pred_fallthru
      _
    // Predicated region
    $region14: #{tpu_custom_call.1} parent=1 // pred_check
      _
    $region15: #{tpu_custom_call.1} parent=1 // pred_check_branch
      %25 = sbr.rel (0) target = $region17
    $region16: #{tpu_custom_call.1} parent=1 // pred_region
      _
    $region17: #{tpu_custom_call.1} parent=1 // pred_fallthru
      _
    // Predicated region
    $region18: #{tpu_custom_call.1} parent=1 // pred_check
      _
    $region19: #{tpu_custom_call.1} parent=1 // pred_check_branch
      %27 = sbr.rel (0) target = $region21
    $region20: #{tpu_custom_call.1} parent=1 // pred_region
      _
    $region21: #{tpu_custom_call.1} parent=1 // pred_fallthru
      _
    // Predicated region
    $region22: #{tpu_custom_call.1} parent=1 // pred_check
      _
    $region23: #{tpu_custom_call.1} parent=1 // pred_check_branch
      %29 = sbr.rel (0) target = $region25
    $region24: #{tpu_custom_call.1} parent=1 // pred_region
      _
    $region25: #{tpu_custom_call.1} parent=1 // pred_fallthru
      _
    // Predicated region
    $region26: #{tpu_custom_call.1} parent=1 // pred_check
      _
    $region27: #{tpu_custom_call.1} parent=1 // pred_check_branch
      %31 = sbr.rel (0) target = $region29
    $region28: #{tpu_custom_call.1} parent=1 // pred_region
      _
    $region29: #{tpu_custom_call.1} parent=1 // pred_fallthru
      _
    // Predicated region
    $region30: #{tpu_custom_call.1} parent=1 // pred_check
      _
    $region31: #{tpu_custom_call.1} parent=1 // pred_check_branch
      %33 = sbr.rel (0) target = $region33
    $region32: #{tpu_custom_call.1} parent=1 // pred_region
      _
    $region33: #{tpu_custom_call.1} parent=1 // pred_fallthru
      _
    // Predicated region
    $region34: #{tpu_custom_call.1} parent=1 // pred_check
      _
    $region35: #{tpu_custom_call.1} parent=1 // pred_check_branch
      %35 = sbr.rel (0) target = $region37
    $region36: #{tpu_custom_call.1} parent=1 // pred_region
      _
    $region37: #{tpu_custom_call.1} parent=1 // pred_fallthru
      _
    // Predicated region
    $region38: #{tpu_custom_call.1} parent=1 // pred_check
      _
    $region39: #{tpu_custom_call.1} parent=1 // pred_check_branch
      %37 = sbr.rel (0) target = $region41
    $region40: #{tpu_custom_call.1} parent=1 // pred_region
      _
    $region41: #{tpu_custom_call.1} parent=1 // pred_fallthru
      _
    // Predicated region
    $region42: #{tpu_custom_call.1} parent=1 // pred_check
      _
    $region43: #{tpu_custom_call.1} parent=1 // pred_check_branch
      %39 = sbr.rel (0) target = $region45
    $region44: #{tpu_custom_call.1} parent=1 // pred_region
      _
    $region45: #{tpu_custom_call.1} parent=1 // pred_fallthru
      _
    // Predicated region
    $region46: #{tpu_custom_call.1} parent=1 // pred_check
      _
    $region47: #{tpu_custom_call.1} parent=1 // pred_check_branch
      %41 = sbr.rel (0) target = $region49
    $region48: #{tpu_custom_call.1} parent=1 // pred_region
      _
    $region49: #{tpu_custom_call.1} parent=1 // pred_fallthru
      _
    %v42 = vld [vmem:[%s1] sm:$0xff]
    %v43 = vld [vmem:[%s1 + $0x8] sm:$0xff]
    %v44 = vld [vmem:[%s0] sm:$0x3]
    %v45 = vld [vmem:[%s0 + $0x2] sm:$0x3]
    %v46 = vld [vmem:[%s0 + $0x4] sm:$0x3]
    %v47 = vld [vmem:[%s0 + $0x6] sm:$0x3]
    %v48 = vld [vmem:[%s0 + $0x8] sm:$0x3]
    %v49 = vld [vmem:[%s0 + $0xa] sm:$0x3]
    %v50 = vld [vmem:[%s0 + $0xc] sm:$0x3]
    %v51 = vld [vmem:[%s0 + $0xe] sm:$0x3]
    %vm52 = vcmask 123904
    %53 = vst.msk [vmem:[#allocation2] sm:$0x3] %vm52, %v44
    %54 = vst.msk [vmem:[#allocation2 + $0x10] sm:$0x3] %vm52, %v45
    %55 = vst.msk [vmem:[#allocation2 + $0x20] sm:$0x3] %vm52, %v46
    %56 = vst.msk [vmem:[#allocation2 + $0x30] sm:$0x3] %vm52, %v47
    %57 = vst.msk [vmem:[#allocation2 + $0x40] sm:$0x3] %vm52, %v48
    %58 = vst.msk [vmem:[#allocation2 + $0x50] sm:$0x3] %vm52, %v49
    %59 = vst.msk [vmem:[#allocation2 + $0x60] sm:$0x3] %vm52, %v50
    %60 = vst.msk [vmem:[#allocation2 + $0x70] sm:$0x3] %vm52, %v51
    %v69 = vcombine.low %v44, %v45
    %v70 = vcombine.low %v46, %v47
    %v72 = vunpack.c.l.s4 1983009808
    %v73 = vunpack.c.0.s8 %v72
    %v74 = vlaneseq
    %v75 = vshrl.u32 %v74, 7
    %v76 = vsub.s32 %v73, %v75
    %v77 = vrot.slane %v69, %v76
    %v79 = vunpack.c.l.s4 1983009808
    %v80 = vunpack.c.0.s8 %v79
    %v81 = vlaneseq
    %v82 = vshrl.u32 %v81, 7
    %v83 = vsub.s32 %v80, %v82
    %v84 = vrot.slane %v70, %v83
    %v85 = vcombine.low %v77, %v84
    %v86 = vcombine.low %v48, %v49
    %v87 = vcombine.low %v50, %v51
    %v89 = vunpack.c.l.s4 1983009808
    %v90 = vunpack.c.0.s8 %v89
    %v91 = vlaneseq
    %v92 = vshrl.u32 %v91, 7
    %v93 = vsub.s32 %v90, %v92
    %v94 = vrot.slane %v86, %v93
    %v96 = vunpack.c.l.s4 1983009808
    %v97 = vunpack.c.0.s8 %v96
    %v98 = vlaneseq
    %v99 = vshrl.u32 %v98, 7
    %v100 = vsub.s32 %v97, %v99
    %v101 = vrot.slane %v87, %v100
    %v102 = vcombine.low %v94, %v101
    %vm103 = vcmask 130048
    %v104 = vsel %vm103, %v85, 0
    %v106 = vsel %vm103, %v102, 0
    %108 = vmatprep.subr.mxu0 0.0
    %109 = vmatpush1.msra.mxu0 0.0
    %110 = vmatprep.subr.mxu0 0.0
    %111 = vmatpush1.msra.mxu0 0.0
    %112 = vmatprep.subr.mxu0 0.0
    %113 = vmatpush1.msra.mxu0 0.0
    %114 = vmatprep.subr.mxu0 0.0
    %115 = vmatpush1.msra.mxu0 0.0
    %116 = vmatprep.subr.mxu0 0.0
    %117 = vmatpush1.msra.mxu0 0.0
    %118 = vmatprep.subr.mxu0 0.0
    %119 = vmatpush1.msra.mxu0 0.0
    %120 = vmatprep.subr.mxu0 0.0
    %121 = vmatpush1.msra.mxu0 0.0
    %122 = vmatprep.subr.mxu0 0.0
    %123 = vmatpush1.msra.mxu0 0.0
    %124 = vmatprep.subr.mxu0 0.0
    %125 = vmatpush1.msra.mxu0 0.0
    %126 = vmatprep.subr.mxu0 0.0
    %127 = vmatpush1.msra.mxu0 0.0
    %128 = vmatprep.subr.mxu0 0.0
    %129 = vmatpush1.msra.mxu0 0.0
    %130 = vmatprep.subr.mxu0 0.0
    %131 = vmatpush1.msra.mxu0 0.0
    %132 = vmatprep.subr.mxu0 0.0
    %133 = vmatpush1.msra.mxu0 0.0
    %134 = vmatprep.subr.mxu0 0.0
    %135 = vmatpush1.msra.mxu0 0.0
    %136 = vmatprep.subr.mxu0 0.0
    %137 = vmatpush1.msra.mxu0 %v43
    %138 = vmatprep.subr.mxu0 0.0
    %139 = vmatpush1.msra.mxu0 %v42
    %140 = vmatprep.subr.mxu0 0.0
    %141 = vmatpush2.msra.mxu0 0.0
    %142 = vmatprep.subr.mxu0 0.0
    %143 = vmatpush2.msra.mxu0 0.0
    %144 = vmatprep.subr.mxu0 0.0
    %145 = vmatpush2.msra.mxu0 0.0
    %146 = vmatprep.subr.mxu0 0.0
    %147 = vmatpush2.msra.mxu0 0.0
    %148 = vmatprep.subr.mxu0 0.0
    %149 = vmatpush2.msra.mxu0 0.0
    %150 = vmatprep.subr.mxu0 0.0
    %151 = vmatpush2.msra.mxu0 0.0
    %152 = vmatprep.subr.mxu0 0.0
    %153 = vmatpush2.msra.mxu0 0.0
    %154 = vmatprep.subr.mxu0 0.0
    %155 = vmatpush2.msra.mxu0 0.0
    %156 = vmatprep.subr.mxu0 0.0
    %157 = vmatpush2.msra.mxu0 0.0
    %158 = vmatprep.subr.mxu0 0.0
    %159 = vmatpush2.msra.mxu0 0.0
    %160 = vmatprep.subr.mxu0 0.0
    %161 = vmatpush2.msra.mxu0 0.0
    %162 = vmatprep.subr.mxu0 0.0
    %163 = vmatpush2.msra.mxu0 0.0
    %164 = vmatprep.subr.mxu0 0.0
    %165 = vmatpush2.msra.mxu0 0.0
    %166 = vmatprep.subr.mxu0 0.0
    %167 = vmatpush2.msra.mxu0 0.0
    %168 = vmatprep.subr.mxu0 0.0
    %169 = vmatpush2.msra.mxu0 0.0
    %170 = vmatprep.subr.mxu0 0.0
    %171 = vmatpush2.msra.mxu0 0.0
    %172 = vmatprep.mubr.f32.mxu0 0.0
    %173 = vmatmul.mubr.f32.gmra.mxu0 %v104
    %v174 = vpop.f32.mrf.mxu0
    %v175 = vadd.f32 0.0, %v174
    %v176 = vpop.f32.mrf.mxu0
    %177 = vmatprep.mubr.f32.mxu0 0.0
    %178 = vmatmul.mubr.f32.gmra.mxu0 %v106
    %v179 = vpop.f32.mrf.mxu0
    %v180 = vadd.f32 0.0, %v179
    %v181 = vpop.f32.mrf.mxu0
    %182 = vdwg.mxu0
    %v185 = vcombine.high %v175, %v175
    %v187 = vunpack.c.l.s4 1983009808
    %v188 = vunpack.c.0.s8 %v187
    %v189 = vlaneseq
    %v190 = vshrl.u32 %v189, 7
    %v191 = vsub.s32 %v188, %v190
    %v192 = vrot.slane %v175, %v191
    %v194 = vunpack.c.l.s4 1983009808
    %v195 = vunpack.c.0.s8 %v194
    %v196 = vlaneseq
    %v197 = vshrl.u32 %v196, 7
    %v198 = vsub.s32 %v195, %v197
    %v199 = vrot.slane %v185, %v198
    %v200 = vcombine.high %v192, %v192
    %v201 = vcombine.high %v199, %v199
    %v202 = vcombine.high %v180, %v180
    %v204 = vunpack.c.l.s4 1983009808
    %v205 = vunpack.c.0.s8 %v204
    %v206 = vlaneseq
    %v207 = vshrl.u32 %v206, 7
    %v208 = vsub.s32 %v205, %v207
    %v209 = vrot.slane %v180, %v208
    %v211 = vunpack.c.l.s4 1983009808
    %v212 = vunpack.c.0.s8 %v211
    %v213 = vlaneseq
    %v214 = vshrl.u32 %v213, 7
    %v215 = vsub.s32 %v212, %v214
    %v216 = vrot.slane %v202, %v215
    %v217 = vcombine.high %v209, %v209
    %v218 = vcombine.high %v216, %v216
    %227 = vst.msk [vmem:[#allocation2 + $0x2] sm:$0x3] %vm52, %v192
    %228 = vst.msk [vmem:[#allocation2 + $0x12] sm:$0x3] %vm52, %v200
    %229 = vst.msk [vmem:[#allocation2 + $0x22] sm:$0x3] %vm52, %v199
    %230 = vst.msk [vmem:[#allocation2 + $0x32] sm:$0x3] %vm52, %v201
    %231 = vst.msk [vmem:[#allocation2 + $0x42] sm:$0x3] %vm52, %v209
    %232 = vst.msk [vmem:[#allocation2 + $0x52] sm:$0x3] %vm52, %v217
    %233 = vst.msk [vmem:[#allocation2 + $0x62] sm:$0x3] %vm52, %v216
    %234 = vst.msk [vmem:[#allocation2 + $0x72] sm:$0x3] %vm52, %v218
    %v235 = vsel %vm103, %v175, 0
    %v237 = vsel %vm103, %v180, 0
    %239 = vmatprep.subr.mxu0 0.0
    %240 = vmatpush1.msra.mxu0 0.0
    %241 = vmatprep.subr.mxu0 0.0
    %242 = vmatpush1.msra.mxu0 0.0
    %243 = vmatprep.subr.mxu0 0.0
    %244 = vmatpush1.msra.mxu0 0.0
    %245 = vmatprep.subr.mxu0 0.0
    %246 = vmatpush1.msra.mxu0 0.0
    %247 = vmatprep.subr.mxu0 0.0
    %248 = vmatpush1.msra.mxu0 0.0
    %249 = vmatprep.subr.mxu0 0.0
    %250 = vmatpush1.msra.mxu0 0.0
    %251 = vmatprep.subr.mxu0 0.0
    %252 = vmatpush1.msra.mxu0 0.0
    %253 = vmatprep.subr.mxu0 0.0
    %254 = vmatpush1.msra.mxu0 0.0
    %255 = vmatprep.subr.mxu0 0.0
    %256 = vmatpush1.msra.mxu0 0.0
    %257 = vmatprep.subr.mxu0 0.0
    %258 = vmatpush1.msra.mxu0 0.0
    %259 = vmatprep.subr.mxu0 0.0
    %260 = vmatpush1.msra.mxu0 0.0
    %261 = vmatprep.subr.mxu0 0.0
    %262 = vmatpush1.msra.mxu0 0.0
    %263 = vmatprep.subr.mxu0 0.0
    %264 = vmatpush1.msra.mxu0 0.0
    %265 = vmatprep.subr.mxu0 0.0
    %266 = vmatpush1.msra.mxu0 0.0
    %267 = vmatprep.subr.mxu0 0.0
    %268 = vmatpush1.msra.mxu0 %v43
    %269 = vmatprep.subr.mxu0 0.0
    %270 = vmatpush1.msra.mxu0 %v42
    %271 = vmatprep.subr.mxu0 0.0
    %272 = vmatpush2.msra.mxu0 0.0
    %273 = vmatprep.subr.mxu0 0.0
    %274 = vmatpush2.msra.mxu0 0.0
    %275 = vmatprep.subr.mxu0 0.0
    %276 = vmatpush2.msra.mxu0 0.0
    %277 = vmatprep.subr.mxu0 0.0
    %278 = vmatpush2.msra.mxu0 0.0
    %279 = vmatprep.subr.mxu0 0.0
    %280 = vmatpush2.msra.mxu0 0.0
    %281 = vmatprep.subr.mxu0 0.0
    %282 = vmatpush2.msra.mxu0 0.0
    %283 = vmatprep.subr.mxu0 0.0
    %284 = vmatpush2.msra.mxu0 0.0
    %285 = vmatprep.subr.mxu0 0.0
    %286 = vmatpush2.msra.mxu0 0.0
    %287 = vmatprep.subr.mxu0 0.0
    %288 = vmatpush2.msra.mxu0 0.0
    %289 = vmatprep.subr.mxu0 0.0
    %290 = vmatpush2.msra.mxu0 0.0
    %291 = vmatprep.subr.mxu0 0.0
    %292 = vmatpush2.msra.mxu0 0.0
    %293 = vmatprep.subr.mxu0 0.0
    %294 = vmatpush2.msra.mxu0 0.0
    %295 = vmatprep.subr.mxu0 0.0
    %296 = vmatpush2.msra.mxu0 0.0
    %297 = vmatprep.subr.mxu0 0.0
    %298 = vmatpush2.msra.mxu0 0.0
    %299 = vmatprep.subr.mxu0 0.0
    %300 = vmatpush2.msra.mxu0 0.0
    %301 = vmatprep.subr.mxu0 0.0
    %302 = vmatpush2.msra.mxu0 0.0
    %303 = vmatprep.mubr.f32.mxu0 0.0
    %304 = vmatmul.mubr.f32.gmra.mxu0 %v235
    %v305 = vpop.f32.mrf.mxu0
    %v306 = vadd.f32 0.0, %v305
    %v307 = vpop.f32.mrf.mxu0
    %308 = vmatprep.mubr.f32.mxu0 0.0
    %309 = vmatmul.mubr.f32.gmra.mxu0 %v237
    %v310 = vpop.f32.mrf.mxu0
    %v311 = vadd.f32 0.0, %v310
    %v312 = vpop.f32.mrf.mxu0
    %313 = vdwg.mxu0
    %v316 = vcombine.high %v306, %v306
    %v318 = vunpack.c.l.s4 1983009808
    %v319 = vunpack.c.0.s8 %v318
    %v320 = vlaneseq
    %v321 = vshrl.u32 %v320, 7
    %v322 = vsub.s32 %v319, %v321
    %v323 = vrot.slane %v306, %v322
    %v325 = vunpack.c.l.s4 1983009808
    %v326 = vunpack.c.0.s8 %v325
    %v327 = vlaneseq
    %v328 = vshrl.u32 %v327, 7
    %v329 = vsub.s32 %v326, %v328
    %v330 = vrot.slane %v316, %v329
    %v331 = vcombine.high %v323, %v323
    %v332 = vcombine.high %v330, %v330
    %v333 = vcombine.high %v311, %v311
    %v335 = vunpack.c.l.s4 1983009808
    %v336 = vunpack.c.0.s8 %v335
    %v337 = vlaneseq
    %v338 = vshrl.u32 %v337, 7
    %v339 = vsub.s32 %v336, %v338
    %v340 = vrot.slane %v311, %v339
    %v342 = vunpack.c.l.s4 1983009808
    %v343 = vunpack.c.0.s8 %v342
    %v344 = vlaneseq
    %v345 = vshrl.u32 %v344, 7
    %v346 = vsub.s32 %v343, %v345
    %v347 = vrot.slane %v333, %v346
    %v348 = vcombine.high %v340, %v340
    %v349 = vcombine.high %v347, %v347
    %358 = vst.msk [vmem:[#allocation2 + $0x4] sm:$0x3] %vm52, %v323
    %359 = vst.msk [vmem:[#allocation2 + $0x14] sm:$0x3] %vm52, %v331
    %360 = vst.msk [vmem:[#allocation2 + $0x24] sm:$0x3] %vm52, %v330
    %361 = vst.msk [vmem:[#allocation2 + $0x34] sm:$0x3] %vm52, %v332
    %362 = vst.msk [vmem:[#allocation2 + $0x44] sm:$0x3] %vm52, %v340
    %363 = vst.msk [vmem:[#allocation2 + $0x54] sm:$0x3] %vm52, %v348
    %364 = vst.msk [vmem:[#allocation2 + $0x64] sm:$0x3] %vm52, %v347
    %365 = vst.msk [vmem:[#allocation2 + $0x74] sm:$0x3] %vm52, %v349
    %v366 = vld [vmem:[#allocation2] sm:$0x3f]
    %v367 = vld [vmem:[#allocation2 + $0x10] sm:$0x3f]
    %v368 = vld [vmem:[#allocation2 + $0x20] sm:$0x3f]
    %v369 = vld [vmem:[#allocation2 + $0x30] sm:$0x3f]
    %v370 = vld [vmem:[#allocation2 + $0x40] sm:$0x3f]
    %v371 = vld [vmem:[#allocation2 + $0x50] sm:$0x3f]
    %v372 = vld [vmem:[#allocation2 + $0x60] sm:$0x3f]
    %v373 = vld [vmem:[#allocation2 + $0x70] sm:$0x3f]
    %374 = vxpose.xlu0.b32.start [1/16] %v366, 128
    %375 = vxpose.xlu0.b32.cont [2/16] 0.0, 128
    %376 = vxpose.xlu0.b32.cont [3/16] 0.0, 128
    %377 = vxpose.xlu0.b32.cont [4/16] 0.0, 128
    %378 = vxpose.xlu0.b32.cont [5/16] 0.0, 128
    %379 = vxpose.xlu0.b32.cont [6/16] 0.0, 128
    %380 = vxpose.xlu0.b32.cont [7/16] 0.0, 128
    %381 = vxpose.xlu0.b32.cont [8/16] 0.0, 128
    %382 = vxpose.xlu0.b32.cont [9/16] 0.0, 128
    %383 = vxpose.xlu0.b32.cont [10/16] 0.0, 128
    %384 = vxpose.xlu0.b32.cont [11/16] 0.0, 128
    %385 = vxpose.xlu0.b32.cont [12/16] 0.0, 128
    %386 = vxpose.xlu0.b32.cont [13/16] 0.0, 128
    %387 = vxpose.xlu0.b32.cont [14/16] 0.0, 128
    %388 = vxpose.xlu0.b32.cont [15/16] 0.0, 128
    %389 = vxpose.xlu0.b32.end [16/16] 0.0, 128
    %v390 = vpop.trf.xlu0
    %v391 = vpop.trf.xlu0
    %v392 = vpop.trf.xlu0
    %v393 = vpop.trf.xlu0
    %v394 = vpop.trf.xlu0
    %v395 = vpop.trf.xlu0
    %v396 = vpop.trf.xlu0
    %v397 = vpop.trf.xlu0
    %v398 = vpop.trf.xlu0
    %v399 = vpop.trf.xlu0
    %v400 = vpop.trf.xlu0
    %v401 = vpop.trf.xlu0
    %v402 = vpop.trf.xlu0
    %v403 = vpop.trf.xlu0
    %v404 = vpop.trf.xlu0
    %v405 = vpop.trf.xlu0
    %406 = vxpose.xlu0.b32.start [1/16] %v367, 128
    %407 = vxpose.xlu0.b32.cont [2/16] 0.0, 128
    %408 = vxpose.xlu0.b32.cont [3/16] 0.0, 128
    %409 = vxpose.xlu0.b32.cont [4/16] 0.0, 128
    %410 = vxpose.xlu0.b32.cont [5/16] 0.0, 128
    %411 = vxpose.xlu0.b32.cont [6/16] 0.0, 128
    %412 = vxpose.xlu0.b32.cont [7/16] 0.0, 128
    %413 = vxpose.xlu0.b32.cont [8/16] 0.0, 128
    %414 = vxpose.xlu0.b32.cont [9/16] 0.0, 128
    %415 = vxpose.xlu0.b32.cont [10/16] 0.0, 128
    %416 = vxpose.xlu0.b32.cont [11/16] 0.0, 128
    %417 = vxpose.xlu0.b32.cont [12/16] 0.0, 128
    %418 = vxpose.xlu0.b32.cont [13/16] 0.0, 128
    %419 = vxpose.xlu0.b32.cont [14/16] 0.0, 128
    %420 = vxpose.xlu0.b32.cont [15/16] 0.0, 128
    %421 = vxpose.xlu0.b32.end [16/16] 0.0, 128
    %v422 = vpop.trf.xlu0
    %v423 = vpop.trf.xlu0
    %v424 = vpop.trf.xlu0
    %v425 = vpop.trf.xlu0
    %v426 = vpop.trf.xlu0
    %v427 = vpop.trf.xlu0
    %v428 = vpop.trf.xlu0
    %v429 = vpop.trf.xlu0
    %v430 = vpop.trf.xlu0
    %v431 = vpop.trf.xlu0
    %v432 = vpop.trf.xlu0
    %v433 = vpop.trf.xlu0
    %v434 = vpop.trf.xlu0
    %v435 = vpop.trf.xlu0
    %v436 = vpop.trf.xlu0
    %v437 = vpop.trf.xlu0
    %438 = vxpose.xlu0.b32.start [1/16] %v368, 128
    %439 = vxpose.xlu0.b32.cont [2/16] 0.0, 128
    %440 = vxpose.xlu0.b32.cont [3/16] 0.0, 128
    %441 = vxpose.xlu0.b32.cont [4/16] 0.0, 128
    %442 = vxpose.xlu0.b32.cont [5/16] 0.0, 128
    %443 = vxpose.xlu0.b32.cont [6/16] 0.0, 128
    %444 = vxpose.xlu0.b32.cont [7/16] 0.0, 128
    %445 = vxpose.xlu0.b32.cont [8/16] 0.0, 128
    %446 = vxpose.xlu0.b32.cont [9/16] 0.0, 128
    %447 = vxpose.xlu0.b32.cont [10/16] 0.0, 128
    %448 = vxpose.xlu0.b32.cont [11/16] 0.0, 128
    %449 = vxpose.xlu0.b32.cont [12/16] 0.0, 128
    %450 = vxpose.xlu0.b32.cont [13/16] 0.0, 128
    %451 = vxpose.xlu0.b32.cont [14/16] 0.0, 128
    %452 = vxpose.xlu0.b32.cont [15/16] 0.0, 128
    %453 = vxpose.xlu0.b32.end [16/16] 0.0, 128
    %v454 = vpop.trf.xlu0
    %v455 = vpop.trf.xlu0
    %v456 = vpop.trf.xlu0
    %v457 = vpop.trf.xlu0
    %v458 = vpop.trf.xlu0
    %v459 = vpop.trf.xlu0
    %v460 = vpop.trf.xlu0
    %v461 = vpop.trf.xlu0
    %v462 = vpop.trf.xlu0
    %v463 = vpop.trf.xlu0
    %v464 = vpop.trf.xlu0
    %v465 = vpop.trf.xlu0
    %v466 = vpop.trf.xlu0
    %v467 = vpop.trf.xlu0
    %v468 = vpop.trf.xlu0
    %v469 = vpop.trf.xlu0
    %470 = vxpose.xlu0.b32.start [1/16] %v369, 128
    %471 = vxpose.xlu0.b32.cont [2/16] 0.0, 128
    %472 = vxpose.xlu0.b32.cont [3/16] 0.0, 128
    %473 = vxpose.xlu0.b32.cont [4/16] 0.0, 128
    %474 = vxpose.xlu0.b32.cont [5/16] 0.0, 128
    %475 = vxpose.xlu0.b32.cont [6/16] 0.0, 128
    %476 = vxpose.xlu0.b32.cont [7/16] 0.0, 128
    %477 = vxpose.xlu0.b32.cont [8/16] 0.0, 128
    %478 = vxpose.xlu0.b32.cont [9/16] 0.0, 128
    %479 = vxpose.xlu0.b32.cont [10/16] 0.0, 128
    %480 = vxpose.xlu0.b32.cont [11/16] 0.0, 128
    %481 = vxpose.xlu0.b32.cont [12/16] 0.0, 128
    %482 = vxpose.xlu0.b32.cont [13/16] 0.0, 128
    %483 = vxpose.xlu0.b32.cont [14/16] 0.0, 128
    %484 = vxpose.xlu0.b32.cont [15/16] 0.0, 128
    %485 = vxpose.xlu0.b32.end [16/16] 0.0, 128
    %v486 = vpop.trf.xlu0
    %v487 = vpop.trf.xlu0
    %v488 = vpop.trf.xlu0
    %v489 = vpop.trf.xlu0
    %v490 = vpop.trf.xlu0
    %v491 = vpop.trf.xlu0
    %v492 = vpop.trf.xlu0
    %v493 = vpop.trf.xlu0
    %v494 = vpop.trf.xlu0
    %v495 = vpop.trf.xlu0
    %v496 = vpop.trf.xlu0
    %v497 = vpop.trf.xlu0
    %v498 = vpop.trf.xlu0
    %v499 = vpop.trf.xlu0
    %v500 = vpop.trf.xlu0
    %v501 = vpop.trf.xlu0
    %502 = vxpose.xlu0.b32.start [1/16] %v370, 128
    %503 = vxpose.xlu0.b32.cont [2/16] 0.0, 128
    %504 = vxpose.xlu0.b32.cont [3/16] 0.0, 128
    %505 = vxpose.xlu0.b32.cont [4/16] 0.0, 128
    %506 = vxpose.xlu0.b32.cont [5/16] 0.0, 128
    %507 = vxpose.xlu0.b32.cont [6/16] 0.0, 128
    %508 = vxpose.xlu0.b32.cont [7/16] 0.0, 128
    %509 = vxpose.xlu0.b32.cont [8/16] 0.0, 128
    %510 = vxpose.xlu0.b32.cont [9/16] 0.0, 128
    %511 = vxpose.xlu0.b32.cont [10/16] 0.0, 128
    %512 = vxpose.xlu0.b32.cont [11/16] 0.0, 128
    %513 = vxpose.xlu0.b32.cont [12/16] 0.0, 128
    %514 = vxpose.xlu0.b32.cont [13/16] 0.0, 128
    %515 = vxpose.xlu0.b32.cont [14/16] 0.0, 128
    %516 = vxpose.xlu0.b32.cont [15/16] 0.0, 128
    %517 = vxpose.xlu0.b32.end [16/16] 0.0, 128
    %v518 = vpop.trf.xlu0
    %v519 = vpop.trf.xlu0
    %v520 = vpop.trf.xlu0
    %v521 = vpop.trf.xlu0
    %v522 = vpop.trf.xlu0
    %v523 = vpop.trf.xlu0
    %v524 = vpop.trf.xlu0
    %v525 = vpop.trf.xlu0
    %v526 = vpop.trf.xlu0
    %v527 = vpop.trf.xlu0
    %v528 = vpop.trf.xlu0
    %v529 = vpop.trf.xlu0
    %v530 = vpop.trf.xlu0
    %v531 = vpop.trf.xlu0
    %v532 = vpop.trf.xlu0
    %v533 = vpop.trf.xlu0
    %534 = vxpose.xlu0.b32.start [1/16] %v371, 128
    %535 = vxpose.xlu0.b32.cont [2/16] 0.0, 128
    %536 = vxpose.xlu0.b32.cont [3/16] 0.0, 128
    %537 = vxpose.xlu0.b32.cont [4/16] 0.0, 128
    %538 = vxpose.xlu0.b32.cont [5/16] 0.0, 128
    %539 = vxpose.xlu0.b32.cont [6/16] 0.0, 128
    %540 = vxpose.xlu0.b32.cont [7/16] 0.0, 128
    %541 = vxpose.xlu0.b32.cont [8/16] 0.0, 128
    %542 = vxpose.xlu0.b32.cont [9/16] 0.0, 128
    %543 = vxpose.xlu0.b32.cont [10/16] 0.0, 128
    %544 = vxpose.xlu0.b32.cont [11/16] 0.0, 128
    %545 = vxpose.xlu0.b32.cont [12/16] 0.0, 128
    %546 = vxpose.xlu0.b32.cont [13/16] 0.0, 128
    %547 = vxpose.xlu0.b32.cont [14/16] 0.0, 128
    %548 = vxpose.xlu0.b32.cont [15/16] 0.0, 128
    %549 = vxpose.xlu0.b32.end [16/16] 0.0, 128
    %v550 = vpop.trf.xlu0
    %v551 = vpop.trf.xlu0
    %v552 = vpop.trf.xlu0
    %v553 = vpop.trf.xlu0
    %v554 = vpop.trf.xlu0
    %v555 = vpop.trf.xlu0
    %v556 = vpop.trf.xlu0
    %v557 = vpop.trf.xlu0
    %v558 = vpop.trf.xlu0
    %v559 = vpop.trf.xlu0
    %v560 = vpop.trf.xlu0
    %v561 = vpop.trf.xlu0
    %v562 = vpop.trf.xlu0
    %v563 = vpop.trf.xlu0
    %v564 = vpop.trf.xlu0
    %v565 = vpop.trf.xlu0
    %566 = vxpose.xlu0.b32.start [1/16] %v372, 128
    %567 = vxpose.xlu0.b32.cont [2/16] 0.0, 128
    %568 = vxpose.xlu0.b32.cont [3/16] 0.0, 128
    %569 = vxpose.xlu0.b32.cont [4/16] 0.0, 128
    %570 = vxpose.xlu0.b32.cont [5/16] 0.0, 128
    %571 = vxpose.xlu0.b32.cont [6/16] 0.0, 128
    %572 = vxpose.xlu0.b32.cont [7/16] 0.0, 128
    %573 = vxpose.xlu0.b32.cont [8/16] 0.0, 128
    %574 = vxpose.xlu0.b32.cont [9/16] 0.0, 128
    %575 = vxpose.xlu0.b32.cont [10/16] 0.0, 128
    %576 = vxpose.xlu0.b32.cont [11/16] 0.0, 128
    %577 = vxpose.xlu0.b32.cont [12/16] 0.0, 128
    %578 = vxpose.xlu0.b32.cont [13/16] 0.0, 128
    %579 = vxpose.xlu0.b32.cont [14/16] 0.0, 128
    %580 = vxpose.xlu0.b32.cont [15/16] 0.0, 128
    %581 = vxpose.xlu0.b32.end [16/16] 0.0, 128
    %v582 = vpop.trf.xlu0
    %v583 = vpop.trf.xlu0
    %v584 = vpop.trf.xlu0
    %v585 = vpop.trf.xlu0
    %v586 = vpop.trf.xlu0
    %v587 = vpop.trf.xlu0
    %v588 = vpop.trf.xlu0
    %v589 = vpop.trf.xlu0
    %v590 = vpop.trf.xlu0
    %v591 = vpop.trf.xlu0
    %v592 = vpop.trf.xlu0
    %v593 = vpop.trf.xlu0
    %v594 = vpop.trf.xlu0
    %v595 = vpop.trf.xlu0
    %v596 = vpop.trf.xlu0
    %v597 = vpop.trf.xlu0
    %598 = vxpose.xlu0.b32.start [1/16] %v373, 128
    %599 = vxpose.xlu0.b32.cont [2/16] 0.0, 128
    %600 = vxpose.xlu0.b32.cont [3/16] 0.0, 128
    %601 = vxpose.xlu0.b32.cont [4/16] 0.0, 128
    %602 = vxpose.xlu0.b32.cont [5/16] 0.0, 128
    %603 = vxpose.xlu0.b32.cont [6/16] 0.0, 128
    %604 = vxpose.xlu0.b32.cont [7/16] 0.0, 128
    %605 = vxpose.xlu0.b32.cont [8/16] 0.0, 128
    %606 = vxpose.xlu0.b32.cont [9/16] 0.0, 128
    %607 = vxpose.xlu0.b32.cont [10/16] 0.0, 128
    %608 = vxpose.xlu0.b32.cont [11/16] 0.0, 128
    %609 = vxpose.xlu0.b32.cont [12/16] 0.0, 128
    %610 = vxpose.xlu0.b32.cont [13/16] 0.0, 128
    %611 = vxpose.xlu0.b32.cont [14/16] 0.0, 128
    %612 = vxpose.xlu0.b32.cont [15/16] 0.0, 128
    %613 = vxpose.xlu0.b32.end [16/16] 0.0, 128
    %v614 = vpop.trf.xlu0
    %v615 = vpop.trf.xlu0
    %v616 = vpop.trf.xlu0
    %v617 = vpop.trf.xlu0
    %v618 = vpop.trf.xlu0
    %v619 = vpop.trf.xlu0
    %v620 = vpop.trf.xlu0
    %v621 = vpop.trf.xlu0
    %v622 = vpop.trf.xlu0
    %v623 = vpop.trf.xlu0
    %v624 = vpop.trf.xlu0
    %v625 = vpop.trf.xlu0
    %v626 = vpop.trf.xlu0
    %v627 = vpop.trf.xlu0
    %v628 = vpop.trf.xlu0
    %v629 = vpop.trf.xlu0
    %v630 = vld [vmem:[%s2] sm:$0x3f]
    %v631 = vld [vmem:[%s3] sm:$0x1]
    %v633 = vlaneseq
    %v634 = vshrl.u32 %v633, 7
    %v635 = vsub.s32 0, %v634
    %v636 = vrot.slane %v631, %v635
    %vm638 = vcmask 48128
    %v640 = vsel %vm638, %v390, 0
    %v643 = vsel %vm638, %v391, 0
    %v646 = vsel %vm638, %v422, 0
    %v649 = vsel %vm638, %v423, 0
    %v652 = vsel %vm638, %v454, 0
    %v655 = vsel %vm638, %v455, 0
    %v658 = vsel %vm638, %v486, 0
    %v661 = vsel %vm638, %v487, 0
    %v664 = vsel %vm638, %v518, 0
    %v667 = vsel %vm638, %v519, 0
    %v670 = vsel %vm638, %v550, 0
    %v673 = vsel %vm638, %v551, 0
    %v676 = vsel %vm638, %v582, 0
    %v679 = vsel %vm638, %v583, 0
    %v682 = vsel %vm638, %v614, 0
    %v685 = vsel %vm638, %v615, 0
    %vm687 = vcmask 1045504
    %v689 = vsel %vm687, %v630, 0
    %691 = vmatprep.subr.mxu0 0.0
    %692 = vmatpush1.msra.mxu0 0.0
    %693 = vmatprep.subr.mxu0 0.0
    %694 = vmatpush1.msra.mxu0 0.0
    %695 = vmatprep.subr.mxu0 0.0
    %696 = vmatpush1.msra.mxu0 0.0
    %697 = vmatprep.subr.mxu0 0.0
    %698 = vmatpush1.msra.mxu0 0.0
    %699 = vmatprep.subr.mxu0 0.0
    %700 = vmatpush1.msra.mxu0 0.0
    %701 = vmatprep.subr.mxu0 0.0
    %702 = vmatpush1.msra.mxu0 0.0
    %703 = vmatprep.subr.mxu0 0.0
    %704 = vmatpush1.msra.mxu0 0.0
    %705 = vmatprep.subr.mxu0 0.0
    %706 = vmatpush1.msra.mxu0 0.0
    %707 = vmatprep.subr.mxu0 0.0
    %708 = vmatpush1.msra.mxu0 0.0
    %709 = vmatprep.subr.mxu0 0.0
    %710 = vmatpush1.msra.mxu0 0.0
    %711 = vmatprep.subr.mxu0 0.0
    %712 = vmatpush1.msra.mxu0 0.0
    %713 = vmatprep.subr.mxu0 0.0
    %714 = vmatpush1.msra.mxu0 0.0
    %715 = vmatprep.subr.mxu0 0.0
    %716 = vmatpush1.msra.mxu0 0.0
    %717 = vmatprep.subr.mxu0 0.0
    %718 = vmatpush1.msra.mxu0 0.0
    %719 = vmatprep.subr.mxu0 0.0
    %720 = vmatpush1.msra.mxu0 0.0
    %721 = vmatprep.subr.mxu0 0.0
    %722 = vmatpush1.msra.mxu0 %v689
    %723 = vmatprep.subr.mxu0 0.0
    %724 = vmatpush2.msra.mxu0 0.0
    %725 = vmatprep.subr.mxu0 0.0
    %726 = vmatpush2.msra.mxu0 0.0
    %727 = vmatprep.subr.mxu0 0.0
    %728 = vmatpush2.msra.mxu0 0.0
    %729 = vmatprep.subr.mxu0 0.0
    %730 = vmatpush2.msra.mxu0 0.0
    %731 = vmatprep.subr.mxu0 0.0
    %732 = vmatpush2.msra.mxu0 0.0
    %733 = vmatprep.subr.mxu0 0.0
    %734 = vmatpush2.msra.mxu0 0.0
    %735 = vmatprep.subr.mxu0 0.0
    %736 = vmatpush2.msra.mxu0 0.0
    %737 = vmatprep.subr.mxu0 0.0
    %738 = vmatpush2.msra.mxu0 0.0
    %739 = vmatprep.subr.mxu0 0.0
    %740 = vmatpush2.msra.mxu0 0.0
    %741 = vmatprep.subr.mxu0 0.0
    %742 = vmatpush2.msra.mxu0 0.0
    %743 = vmatprep.subr.mxu0 0.0
    %744 = vmatpush2.msra.mxu0 0.0
    %745 = vmatprep.subr.mxu0 0.0
    %746 = vmatpush2.msra.mxu0 0.0
    %747 = vmatprep.subr.mxu0 0.0
    %748 = vmatpush2.msra.mxu0 0.0
    %749 = vmatprep.subr.mxu0 0.0
    %750 = vmatpush2.msra.mxu0 0.0
    %751 = vmatprep.subr.mxu0 0.0
    %752 = vmatpush2.msra.mxu0 0.0
    %753 = vmatprep.subr.mxu0 0.0
    %754 = vmatpush2.msra.mxu0 0.0
    %755 = vmatprep.mubr.f32.mxu0 0.0
    %756 = vmatmul.mubr.f32.gmra.mxu0 %v640
    %v757 = vpop.f32.mrf.mxu0
    %v758 = vadd.f32 %v636, %v757
    %v759 = vpop.f32.mrf.mxu0
    %760 = vmatprep.mubr.f32.mxu0 0.0
    %761 = vmatmul.mubr.f32.gmra.mxu0 %v643
    %v762 = vpop.f32.mrf.mxu0
    %v763 = vadd.f32 %v636, %v762
    %v764 = vpop.f32.mrf.mxu0
    %765 = vmatprep.mubr.f32.mxu0 0.0
    %766 = vmatmul.mubr.f32.gmra.mxu0 %v646
    %v767 = vpop.f32.mrf.mxu0
    %v768 = vadd.f32 %v636, %v767
    %v769 = vpop.f32.mrf.mxu0
    %770 = vmatprep.mubr.f32.mxu0 0.0
    %771 = vmatmul.mubr.f32.gmra.mxu0 %v649
    %v772 = vpop.f32.mrf.mxu0
    %v773 = vadd.f32 %v636, %v772
    %v774 = vpop.f32.mrf.mxu0
    %775 = vmatprep.mubr.f32.mxu0 0.0
    %776 = vmatmul.mubr.f32.gmra.mxu0 %v652
    %v777 = vpop.f32.mrf.mxu0
    %v778 = vadd.f32 %v636, %v777
    %v779 = vpop.f32.mrf.mxu0
    %780 = vmatprep.mubr.f32.mxu0 0.0
    %781 = vmatmul.mubr.f32.gmra.mxu0 %v655
    %v782 = vpop.f32.mrf.mxu0
    %v783 = vadd.f32 %v636, %v782
    %v784 = vpop.f32.mrf.mxu0
    %785 = vmatprep.mubr.f32.mxu0 0.0
    %786 = vmatmul.mubr.f32.gmra.mxu0 %v658
    %v787 = vpop.f32.mrf.mxu0
    %v788 = vadd.f32 %v636, %v787
    %v789 = vpop.f32.mrf.mxu0
    %790 = vmatprep.mubr.f32.mxu0 0.0
    %791 = vmatmul.mubr.f32.gmra.mxu0 %v661
    %v792 = vpop.f32.mrf.mxu0
    %v793 = vadd.f32 %v636, %v792
    %v794 = vpop.f32.mrf.mxu0
    %795 = vmatprep.mubr.f32.mxu0 0.0
    %796 = vmatmul.mubr.f32.gmra.mxu0 %v664
    %v797 = vpop.f32.mrf.mxu0
    %v798 = vadd.f32 %v636, %v797
    %v799 = vpop.f32.mrf.mxu0
    %800 = vmatprep.mubr.f32.mxu0 0.0
    %801 = vmatmul.mubr.f32.gmra.mxu0 %v667
    %v802 = vpop.f32.mrf.mxu0
    %v803 = vadd.f32 %v636, %v802
    %v804 = vpop.f32.mrf.mxu0
    %805 = vmatprep.mubr.f32.mxu0 0.0
    %806 = vmatmul.mubr.f32.gmra.mxu0 %v670
    %v807 = vpop.f32.mrf.mxu0
    %v808 = vadd.f32 %v636, %v807
    %v809 = vpop.f32.mrf.mxu0
    %810 = vmatprep.mubr.f32.mxu0 0.0
    %811 = vmatmul.mubr.f32.gmra.mxu0 %v673
    %v812 = vpop.f32.mrf.mxu0
    %v813 = vadd.f32 %v636, %v812
    %v814 = vpop.f32.mrf.mxu0
    %815 = vmatprep.mubr.f32.mxu0 0.0
    %816 = vmatmul.mubr.f32.gmra.mxu0 %v676
    %v817 = vpop.f32.mrf.mxu0
    %v818 = vadd.f32 %v636, %v817
    %v819 = vpop.f32.mrf.mxu0
    %820 = vmatprep.mubr.f32.mxu0 0.0
    %821 = vmatmul.mubr.f32.gmra.mxu0 %v679
    %v822 = vpop.f32.mrf.mxu0
    %v823 = vadd.f32 %v636, %v822
    %v824 = vpop.f32.mrf.mxu0
    %825 = vmatprep.mubr.f32.mxu0 0.0
    %826 = vmatmul.mubr.f32.gmra.mxu0 %v682
    %v827 = vpop.f32.mrf.mxu0
    %v828 = vadd.f32 %v636, %v827
    %v829 = vpop.f32.mrf.mxu0
    %830 = vmatprep.mubr.f32.mxu0 0.0
    %831 = vmatmul.mubr.f32.gmra.mxu0 %v685
    %v832 = vpop.f32.mrf.mxu0
    %v833 = vadd.f32 %v636, %v832
    %v834 = vpop.f32.mrf.mxu0
    %835 = vdwg.mxu0
    %v836 = vmax.f32 %v758, 0.0
    %v837 = vmax.f32 %v763, 0.0
    %v838 = vmax.f32 %v768, 0.0
    %v839 = vmax.f32 %v773, 0.0
    %v840 = vmax.f32 %v778, 0.0
    %v841 = vmax.f32 %v783, 0.0
    %v842 = vmax.f32 %v788, 0.0
    %v843 = vmax.f32 %v793, 0.0
    %v844 = vmax.f32 %v798, 0.0
    %v845 = vmax.f32 %v803, 0.0
    %v846 = vmax.f32 %v808, 0.0
    %v847 = vmax.f32 %v813, 0.0
    %v848 = vmax.f32 %v818, 0.0
    %v849 = vmax.f32 %v823, 0.0
    %v850 = vmax.f32 %v828, 0.0
    %v851 = vmax.f32 %v833, 0.0
    %852 = vxpose.xlu0.b32.start [1/16] %v836, 128
    %853 = vxpose.xlu0.b32.cont [2/16] %v837, 128
    %854 = vxpose.xlu0.b32.cont [3/16] 0.0, 128
    %855 = vxpose.xlu0.b32.cont [4/16] 0.0, 128
    %856 = vxpose.xlu0.b32.cont [5/16] 0.0, 128
    %857 = vxpose.xlu0.b32.cont [6/16] 0.0, 128
    %858 = vxpose.xlu0.b32.cont [7/16] 0.0, 128
    %859 = vxpose.xlu0.b32.cont [8/16] 0.0, 128
    %860 = vxpose.xlu0.b32.cont [9/16] 0.0, 128
    %861 = vxpose.xlu0.b32.cont [10/16] 0.0, 128
    %862 = vxpose.xlu0.b32.cont [11/16] 0.0, 128
    %863 = vxpose.xlu0.b32.cont [12/16] 0.0, 128
    %864 = vxpose.xlu0.b32.cont [13/16] 0.0, 128
    %865 = vxpose.xlu0.b32.cont [14/16] 0.0, 128
    %866 = vxpose.xlu0.b32.cont [15/16] 0.0, 128
    %867 = vxpose.xlu0.b32.end [16/16] 0.0, 128
    %v868 = vpop.trf.xlu0
    %v869 = vpop.trf.xlu0
    %v870 = vpop.trf.xlu0
    %v871 = vpop.trf.xlu0
    %v872 = vpop.trf.xlu0
    %v873 = vpop.trf.xlu0
    %v874 = vpop.trf.xlu0
    %v875 = vpop.trf.xlu0
    %v876 = vpop.trf.xlu0
    %v877 = vpop.trf.xlu0
    %v878 = vpop.trf.xlu0
    %v879 = vpop.trf.xlu0
    %v880 = vpop.trf.xlu0
    %v881 = vpop.trf.xlu0
    %v882 = vpop.trf.xlu0
    %v883 = vpop.trf.xlu0
    %884 = vxpose.xlu0.b32.start [1/16] %v838, 128
    %885 = vxpose.xlu0.b32.cont [2/16] %v839, 128
    %886 = vxpose.xlu0.b32.cont [3/16] 0.0, 128
    %887 = vxpose.xlu0.b32.cont [4/16] 0.0, 128
    %888 = vxpose.xlu0.b32.cont [5/16] 0.0, 128
    %889 = vxpose.xlu0.b32.cont [6/16] 0.0, 128
    %890 = vxpose.xlu0.b32.cont [7/16] 0.0, 128
    %891 = vxpose.xlu0.b32.cont [8/16] 0.0, 128
    %892 = vxpose.xlu0.b32.cont [9/16] 0.0, 128
    %893 = vxpose.xlu0.b32.cont [10/16] 0.0, 128
    %894 = vxpose.xlu0.b32.cont [11/16] 0.0, 128
    %895 = vxpose.xlu0.b32.cont [12/16] 0.0, 128
    %896 = vxpose.xlu0.b32.cont [13/16] 0.0, 128
    %897 = vxpose.xlu0.b32.cont [14/16] 0.0, 128
    %898 = vxpose.xlu0.b32.cont [15/16] 0.0, 128
    %899 = vxpose.xlu0.b32.end [16/16] 0.0, 128
    %v900 = vpop.trf.xlu0
    %v901 = vpop.trf.xlu0
    %v902 = vpop.trf.xlu0
    %v903 = vpop.trf.xlu0
    %v904 = vpop.trf.xlu0
    %v905 = vpop.trf.xlu0
    %v906 = vpop.trf.xlu0
    %v907 = vpop.trf.xlu0
    %v908 = vpop.trf.xlu0
    %v909 = vpop.trf.xlu0
    %v910 = vpop.trf.xlu0
    %v911 = vpop.trf.xlu0
    %v912 = vpop.trf.xlu0
    %v913 = vpop.trf.xlu0
    %v914 = vpop.trf.xlu0
    %v915 = vpop.trf.xlu0
    %916 = vxpose.xlu0.b32.start [1/16] %v840, 128
    %917 = vxpose.xlu0.b32.cont [2/16] %v841, 128
    %918 = vxpose.xlu0.b32.cont [3/16] 0.0, 128
    %919 = vxpose.xlu0.b32.cont [4/16] 0.0, 128
    %920 = vxpose.xlu0.b32.cont [5/16] 0.0, 128
    %921 = vxpose.xlu0.b32.cont [6/16] 0.0, 128
    %922 = vxpose.xlu0.b32.cont [7/16] 0.0, 128
    %923 = vxpose.xlu0.b32.cont [8/16] 0.0, 128
    %924 = vxpose.xlu0.b32.cont [9/16] 0.0, 128
    %925 = vxpose.xlu0.b32.cont [10/16] 0.0, 128
    %926 = vxpose.xlu0.b32.cont [11/16] 0.0, 128
    %927 = vxpose.xlu0.b32.cont [12/16] 0.0, 128
    %928 = vxpose.xlu0.b32.cont [13/16] 0.0, 128
    %929 = vxpose.xlu0.b32.cont [14/16] 0.0, 128
    %930 = vxpose.xlu0.b32.cont [15/16] 0.0, 128
    %931 = vxpose.xlu0.b32.end [16/16] 0.0, 128
    %v932 = vpop.trf.xlu0
    %v933 = vpop.trf.xlu0
    %v934 = vpop.trf.xlu0
    %v935 = vpop.trf.xlu0
    %v936 = vpop.trf.xlu0
    %v937 = vpop.trf.xlu0
    %v938 = vpop.trf.xlu0
    %v939 = vpop.trf.xlu0
    %v940 = vpop.trf.xlu0
    %v941 = vpop.trf.xlu0
    %v942 = vpop.trf.xlu0
    %v943 = vpop.trf.xlu0
    %v944 = vpop.trf.xlu0
    %v945 = vpop.trf.xlu0
    %v946 = vpop.trf.xlu0
    %v947 = vpop.trf.xlu0
    %948 = vxpose.xlu0.b32.start [1/16] %v842, 128
    %949 = vxpose.xlu0.b32.cont [2/16] %v843, 128
    %950 = vxpose.xlu0.b32.cont [3/16] 0.0, 128
    %951 = vxpose.xlu0.b32.cont [4/16] 0.0, 128
    %952 = vxpose.xlu0.b32.cont [5/16] 0.0, 128
    %953 = vxpose.xlu0.b32.cont [6/16] 0.0, 128
    %954 = vxpose.xlu0.b32.cont [7/16] 0.0, 128
    %955 = vxpose.xlu0.b32.cont [8/16] 0.0, 128
    %956 = vxpose.xlu0.b32.cont [9/16] 0.0, 128
    %957 = vxpose.xlu0.b32.cont [10/16] 0.0, 128
    %958 = vxpose.xlu0.b32.cont [11/16] 0.0, 128
    %959 = vxpose.xlu0.b32.cont [12/16] 0.0, 128
    %960 = vxpose.xlu0.b32.cont [13/16] 0.0, 128
    %961 = vxpose.xlu0.b32.cont [14/16] 0.0, 128
    %962 = vxpose.xlu0.b32.cont [15/16] 0.0, 128
    %963 = vxpose.xlu0.b32.end [16/16] 0.0, 128
    %v964 = vpop.trf.xlu0
    %v965 = vpop.trf.xlu0
    %v966 = vpop.trf.xlu0
    %v967 = vpop.trf.xlu0
    %v968 = vpop.trf.xlu0
    %v969 = vpop.trf.xlu0
    %v970 = vpop.trf.xlu0
    %v971 = vpop.trf.xlu0
    %v972 = vpop.trf.xlu0
    %v973 = vpop.trf.xlu0
    %v974 = vpop.trf.xlu0
    %v975 = vpop.trf.xlu0
    %v976 = vpop.trf.xlu0
    %v977 = vpop.trf.xlu0
    %v978 = vpop.trf.xlu0
    %v979 = vpop.trf.xlu0
    %980 = vxpose.xlu0.b32.start [1/16] %v844, 128
    %981 = vxpose.xlu0.b32.cont [2/16] %v845, 128
    %982 = vxpose.xlu0.b32.cont [3/16] 0.0, 128
    %983 = vxpose.xlu0.b32.cont [4/16] 0.0, 128
    %984 = vxpose.xlu0.b32.cont [5/16] 0.0, 128
    %985 = vxpose.xlu0.b32.cont [6/16] 0.0, 128
    %986 = vxpose.xlu0.b32.cont [7/16] 0.0, 128
    %987 = vxpose.xlu0.b32.cont [8/16] 0.0, 128
    %988 = vxpose.xlu0.b32.cont [9/16] 0.0, 128
    %989 = vxpose.xlu0.b32.cont [10/16] 0.0, 128
    %990 = vxpose.xlu0.b32.cont [11/16] 0.0, 128
    %991 = vxpose.xlu0.b32.cont [12/16] 0.0, 128
    %992 = vxpose.xlu0.b32.cont [13/16] 0.0, 128
    %993 = vxpose.xlu0.b32.cont [14/16] 0.0, 128
    %994 = vxpose.xlu0.b32.cont [15/16] 0.0, 128
    %995 = vxpose.xlu0.b32.end [16/16] 0.0, 128
    %v996 = vpop.trf.xlu0
    %v997 = vpop.trf.xlu0
    %v998 = vpop.trf.xlu0
    %v999 = vpop.trf.xlu0
    %v1000 = vpop.trf.xlu0
    %v1001 = vpop.trf.xlu0
    %v1002 = vpop.trf.xlu0
    %v1003 = vpop.trf.xlu0
    %v1004 = vpop.trf.xlu0
    %v1005 = vpop.trf.xlu0
    %v1006 = vpop.trf.xlu0
    %v1007 = vpop.trf.xlu0
    %v1008 = vpop.trf.xlu0
    %v1009 = vpop.trf.xlu0
    %v1010 = vpop.trf.xlu0
    %v1011 = vpop.trf.xlu0
    %1012 = vxpose.xlu0.b32.start [1/16] %v846, 128
    %1013 = vxpose.xlu0.b32.cont [2/16] %v847, 128
    %1014 = vxpose.xlu0.b32.cont [3/16] 0.0, 128
    %1015 = vxpose.xlu0.b32.cont [4/16] 0.0, 128
    %1016 = vxpose.xlu0.b32.cont [5/16] 0.0, 128
    %1017 = vxpose.xlu0.b32.cont [6/16] 0.0, 128
    %1018 = vxpose.xlu0.b32.cont [7/16] 0.0, 128
    %1019 = vxpose.xlu0.b32.cont [8/16] 0.0, 128
    %1020 = vxpose.xlu0.b32.cont [9/16] 0.0, 128
    %1021 = vxpose.xlu0.b32.cont [10/16] 0.0, 128
    %1022 = vxpose.xlu0.b32.cont [11/16] 0.0, 128
    %1023 = vxpose.xlu0.b32.cont [12/16] 0.0, 128
    %1024 = vxpose.xlu0.b32.cont [13/16] 0.0, 128
    %1025 = vxpose.xlu0.b32.cont [14/16] 0.0, 128
    %1026 = vxpose.xlu0.b32.cont [15/16] 0.0, 128
    %1027 = vxpose.xlu0.b32.end [16/16] 0.0, 128
    %v1028 = vpop.trf.xlu0
    %v1029 = vpop.trf.xlu0
    %v1030 = vpop.trf.xlu0
    %v1031 = vpop.trf.xlu0
    %v1032 = vpop.trf.xlu0
    %v1033 = vpop.trf.xlu0
    %v1034 = vpop.trf.xlu0
    %v1035 = vpop.trf.xlu0
    %v1036 = vpop.trf.xlu0
    %v1037 = vpop.trf.xlu0
    %v1038 = vpop.trf.xlu0
    %v1039 = vpop.trf.xlu0
    %v1040 = vpop.trf.xlu0
    %v1041 = vpop.trf.xlu0
    %v1042 = vpop.trf.xlu0
    %v1043 = vpop.trf.xlu0
    %1044 = vxpose.xlu0.b32.start [1/16] %v848, 128
    %1045 = vxpose.xlu0.b32.cont [2/16] %v849, 128
    %1046 = vxpose.xlu0.b32.cont [3/16] 0.0, 128
    %1047 = vxpose.xlu0.b32.cont [4/16] 0.0, 128
    %1048 = vxpose.xlu0.b32.cont [5/16] 0.0, 128
    %1049 = vxpose.xlu0.b32.cont [6/16] 0.0, 128
    %1050 = vxpose.xlu0.b32.cont [7/16] 0.0, 128
    %1051 = vxpose.xlu0.b32.cont [8/16] 0.0, 128
    %1052 = vxpose.xlu0.b32.cont [9/16] 0.0, 128
    %1053 = vxpose.xlu0.b32.cont [10/16] 0.0, 128
    %1054 = vxpose.xlu0.b32.cont [11/16] 0.0, 128
    %1055 = vxpose.xlu0.b32.cont [12/16] 0.0, 128
    %1056 = vxpose.xlu0.b32.cont [13/16] 0.0, 128
    %1057 = vxpose.xlu0.b32.cont [14/16] 0.0, 128
    %1058 = vxpose.xlu0.b32.cont [15/16] 0.0, 128
    %1059 = vxpose.xlu0.b32.end [16/16] 0.0, 128
    %v1060 = vpop.trf.xlu0
    %v1061 = vpop.trf.xlu0
    %v1062 = vpop.trf.xlu0
    %v1063 = vpop.trf.xlu0
    %v1064 = vpop.trf.xlu0
    %v1065 = vpop.trf.xlu0
    %v1066 = vpop.trf.xlu0
    %v1067 = vpop.trf.xlu0
    %v1068 = vpop.trf.xlu0
    %v1069 = vpop.trf.xlu0
    %v1070 = vpop.trf.xlu0
    %v1071 = vpop.trf.xlu0
    %v1072 = vpop.trf.xlu0
    %v1073 = vpop.trf.xlu0
    %v1074 = vpop.trf.xlu0
    %v1075 = vpop.trf.xlu0
    %1076 = vxpose.xlu0.b32.start [1/16] %v850, 128
    %1077 = vxpose.xlu0.b32.cont [2/16] %v851, 128
    %1078 = vxpose.xlu0.b32.cont [3/16] 0.0, 128
    %1079 = vxpose.xlu0.b32.cont [4/16] 0.0, 128
    %1080 = vxpose.xlu0.b32.cont [5/16] 0.0, 128
    %1081 = vxpose.xlu0.b32.cont [6/16] 0.0, 128
    %1082 = vxpose.xlu0.b32.cont [7/16] 0.0, 128
    %1083 = vxpose.xlu0.b32.cont [8/16] 0.0, 128
    %1084 = vxpose.xlu0.b32.cont [9/16] 0.0, 128
    %1085 = vxpose.xlu0.b32.cont [10/16] 0.0, 128
    %1086 = vxpose.xlu0.b32.cont [11/16] 0.0, 128
    %1087 = vxpose.xlu0.b32.cont [12/16] 0.0, 128
    %1088 = vxpose.xlu0.b32.cont [13/16] 0.0, 128
    %1089 = vxpose.xlu0.b32.cont [14/16] 0.0, 128
    %1090 = vxpose.xlu0.b32.cont [15/16] 0.0, 128
    %1091 = vxpose.xlu0.b32.end [16/16] 0.0, 128
    %v1092 = vpop.trf.xlu0
    %v1093 = vpop.trf.xlu0
    %v1094 = vpop.trf.xlu0
    %v1095 = vpop.trf.xlu0
    %v1096 = vpop.trf.xlu0
    %v1097 = vpop.trf.xlu0
    %v1098 = vpop.trf.xlu0
    %v1099 = vpop.trf.xlu0
    %v1100 = vpop.trf.xlu0
    %v1101 = vpop.trf.xlu0
    %v1102 = vpop.trf.xlu0
    %v1103 = vpop.trf.xlu0
    %v1104 = vpop.trf.xlu0
    %v1105 = vpop.trf.xlu0
    %v1106 = vpop.trf.xlu0
    %v1107 = vpop.trf.xlu0
    %vm1108 = vcmask 125952
    %1109 = vst.msk [vmem:[#allocation2] sm:$0xf] %vm1108, %v868
    %1110 = vst.msk [vmem:[#allocation2 + $0x10] sm:$0xf] %vm1108, %v900
    %1111 = vst.msk [vmem:[#allocation2 + $0x20] sm:$0xf] %vm1108, %v932
    %1112 = vst.msk [vmem:[#allocation2 + $0x30] sm:$0xf] %vm1108, %v964
    %1113 = vst.msk [vmem:[#allocation2 + $0x40] sm:$0xf] %vm1108, %v996
    %1114 = vst.msk [vmem:[#allocation2 + $0x50] sm:$0xf] %vm1108, %v1028
    %1115 = vst.msk [vmem:[#allocation2 + $0x60] sm:$0xf] %vm1108, %v1060
    %1116 = vst.msk [vmem:[#allocation2 + $0x70] sm:$0xf] %vm1108, %v1092
    %v1125 = vcombine.low %v868, %v900
    %v1126 = vcombine.low %v932, %v964
    %v1127 = vcombine.low %v996, %v1028
    %v1128 = vcombine.low %v1060, %v1092
    %v1129 = vsel %vm103, %v1125, 0
    %v1131 = vsel %vm103, %v1126, 0
    %v1133 = vsel %vm103, %v1127, 0
    %v1135 = vsel %vm103, %v1128, 0
    %1137 = vmatprep.subr.mxu0 0.0
    %1138 = vmatpush1.msra.mxu0 0.0
    %1139 = vmatprep.subr.mxu0 0.0
    %1140 = vmatpush1.msra.mxu0 0.0
    %1141 = vmatprep.subr.mxu0 0.0
    %1142 = vmatpush1.msra.mxu0 0.0
    %1143 = vmatprep.subr.mxu0 0.0
    %1144 = vmatpush1.msra.mxu0 0.0
    %1145 = vmatprep.subr.mxu0 0.0
    %1146 = vmatpush1.msra.mxu0 0.0
    %1147 = vmatprep.subr.mxu0 0.0
    %1148 = vmatpush1.msra.mxu0 0.0
    %1149 = vmatprep.subr.mxu0 0.0
    %1150 = vmatpush1.msra.mxu0 0.0
    %1151 = vmatprep.subr.mxu0 0.0
    %1152 = vmatpush1.msra.mxu0 0.0
    %1153 = vmatprep.subr.mxu0 0.0
    %1154 = vmatpush1.msra.mxu0 0.0
    %1155 = vmatprep.subr.mxu0 0.0
    %1156 = vmatpush1.msra.mxu0 0.0
    %1157 = vmatprep.subr.mxu0 0.0
    %1158 = vmatpush1.msra.mxu0 0.0
    %1159 = vmatprep.subr.mxu0 0.0
    %1160 = vmatpush1.msra.mxu0 0.0
    %1161 = vmatprep.subr.mxu0 0.0
    %1162 = vmatpush1.msra.mxu0 0.0
    %1163 = vmatprep.subr.mxu0 0.0
    %1164 = vmatpush1.msra.mxu0 0.0
    %1165 = vmatprep.subr.mxu0 0.0
    %1166 = vmatpush1.msra.mxu0 %v43
    %1167 = vmatprep.subr.mxu0 0.0
    %1168 = vmatpush1.msra.mxu0 %v42
    %1169 = vmatprep.subr.mxu0 0.0
    %1170 = vmatpush2.msra.mxu0 0.0
    %1171 = vmatprep.subr.mxu0 0.0
    %1172 = vmatpush2.msra.mxu0 0.0
    %1173 = vmatprep.subr.mxu0 0.0
    %1174 = vmatpush2.msra.mxu0 0.0
    %1175 = vmatprep.subr.mxu0 0.0
    %1176 = vmatpush2.msra.mxu0 0.0
    %1177 = vmatprep.subr.mxu0 0.0
    %1178 = vmatpush2.msra.mxu0 0.0
    %1179 = vmatprep.subr.mxu0 0.0
    %1180 = vmatpush2.msra.mxu0 0.0
    %1181 = vmatprep.subr.mxu0 0.0
    %1182 = vmatpush2.msra.mxu0 0.0
    %1183 = vmatprep.subr.mxu0 0.0
    %1184 = vmatpush2.msra.mxu0 0.0
    %1185 = vmatprep.subr.mxu0 0.0
    %1186 = vmatpush2.msra.mxu0 0.0
    %1187 = vmatprep.subr.mxu0 0.0
    %1188 = vmatpush2.msra.mxu0 0.0
    %1189 = vmatprep.subr.mxu0 0.0
    %1190 = vmatpush2.msra.mxu0 0.0
    %1191 = vmatprep.subr.mxu0 0.0
    %1192 = vmatpush2.msra.mxu0 0.0
    %1193 = vmatprep.subr.mxu0 0.0
    %1194 = vmatpush2.msra.mxu0 0.0
    %1195 = vmatprep.subr.mxu0 0.0
    %1196 = vmatpush2.msra.mxu0 0.0
    %1197 = vmatprep.subr.mxu0 0.0
    %1198 = vmatpush2.msra.mxu0 0.0
    %1199 = vmatprep.subr.mxu0 0.0
    %1200 = vmatpush2.msra.mxu0 0.0
    %1201 = vmatprep.mubr.f32.mxu0 0.0
    %1202 = vmatmul.mubr.f32.gmra.mxu0 %v1129
    %v1203 = vpop.f32.mrf.mxu0
    %v1204 = vadd.f32 0.0, %v1203
    %v1205 = vpop.f32.mrf.mxu0
    %1206 = vmatprep.mubr.f32.mxu0 0.0
    %1207 = vmatmul.mubr.f32.gmra.mxu0 %v1131
    %v1208 = vpop.f32.mrf.mxu0
    %v1209 = vadd.f32 0.0, %v1208
    %v1210 = vpop.f32.mrf.mxu0
    %1211 = vmatprep.mubr.f32.mxu0 0.0
    %1212 = vmatmul.mubr.f32.gmra.mxu0 %v1133
    %v1213 = vpop.f32.mrf.mxu0
    %v1214 = vadd.f32 0.0, %v1213
    %v1215 = vpop.f32.mrf.mxu0
    %1216 = vmatprep.mubr.f32.mxu0 0.0
    %1217 = vmatmul.mubr.f32.gmra.mxu0 %v1135
    %v1218 = vpop.f32.mrf.mxu0
    %v1219 = vadd.f32 0.0, %v1218
    %v1220 = vpop.f32.mrf.mxu0
    %1221 = vdwg.mxu0
    %v1226 = vcombine.high %v1204, %v1204
    %v1227 = vcombine.high %v1209, %v1209
    %v1228 = vcombine.high %v1214, %v1214
    %v1229 = vcombine.high %v1219, %v1219
    %1234 = vst.msk [vmem:[#allocation2 + $0x4] sm:$0xf] %vm1108, %v1204
    %1235 = vst.msk [vmem:[#allocation2 + $0x14] sm:$0xf] %vm1108, %v1226
    %1236 = vst.msk [vmem:[#allocation2 + $0x24] sm:$0xf] %vm1108, %v1209
    %1237 = vst.msk [vmem:[#allocation2 + $0x34] sm:$0xf] %vm1108, %v1227
    %1238 = vst.msk [vmem:[#allocation2 + $0x44] sm:$0xf] %vm1108, %v1214
    %1239 = vst.msk [vmem:[#allocation2 + $0x54] sm:$0xf] %vm1108, %v1228
    %1240 = vst.msk [vmem:[#allocation2 + $0x64] sm:$0xf] %vm1108, %v1219
    %1241 = vst.msk [vmem:[#allocation2 + $0x74] sm:$0xf] %vm1108, %v1229
    %v1242 = vsel %vm103, %v1204, 0
    %v1244 = vsel %vm103, %v1209, 0
    %v1246 = vsel %vm103, %v1214, 0
    %v1248 = vsel %vm103, %v1219, 0
    %1250 = vmatprep.subr.mxu0 0.0
    %1251 = vmatpush1.msra.mxu0 0.0
    %1252 = vmatprep.subr.mxu0 0.0
    %1253 = vmatpush1.msra.mxu0 0.0
    %1254 = vmatprep.subr.mxu0 0.0
    %1255 = vmatpush1.msra.mxu0 0.0
    %1256 = vmatprep.subr.mxu0 0.0
    %1257 = vmatpush1.msra.mxu0 0.0
    %1258 = vmatprep.subr.mxu0 0.0
    %1259 = vmatpush1.msra.mxu0 0.0
    %1260 = vmatprep.subr.mxu0 0.0
    %1261 = vmatpush1.msra.mxu0 0.0
    %1262 = vmatprep.subr.mxu0 0.0
    %1263 = vmatpush1.msra.mxu0 0.0
    %1264 = vmatprep.subr.mxu0 0.0
    %1265 = vmatpush1.msra.mxu0 0.0
    %1266 = vmatprep.subr.mxu0 0.0
    %1267 = vmatpush1.msra.mxu0 0.0
    %1268 = vmatprep.subr.mxu0 0.0
    %1269 = vmatpush1.msra.mxu0 0.0
    %1270 = vmatprep.subr.mxu0 0.0
    %1271 = vmatpush1.msra.mxu0 0.0
    %1272 = vmatprep.subr.mxu0 0.0
    %1273 = vmatpush1.msra.mxu0 0.0
    %1274 = vmatprep.subr.mxu0 0.0
    %1275 = vmatpush1.msra.mxu0 0.0
    %1276 = vmatprep.subr.mxu0 0.0
    %1277 = vmatpush1.msra.mxu0 0.0
    %1278 = vmatprep.subr.mxu0 0.0
    %1279 = vmatpush1.msra.mxu0 %v43
    %1280 = vmatprep.subr.mxu0 0.0
    %1281 = vmatpush1.msra.mxu0 %v42
    %1282 = vmatprep.subr.mxu0 0.0
    %1283 = vmatpush2.msra.mxu0 0.0
    %1284 = vmatprep.subr.mxu0 0.0
    %1285 = vmatpush2.msra.mxu0 0.0
    %1286 = vmatprep.subr.mxu0 0.0
    %1287 = vmatpush2.msra.mxu0 0.0
    %1288 = vmatprep.subr.mxu0 0.0
    %1289 = vmatpush2.msra.mxu0 0.0
    %1290 = vmatprep.subr.mxu0 0.0
    %1291 = vmatpush2.msra.mxu0 0.0
    %1292 = vmatprep.subr.mxu0 0.0
    %1293 = vmatpush2.msra.mxu0 0.0
    %1294 = vmatprep.subr.mxu0 0.0
    %1295 = vmatpush2.msra.mxu0 0.0
    %1296 = vmatprep.subr.mxu0 0.0
    %1297 = vmatpush2.msra.mxu0 0.0
    %1298 = vmatprep.subr.mxu0 0.0
    %1299 = vmatpush2.msra.mxu0 0.0
    %1300 = vmatprep.subr.mxu0 0.0
    %1301 = vmatpush2.msra.mxu0 0.0
    %1302 = vmatprep.subr.mxu0 0.0
    %1303 = vmatpush2.msra.mxu0 0.0
    %1304 = vmatprep.subr.mxu0 0.0
    %1305 = vmatpush2.msra.mxu0 0.0
    %1306 = vmatprep.subr.mxu0 0.0
    %1307 = vmatpush2.msra.mxu0 0.0
    %1308 = vmatprep.subr.mxu0 0.0
    %1309 = vmatpush2.msra.mxu0 0.0
    %1310 = vmatprep.subr.mxu0 0.0
    %1311 = vmatpush2.msra.mxu0 0.0
    %1312 = vmatprep.subr.mxu0 0.0
    %1313 = vmatpush2.msra.mxu0 0.0
    %1314 = vmatprep.mubr.f32.mxu0 0.0
    %1315 = vmatmul.mubr.f32.gmra.mxu0 %v1242
    %v1316 = vpop.f32.mrf.mxu0
    %v1317 = vadd.f32 0.0, %v1316
    %v1318 = vpop.f32.mrf.mxu0
    %1319 = vmatprep.mubr.f32.mxu0 0.0
    %1320 = vmatmul.mubr.f32.gmra.mxu0 %v1244
    %v1321 = vpop.f32.mrf.mxu0
    %v1322 = vadd.f32 0.0, %v1321
    %v1323 = vpop.f32.mrf.mxu0
    %1324 = vmatprep.mubr.f32.mxu0 0.0
    %1325 = vmatmul.mubr.f32.gmra.mxu0 %v1246
    %v1326 = vpop.f32.mrf.mxu0
    %v1327 = vadd.f32 0.0, %v1326
    %v1328 = vpop.f32.mrf.mxu0
    %1329 = vmatprep.mubr.f32.mxu0 0.0
    %1330 = vmatmul.mubr.f32.gmra.mxu0 %v1248
    %v1331 = vpop.f32.mrf.mxu0
    %v1332 = vadd.f32 0.0, %v1331
    %v1333 = vpop.f32.mrf.mxu0
    %1334 = vdwg.mxu0
    %v1339 = vcombine.high %v1317, %v1317
    %v1340 = vcombine.high %v1322, %v1322
    %v1341 = vcombine.high %v1327, %v1327
    %v1342 = vcombine.high %v1332, %v1332
    %1347 = vst.msk [vmem:[#allocation2 + $0x8] sm:$0xf] %vm1108, %v1317
    %1348 = vst.msk [vmem:[#allocation2 + $0x18] sm:$0xf] %vm1108, %v1339
    %1349 = vst.msk [vmem:[#allocation2 + $0x28] sm:$0xf] %vm1108, %v1322
    %1350 = vst.msk [vmem:[#allocation2 + $0x38] sm:$0xf] %vm1108, %v1340
    %1351 = vst.msk [vmem:[#allocation2 + $0x48] sm:$0xf] %vm1108, %v1327
    %1352 = vst.msk [vmem:[#allocation2 + $0x58] sm:$0xf] %vm1108, %v1341
    %1353 = vst.msk [vmem:[#allocation2 + $0x68] sm:$0xf] %vm1108, %v1332
    %1354 = vst.msk [vmem:[#allocation2 + $0x78] sm:$0xf] %vm1108, %v1342
    %v1355 = vld [vmem:[#allocation2] sm:$0xff]
    %v1356 = vld [vmem:[#allocation2 + $0x8] sm:$0xf]
    %v1357 = vld [vmem:[#allocation2 + $0x10] sm:$0xff]
    %v1358 = vld [vmem:[#allocation2 + $0x18] sm:$0xf]
    %v1359 = vld [vmem:[#allocation2 + $0x20] sm:$0xff]
    %v1360 = vld [vmem:[#allocation2 + $0x28] sm:$0xf]
    %v1361 = vld [vmem:[#allocation2 + $0x30] sm:$0xff]
    %v1362 = vld [vmem:[#allocation2 + $0x38] sm:$0xf]
    %v1363 = vld [vmem:[#allocation2 + $0x40] sm:$0xff]
    %v1364 = vld [vmem:[#allocation2 + $0x48] sm:$0xf]
    %v1365 = vld [vmem:[#allocation2 + $0x50] sm:$0xff]
    %v1366 = vld [vmem:[#allocation2 + $0x58] sm:$0xf]
    %v1367 = vld [vmem:[#allocation2 + $0x60] sm:$0xff]
    %v1368 = vld [vmem:[#allocation2 + $0x68] sm:$0xf]
    %v1369 = vld [vmem:[#allocation2 + $0x70] sm:$0xff]
    %v1370 = vld [vmem:[#allocation2 + $0x78] sm:$0xf]
    %1371 = vxpose.xlu0.b32.start [1/16] %v1355, 128
    %1372 = vxpose.xlu0.b32.cont [2/16] %v1356, 128
    %1373 = vxpose.xlu0.b32.cont [3/16] 0.0, 128
    %1374 = vxpose.xlu0.b32.cont [4/16] 0.0, 128
    %1375 = vxpose.xlu0.b32.cont [5/16] 0.0, 128
    %1376 = vxpose.xlu0.b32.cont [6/16] 0.0, 128
    %1377 = vxpose.xlu0.b32.cont [7/16] 0.0, 128
    %1378 = vxpose.xlu0.b32.cont [8/16] 0.0, 128
    %1379 = vxpose.xlu0.b32.cont [9/16] 0.0, 128
    %1380 = vxpose.xlu0.b32.cont [10/16] 0.0, 128
    %1381 = vxpose.xlu0.b32.cont [11/16] 0.0, 128
    %1382 = vxpose.xlu0.b32.cont [12/16] 0.0, 128
    %1383 = vxpose.xlu0.b32.cont [13/16] 0.0, 128
    %1384 = vxpose.xlu0.b32.cont [14/16] 0.0, 128
    %1385 = vxpose.xlu0.b32.cont [15/16] 0.0, 128
    %1386 = vxpose.xlu0.b32.end [16/16] 0.0, 128
    %v1387 = vpop.trf.xlu0
    %v1388 = vpop.trf.xlu0
    %v1389 = vpop.trf.xlu0
    %v1390 = vpop.trf.xlu0
    %v1391 = vpop.trf.xlu0
    %v1392 = vpop.trf.xlu0
    %v1393 = vpop.trf.xlu0
    %v1394 = vpop.trf.xlu0
    %v1395 = vpop.trf.xlu0
    %v1396 = vpop.trf.xlu0
    %v1397 = vpop.trf.xlu0
    %v1398 = vpop.trf.xlu0
    %v1399 = vpop.trf.xlu0
    %v1400 = vpop.trf.xlu0
    %v1401 = vpop.trf.xlu0
    %v1402 = vpop.trf.xlu0
    %1403 = vxpose.xlu0.b32.start [1/16] %v1357, 128
    %1404 = vxpose.xlu0.b32.cont [2/16] %v1358, 128
    %1405 = vxpose.xlu0.b32.cont [3/16] 0.0, 128
    %1406 = vxpose.xlu0.b32.cont [4/16] 0.0, 128
    %1407 = vxpose.xlu0.b32.cont [5/16] 0.0, 128
    %1408 = vxpose.xlu0.b32.cont [6/16] 0.0, 128
    %1409 = vxpose.xlu0.b32.cont [7/16] 0.0, 128
    %1410 = vxpose.xlu0.b32.cont [8/16] 0.0, 128
    %1411 = vxpose.xlu0.b32.cont [9/16] 0.0, 128
    %1412 = vxpose.xlu0.b32.cont [10/16] 0.0, 128
    %1413 = vxpose.xlu0.b32.cont [11/16] 0.0, 128
    %1414 = vxpose.xlu0.b32.cont [12/16] 0.0, 128
    %1415 = vxpose.xlu0.b32.cont [13/16] 0.0, 128
    %1416 = vxpose.xlu0.b32.cont [14/16] 0.0, 128
    %1417 = vxpose.xlu0.b32.cont [15/16] 0.0, 128
    %1418 = vxpose.xlu0.b32.end [16/16] 0.0, 128
    %v1419 = vpop.trf.xlu0
    %v1420 = vpop.trf.xlu0
    %v1421 = vpop.trf.xlu0
    %v1422 = vpop.trf.xlu0
    %v1423 = vpop.trf.xlu0
    %v1424 = vpop.trf.xlu0
    %v1425 = vpop.trf.xlu0
    %v1426 = vpop.trf.xlu0
    %v1427 = vpop.trf.xlu0
    %v1428 = vpop.trf.xlu0
    %v1429 = vpop.trf.xlu0
    %v1430 = vpop.trf.xlu0
    %v1431 = vpop.trf.xlu0
    %v1432 = vpop.trf.xlu0
    %v1433 = vpop.trf.xlu0
    %v1434 = vpop.trf.xlu0
    %1435 = vxpose.xlu0.b32.start [1/16] %v1359, 128
    %1436 = vxpose.xlu0.b32.cont [2/16] %v1360, 128
    %1437 = vxpose.xlu0.b32.cont [3/16] 0.0, 128
    %1438 = vxpose.xlu0.b32.cont [4/16] 0.0, 128
    %1439 = vxpose.xlu0.b32.cont [5/16] 0.0, 128
    %1440 = vxpose.xlu0.b32.cont [6/16] 0.0, 128
    %1441 = vxpose.xlu0.b32.cont [7/16] 0.0, 128
    %1442 = vxpose.xlu0.b32.cont [8/16] 0.0, 128
    %1443 = vxpose.xlu0.b32.cont [9/16] 0.0, 128
    %1444 = vxpose.xlu0.b32.cont [10/16] 0.0, 128
    %1445 = vxpose.xlu0.b32.cont [11/16] 0.0, 128
    %1446 = vxpose.xlu0.b32.cont [12/16] 0.0, 128
    %1447 = vxpose.xlu0.b32.cont [13/16] 0.0, 128
    %1448 = vxpose.xlu0.b32.cont [14/16] 0.0, 128
    %1449 = vxpose.xlu0.b32.cont [15/16] 0.0, 128
    %1450 = vxpose.xlu0.b32.end [16/16] 0.0, 128
    %v1451 = vpop.trf.xlu0
    %v1452 = vpop.trf.xlu0
    %v1453 = vpop.trf.xlu0
    %v1454 = vpop.trf.xlu0
    %v1455 = vpop.trf.xlu0
    %v1456 = vpop.trf.xlu0
    %v1457 = vpop.trf.xlu0
    %v1458 = vpop.trf.xlu0
    %v1459 = vpop.trf.xlu0
    %v1460 = vpop.trf.xlu0
    %v1461 = vpop.trf.xlu0
    %v1462 = vpop.trf.xlu0
    %v1463 = vpop.trf.xlu0
    %v1464 = vpop.trf.xlu0
    %v1465 = vpop.trf.xlu0
    %v1466 = vpop.trf.xlu0
    %1467 = vxpose.xlu0.b32.start [1/16] %v1361, 128
    %1468 = vxpose.xlu0.b32.cont [2/16] %v1362, 128
    %1469 = vxpose.xlu0.b32.cont [3/16] 0.0, 128
    %1470 = vxpose.xlu0.b32.cont [4/16] 0.0, 128
    %1471 = vxpose.xlu0.b32.cont [5/16] 0.0, 128
    %1472 = vxpose.xlu0.b32.cont [6/16] 0.0, 128
    %1473 = vxpose.xlu0.b32.cont [7/16] 0.0, 128
    %1474 = vxpose.xlu0.b32.cont [8/16] 0.0, 128
    %1475 = vxpose.xlu0.b32.cont [9/16] 0.0, 128
    %1476 = vxpose.xlu0.b32.cont [10/16] 0.0, 128
    %1477 = vxpose.xlu0.b32.cont [11/16] 0.0, 128
    %1478 = vxpose.xlu0.b32.cont [12/16] 0.0, 128
    %1479 = vxpose.xlu0.b32.cont [13/16] 0.0, 128
    %1480 = vxpose.xlu0.b32.cont [14/16] 0.0, 128
    %1481 = vxpose.xlu0.b32.cont [15/16] 0.0, 128
    %1482 = vxpose.xlu0.b32.end [16/16] 0.0, 128
    %v1483 = vpop.trf.xlu0
    %v1484 = vpop.trf.xlu0
    %v1485 = vpop.trf.xlu0
    %v1486 = vpop.trf.xlu0
    %v1487 = vpop.trf.xlu0
    %v1488 = vpop.trf.xlu0
    %v1489 = vpop.trf.xlu0
    %v1490 = vpop.trf.xlu0
    %v1491 = vpop.trf.xlu0
    %v1492 = vpop.trf.xlu0
    %v1493 = vpop.trf.xlu0
    %v1494 = vpop.trf.xlu0
    %v1495 = vpop.trf.xlu0
    %v1496 = vpop.trf.xlu0
    %v1497 = vpop.trf.xlu0
    %v1498 = vpop.trf.xlu0
    %1499 = vxpose.xlu0.b32.start [1/16] %v1363, 128
    %1500 = vxpose.xlu0.b32.cont [2/16] %v1364, 128
    %1501 = vxpose.xlu0.b32.cont [3/16] 0.0, 128
    %1502 = vxpose.xlu0.b32.cont [4/16] 0.0, 128
    %1503 = vxpose.xlu0.b32.cont [5/16] 0.0, 128
    %1504 = vxpose.xlu0.b32.cont [6/16] 0.0, 128
    %1505 = vxpose.xlu0.b32.cont [7/16] 0.0, 128
    %1506 = vxpose.xlu0.b32.cont [8/16] 0.0, 128
    %1507 = vxpose.xlu0.b32.cont [9/16] 0.0, 128
    %1508 = vxpose.xlu0.b32.cont [10/16] 0.0, 128
    %1509 = vxpose.xlu0.b32.cont [11/16] 0.0, 128
    %1510 = vxpose.xlu0.b32.cont [12/16] 0.0, 128
    %1511 = vxpose.xlu0.b32.cont [13/16] 0.0, 128
    %1512 = vxpose.xlu0.b32.cont [14/16] 0.0, 128
    %1513 = vxpose.xlu0.b32.cont [15/16] 0.0, 128
    %1514 = vxpose.xlu0.b32.end [16/16] 0.0, 128
    %v1515 = vpop.trf.xlu0
    %v1516 = vpop.trf.xlu0
    %v1517 = vpop.trf.xlu0
    %v1518 = vpop.trf.xlu0
    %v1519 = vpop.trf.xlu0
    %v1520 = vpop.trf.xlu0
    %v1521 = vpop.trf.xlu0
    %v1522 = vpop.trf.xlu0
    %v1523 = vpop.trf.xlu0
    %v1524 = vpop.trf.xlu0
    %v1525 = vpop.trf.xlu0
    %v1526 = vpop.trf.xlu0
    %v1527 = vpop.trf.xlu0
    %v1528 = vpop.trf.xlu0
    %v1529 = vpop.trf.xlu0
    %v1530 = vpop.trf.xlu0
    %1531 = vxpose.xlu0.b32.start [1/16] %v1365, 128
    %1532 = vxpose.xlu0.b32.cont [2/16] %v1366, 128
    %1533 = vxpose.xlu0.b32.cont [3/16] 0.0, 128
    %1534 = vxpose.xlu0.b32.cont [4/16] 0.0, 128
    %1535 = vxpose.xlu0.b32.cont [5/16] 0.0, 128
    %1536 = vxpose.xlu0.b32.cont [6/16] 0.0, 128
    %1537 = vxpose.xlu0.b32.cont [7/16] 0.0, 128
    %1538 = vxpose.xlu0.b32.cont [8/16] 0.0, 128
    %1539 = vxpose.xlu0.b32.cont [9/16] 0.0, 128
    %1540 = vxpose.xlu0.b32.cont [10/16] 0.0, 128
    %1541 = vxpose.xlu0.b32.cont [11/16] 0.0, 128
    %1542 = vxpose.xlu0.b32.cont [12/16] 0.0, 128
    %1543 = vxpose.xlu0.b32.cont [13/16] 0.0, 128
    %1544 = vxpose.xlu0.b32.cont [14/16] 0.0, 128
    %1545 = vxpose.xlu0.b32.cont [15/16] 0.0, 128
    %1546 = vxpose.xlu0.b32.end [16/16] 0.0, 128
    %v1547 = vpop.trf.xlu0
    %v1548 = vpop.trf.xlu0
    %v1549 = vpop.trf.xlu0
    %v1550 = vpop.trf.xlu0
    %v1551 = vpop.trf.xlu0
    %v1552 = vpop.trf.xlu0
    %v1553 = vpop.trf.xlu0
    %v1554 = vpop.trf.xlu0
    %v1555 = vpop.trf.xlu0
    %v1556 = vpop.trf.xlu0
    %v1557 = vpop.trf.xlu0
    %v1558 = vpop.trf.xlu0
    %v1559 = vpop.trf.xlu0
    %v1560 = vpop.trf.xlu0
    %v1561 = vpop.trf.xlu0
    %v1562 = vpop.trf.xlu0
    %1563 = vxpose.xlu0.b32.start [1/16] %v1367, 128
    %1564 = vxpose.xlu0.b32.cont [2/16] %v1368, 128
    %1565 = vxpose.xlu0.b32.cont [3/16] 0.0, 128
    %1566 = vxpose.xlu0.b32.cont [4/16] 0.0, 128
    %1567 = vxpose.xlu0.b32.cont [5/16] 0.0, 128
    %1568 = vxpose.xlu0.b32.cont [6/16] 0.0, 128
    %1569 = vxpose.xlu0.b32.cont [7/16] 0.0, 128
    %1570 = vxpose.xlu0.b32.cont [8/16] 0.0, 128
    %1571 = vxpose.xlu0.b32.cont [9/16] 0.0, 128
    %1572 = vxpose.xlu0.b32.cont [10/16] 0.0, 128
    %1573 = vxpose.xlu0.b32.cont [11/16] 0.0, 128
    %1574 = vxpose.xlu0.b32.cont [12/16] 0.0, 128
    %1575 = vxpose.xlu0.b32.cont [13/16] 0.0, 128
    %1576 = vxpose.xlu0.b32.cont [14/16] 0.0, 128
    %1577 = vxpose.xlu0.b32.cont [15/16] 0.0, 128
    %1578 = vxpose.xlu0.b32.end [16/16] 0.0, 128
    %v1579 = vpop.trf.xlu0
    %v1580 = vpop.trf.xlu0
    %v1581 = vpop.trf.xlu0
    %v1582 = vpop.trf.xlu0
    %v1583 = vpop.trf.xlu0
    %v1584 = vpop.trf.xlu0
    %v1585 = vpop.trf.xlu0
    %v1586 = vpop.trf.xlu0
    %v1587 = vpop.trf.xlu0
    %v1588 = vpop.trf.xlu0
    %v1589 = vpop.trf.xlu0
    %v1590 = vpop.trf.xlu0
    %v1591 = vpop.trf.xlu0
    %v1592 = vpop.trf.xlu0
    %v1593 = vpop.trf.xlu0
    %v1594 = vpop.trf.xlu0
    %1595 = vxpose.xlu0.b32.start [1/16] %v1369, 128
    %1596 = vxpose.xlu0.b32.cont [2/16] %v1370, 128
    %1597 = vxpose.xlu0.b32.cont [3/16] 0.0, 128
    %1598 = vxpose.xlu0.b32.cont [4/16] 0.0, 128
    %1599 = vxpose.xlu0.b32.cont [5/16] 0.0, 128
    %1600 = vxpose.xlu0.b32.cont [6/16] 0.0, 128
    %1601 = vxpose.xlu0.b32.cont [7/16] 0.0, 128
    %1602 = vxpose.xlu0.b32.cont [8/16] 0.0, 128
    %1603 = vxpose.xlu0.b32.cont [9/16] 0.0, 128
    %1604 = vxpose.xlu0.b32.cont [10/16] 0.0, 128
    %1605 = vxpose.xlu0.b32.cont [11/16] 0.0, 128
    %1606 = vxpose.xlu0.b32.cont [12/16] 0.0, 128
    %1607 = vxpose.xlu0.b32.cont [13/16] 0.0, 128
    %1608 = vxpose.xlu0.b32.cont [14/16] 0.0, 128
    %1609 = vxpose.xlu0.b32.cont [15/16] 0.0, 128
    %1610 = vxpose.xlu0.b32.end [16/16] 0.0, 128
    %v1611 = vpop.trf.xlu0
    %v1612 = vpop.trf.xlu0
    %v1613 = vpop.trf.xlu0
    %v1614 = vpop.trf.xlu0
    %v1615 = vpop.trf.xlu0
    %v1616 = vpop.trf.xlu0
    %v1617 = vpop.trf.xlu0
    %v1618 = vpop.trf.xlu0
    %v1619 = vpop.trf.xlu0
    %v1620 = vpop.trf.xlu0
    %v1621 = vpop.trf.xlu0
    %v1622 = vpop.trf.xlu0
    %v1623 = vpop.trf.xlu0
    %v1624 = vpop.trf.xlu0
    %v1625 = vpop.trf.xlu0
    %v1626 = vpop.trf.xlu0
    %v1627 = vld [vmem:[%s4] sm:$0xff]
    %v1628 = vld [vmem:[%s4 + $0x8] sm:$0xf]
    %v1629 = vld [vmem:[%s5] sm:$0x1]
    %v1631 = vlaneseq
    %v1632 = vshrl.u32 %v1631, 7
    %v1633 = vsub.s32 0, %v1632
    %v1634 = vrot.slane %v1629, %v1633
    %vm1636 = vcmask 97280
    %v1638 = vsel %vm1636, %v1387, 0
    %v1641 = vsel %vm1636, %v1388, 0
    %v1644 = vsel %vm1636, %v1419, 0
    %v1647 = vsel %vm1636, %v1420, 0
    %v1650 = vsel %vm1636, %v1451, 0
    %v1653 = vsel %vm1636, %v1452, 0
    %v1656 = vsel %vm1636, %v1483, 0
    %v1659 = vsel %vm1636, %v1484, 0
    %v1662 = vsel %vm1636, %v1515, 0
    %v1665 = vsel %vm1636, %v1516, 0
    %v1668 = vsel %vm1636, %v1547, 0
    %v1671 = vsel %vm1636, %v1548, 0
    %v1674 = vsel %vm1636, %v1579, 0
    %v1677 = vsel %vm1636, %v1580, 0
    %v1680 = vsel %vm1636, %v1611, 0
    %v1683 = vsel %vm1636, %v1612, 0
    %vm1685 = vcmask 1043456
    %v1687 = vsel %vm1685, %v1628, 0
    %1689 = vmatprep.subr.mxu0 0.0
    %1690 = vmatpush1.msra.mxu0 0.0
    %1691 = vmatprep.subr.mxu0 0.0
    %1692 = vmatpush1.msra.mxu0 0.0
    %1693 = vmatprep.subr.mxu0 0.0
    %1694 = vmatpush1.msra.mxu0 0.0
    %1695 = vmatprep.subr.mxu0 0.0
    %1696 = vmatpush1.msra.mxu0 0.0
    %1697 = vmatprep.subr.mxu0 0.0
    %1698 = vmatpush1.msra.mxu0 0.0
    %1699 = vmatprep.subr.mxu0 0.0
    %1700 = vmatpush1.msra.mxu0 0.0
    %1701 = vmatprep.subr.mxu0 0.0
    %1702 = vmatpush1.msra.mxu0 0.0
    %1703 = vmatprep.subr.mxu0 0.0
    %1704 = vmatpush1.msra.mxu0 0.0
    %1705 = vmatprep.subr.mxu0 0.0
    %1706 = vmatpush1.msra.mxu0 0.0
    %1707 = vmatprep.subr.mxu0 0.0
    %1708 = vmatpush1.msra.mxu0 0.0
    %1709 = vmatprep.subr.mxu0 0.0
    %1710 = vmatpush1.msra.mxu0 0.0
    %1711 = vmatprep.subr.mxu0 0.0
    %1712 = vmatpush1.msra.mxu0 0.0
    %1713 = vmatprep.subr.mxu0 0.0
    %1714 = vmatpush1.msra.mxu0 0.0
    %1715 = vmatprep.subr.mxu0 0.0
    %1716 = vmatpush1.msra.mxu0 0.0
    %1717 = vmatprep.subr.mxu0 0.0
    %1718 = vmatpush1.msra.mxu0 %v1687
    %1719 = vmatprep.subr.mxu0 0.0
    %1720 = vmatpush1.msra.mxu0 %v1627
    %1721 = vmatprep.subr.mxu0 0.0
    %1722 = vmatpush2.msra.mxu0 0.0
    %1723 = vmatprep.subr.mxu0 0.0
    %1724 = vmatpush2.msra.mxu0 0.0
    %1725 = vmatprep.subr.mxu0 0.0
    %1726 = vmatpush2.msra.mxu0 0.0
    %1727 = vmatprep.subr.mxu0 0.0
    %1728 = vmatpush2.msra.mxu0 0.0
    %1729 = vmatprep.subr.mxu0 0.0
    %1730 = vmatpush2.msra.mxu0 0.0
    %1731 = vmatprep.subr.mxu0 0.0
    %1732 = vmatpush2.msra.mxu0 0.0
    %1733 = vmatprep.subr.mxu0 0.0
    %1734 = vmatpush2.msra.mxu0 0.0
    %1735 = vmatprep.subr.mxu0 0.0
    %1736 = vmatpush2.msra.mxu0 0.0
    %1737 = vmatprep.subr.mxu0 0.0
    %1738 = vmatpush2.msra.mxu0 0.0
    %1739 = vmatprep.subr.mxu0 0.0
    %1740 = vmatpush2.msra.mxu0 0.0
    %1741 = vmatprep.subr.mxu0 0.0
    %1742 = vmatpush2.msra.mxu0 0.0
    %1743 = vmatprep.subr.mxu0 0.0
    %1744 = vmatpush2.msra.mxu0 0.0
    %1745 = vmatprep.subr.mxu0 0.0
    %1746 = vmatpush2.msra.mxu0 0.0
    %1747 = vmatprep.subr.mxu0 0.0
    %1748 = vmatpush2.msra.mxu0 0.0
    %1749 = vmatprep.subr.mxu0 0.0
    %1750 = vmatpush2.msra.mxu0 0.0
    %1751 = vmatprep.subr.mxu0 0.0
    %1752 = vmatpush2.msra.mxu0 0.0
    %1753 = vmatprep.mubr.f32.mxu0 0.0
    %1754 = vmatmul.mubr.f32.gmra.mxu0 %v1638
    %v1755 = vpop.f32.mrf.mxu0
    %v1756 = vadd.f32 %v1634, %v1755
    %v1757 = vpop.f32.mrf.mxu0
    %1758 = vmatprep.mubr.f32.mxu0 0.0
    %1759 = vmatmul.mubr.f32.gmra.mxu0 %v1641
    %v1760 = vpop.f32.mrf.mxu0
    %v1761 = vadd.f32 %v1634, %v1760
    %v1762 = vpop.f32.mrf.mxu0
    %1763 = vmatprep.mubr.f32.mxu0 0.0
    %1764 = vmatmul.mubr.f32.gmra.mxu0 %v1644
    %v1765 = vpop.f32.mrf.mxu0
    %v1766 = vadd.f32 %v1634, %v1765
    %v1767 = vpop.f32.mrf.mxu0
    %1768 = vmatprep.mubr.f32.mxu0 0.0
    %1769 = vmatmul.mubr.f32.gmra.mxu0 %v1647
    %v1770 = vpop.f32.mrf.mxu0
    %v1771 = vadd.f32 %v1634, %v1770
    %v1772 = vpop.f32.mrf.mxu0
    %1773 = vmatprep.mubr.f32.mxu0 0.0
    %1774 = vmatmul.mubr.f32.gmra.mxu0 %v1650
    %v1775 = vpop.f32.mrf.mxu0
    %v1776 = vadd.f32 %v1634, %v1775
    %v1777 = vpop.f32.mrf.mxu0
    %1778 = vmatprep.mubr.f32.mxu0 0.0
    %1779 = vmatmul.mubr.f32.gmra.mxu0 %v1653
    %v1780 = vpop.f32.mrf.mxu0
    %v1781 = vadd.f32 %v1634, %v1780
    %v1782 = vpop.f32.mrf.mxu0
    %1783 = vmatprep.mubr.f32.mxu0 0.0
    %1784 = vmatmul.mubr.f32.gmra.mxu0 %v1656
    %v1785 = vpop.f32.mrf.mxu0
    %v1786 = vadd.f32 %v1634, %v1785
    %v1787 = vpop.f32.mrf.mxu0
    %1788 = vmatprep.mubr.f32.mxu0 0.0
    %1789 = vmatmul.mubr.f32.gmra.mxu0 %v1659
    %v1790 = vpop.f32.mrf.mxu0
    %v1791 = vadd.f32 %v1634, %v1790
    %v1792 = vpop.f32.mrf.mxu0
    %1793 = vmatprep.mubr.f32.mxu0 0.0
    %1794 = vmatmul.mubr.f32.gmra.mxu0 %v1662
    %v1795 = vpop.f32.mrf.mxu0
    %v1796 = vadd.f32 %v1634, %v1795
    %v1797 = vpop.f32.mrf.mxu0
    %1798 = vmatprep.mubr.f32.mxu0 0.0
    %1799 = vmatmul.mubr.f32.gmra.mxu0 %v1665
    %v1800 = vpop.f32.mrf.mxu0
    %v1801 = vadd.f32 %v1634, %v1800
    %v1802 = vpop.f32.mrf.mxu0
    %1803 = vmatprep.mubr.f32.mxu0 0.0
    %1804 = vmatmul.mubr.f32.gmra.mxu0 %v1668
    %v1805 = vpop.f32.mrf.mxu0
    %v1806 = vadd.f32 %v1634, %v1805
    %v1807 = vpop.f32.mrf.mxu0
    %1808 = vmatprep.mubr.f32.mxu0 0.0
    %1809 = vmatmul.mubr.f32.gmra.mxu0 %v1671
    %v1810 = vpop.f32.mrf.mxu0
    %v1811 = vadd.f32 %v1634, %v1810
    %v1812 = vpop.f32.mrf.mxu0
    %1813 = vmatprep.mubr.f32.mxu0 0.0
    %1814 = vmatmul.mubr.f32.gmra.mxu0 %v1674
    %v1815 = vpop.f32.mrf.mxu0
    %v1816 = vadd.f32 %v1634, %v1815
    %v1817 = vpop.f32.mrf.mxu0
    %1818 = vmatprep.mubr.f32.mxu0 0.0
    %1819 = vmatmul.mubr.f32.gmra.mxu0 %v1677
    %v1820 = vpop.f32.mrf.mxu0
    %v1821 = vadd.f32 %v1634, %v1820
    %v1822 = vpop.f32.mrf.mxu0
    %1823 = vmatprep.mubr.f32.mxu0 0.0
    %1824 = vmatmul.mubr.f32.gmra.mxu0 %v1680
    %v1825 = vpop.f32.mrf.mxu0
    %v1826 = vadd.f32 %v1634, %v1825
    %v1827 = vpop.f32.mrf.mxu0
    %1828 = vmatprep.mubr.f32.mxu0 0.0
    %1829 = vmatmul.mubr.f32.gmra.mxu0 %v1683
    %v1830 = vpop.f32.mrf.mxu0
    %v1831 = vadd.f32 %v1634, %v1830
    %v1832 = vpop.f32.mrf.mxu0
    %1833 = vdwg.mxu0
    %v1834 = vmax.f32 %v1756, 0.0
    %v1835 = vmax.f32 %v1761, 0.0
    %v1836 = vmax.f32 %v1766, 0.0
    %v1837 = vmax.f32 %v1771, 0.0
    %v1838 = vmax.f32 %v1776, 0.0
    %v1839 = vmax.f32 %v1781, 0.0
    %v1840 = vmax.f32 %v1786, 0.0
    %v1841 = vmax.f32 %v1791, 0.0
    %v1842 = vmax.f32 %v1796, 0.0
    %v1843 = vmax.f32 %v1801, 0.0
    %v1844 = vmax.f32 %v1806, 0.0
    %v1845 = vmax.f32 %v1811, 0.0
    %v1846 = vmax.f32 %v1816, 0.0
    %v1847 = vmax.f32 %v1821, 0.0
    %v1848 = vmax.f32 %v1826, 0.0
    %v1849 = vmax.f32 %v1831, 0.0
    %1850 = vxpose.xlu0.b32.start [1/16] %v1834, 128
    %1851 = vxpose.xlu0.b32.cont [2/16] %v1835, 128
    %1852 = vxpose.xlu0.b32.cont [3/16] 0.0, 128
    %1853 = vxpose.xlu0.b32.cont [4/16] 0.0, 128
    %1854 = vxpose.xlu0.b32.cont [5/16] 0.0, 128
    %1855 = vxpose.xlu0.b32.cont [6/16] 0.0, 128
    %1856 = vxpose.xlu0.b32.cont [7/16] 0.0, 128
    %1857 = vxpose.xlu0.b32.cont [8/16] 0.0, 128
    %1858 = vxpose.xlu0.b32.cont [9/16] 0.0, 128
    %1859 = vxpose.xlu0.b32.cont [10/16] 0.0, 128
    %1860 = vxpose.xlu0.b32.cont [11/16] 0.0, 128
    %1861 = vxpose.xlu0.b32.cont [12/16] 0.0, 128
    %1862 = vxpose.xlu0.b32.cont [13/16] 0.0, 128
    %1863 = vxpose.xlu0.b32.cont [14/16] 0.0, 128
    %1864 = vxpose.xlu0.b32.cont [15/16] 0.0, 128
    %1865 = vxpose.xlu0.b32.end [16/16] 0.0, 128
    %v1866 = vpop.trf.xlu0
    %v1867 = vpop.trf.xlu0
    %v1868 = vpop.trf.xlu0
    %v1869 = vpop.trf.xlu0
    %v1870 = vpop.trf.xlu0
    %v1871 = vpop.trf.xlu0
    %v1872 = vpop.trf.xlu0
    %v1873 = vpop.trf.xlu0
    %v1874 = vpop.trf.xlu0
    %v1875 = vpop.trf.xlu0
    %v1876 = vpop.trf.xlu0
    %v1877 = vpop.trf.xlu0
    %v1878 = vpop.trf.xlu0
    %v1879 = vpop.trf.xlu0
    %v1880 = vpop.trf.xlu0
    %v1881 = vpop.trf.xlu0
    %1882 = vxpose.xlu0.b32.start [1/16] %v1836, 128
    %1883 = vxpose.xlu0.b32.cont [2/16] %v1837, 128
    %1884 = vxpose.xlu0.b32.cont [3/16] 0.0, 128
    %1885 = vxpose.xlu0.b32.cont [4/16] 0.0, 128
    %1886 = vxpose.xlu0.b32.cont [5/16] 0.0, 128
    %1887 = vxpose.xlu0.b32.cont [6/16] 0.0, 128
    %1888 = vxpose.xlu0.b32.cont [7/16] 0.0, 128
    %1889 = vxpose.xlu0.b32.cont [8/16] 0.0, 128
    %1890 = vxpose.xlu0.b32.cont [9/16] 0.0, 128
    %1891 = vxpose.xlu0.b32.cont [10/16] 0.0, 128
    %1892 = vxpose.xlu0.b32.cont [11/16] 0.0, 128
    %1893 = vxpose.xlu0.b32.cont [12/16] 0.0, 128
    %1894 = vxpose.xlu0.b32.cont [13/16] 0.0, 128
    %1895 = vxpose.xlu0.b32.cont [14/16] 0.0, 128
    %1896 = vxpose.xlu0.b32.cont [15/16] 0.0, 128
    %1897 = vxpose.xlu0.b32.end [16/16] 0.0, 128
    %v1898 = vpop.trf.xlu0
    %v1899 = vpop.trf.xlu0
    %v1900 = vpop.trf.xlu0
    %v1901 = vpop.trf.xlu0
    %v1902 = vpop.trf.xlu0
    %v1903 = vpop.trf.xlu0
    %v1904 = vpop.trf.xlu0
    %v1905 = vpop.trf.xlu0
    %v1906 = vpop.trf.xlu0
    %v1907 = vpop.trf.xlu0
    %v1908 = vpop.trf.xlu0
    %v1909 = vpop.trf.xlu0
    %v1910 = vpop.trf.xlu0
    %v1911 = vpop.trf.xlu0
    %v1912 = vpop.trf.xlu0
    %v1913 = vpop.trf.xlu0
    %1914 = vxpose.xlu0.b32.start [1/16] %v1838, 128
    %1915 = vxpose.xlu0.b32.cont [2/16] %v1839, 128
    %1916 = vxpose.xlu0.b32.cont [3/16] 0.0, 128
    %1917 = vxpose.xlu0.b32.cont [4/16] 0.0, 128
    %1918 = vxpose.xlu0.b32.cont [5/16] 0.0, 128
    %1919 = vxpose.xlu0.b32.cont [6/16] 0.0, 128
    %1920 = vxpose.xlu0.b32.cont [7/16] 0.0, 128
    %1921 = vxpose.xlu0.b32.cont [8/16] 0.0, 128
    %1922 = vxpose.xlu0.b32.cont [9/16] 0.0, 128
    %1923 = vxpose.xlu0.b32.cont [10/16] 0.0, 128
    %1924 = vxpose.xlu0.b32.cont [11/16] 0.0, 128
    %1925 = vxpose.xlu0.b32.cont [12/16] 0.0, 128
    %1926 = vxpose.xlu0.b32.cont [13/16] 0.0, 128
    %1927 = vxpose.xlu0.b32.cont [14/16] 0.0, 128
    %1928 = vxpose.xlu0.b32.cont [15/16] 0.0, 128
    %1929 = vxpose.xlu0.b32.end [16/16] 0.0, 128
    %v1930 = vpop.trf.xlu0
    %v1931 = vpop.trf.xlu0
    %v1932 = vpop.trf.xlu0
    %v1933 = vpop.trf.xlu0
    %v1934 = vpop.trf.xlu0
    %v1935 = vpop.trf.xlu0
    %v1936 = vpop.trf.xlu0
    %v1937 = vpop.trf.xlu0
    %v1938 = vpop.trf.xlu0
    %v1939 = vpop.trf.xlu0
    %v1940 = vpop.trf.xlu0
    %v1941 = vpop.trf.xlu0
    %v1942 = vpop.trf.xlu0
    %v1943 = vpop.trf.xlu0
    %v1944 = vpop.trf.xlu0
    %v1945 = vpop.trf.xlu0
    %1946 = vxpose.xlu0.b32.start [1/16] %v1840, 128
    %1947 = vxpose.xlu0.b32.cont [2/16] %v1841, 128
    %1948 = vxpose.xlu0.b32.cont [3/16] 0.0, 128
    %1949 = vxpose.xlu0.b32.cont [4/16] 0.0, 128
    %1950 = vxpose.xlu0.b32.cont [5/16] 0.0, 128
    %1951 = vxpose.xlu0.b32.cont [6/16] 0.0, 128
    %1952 = vxpose.xlu0.b32.cont [7/16] 0.0, 128
    %1953 = vxpose.xlu0.b32.cont [8/16] 0.0, 128
    %1954 = vxpose.xlu0.b32.cont [9/16] 0.0, 128
    %1955 = vxpose.xlu0.b32.cont [10/16] 0.0, 128
    %1956 = vxpose.xlu0.b32.cont [11/16] 0.0, 128
    %1957 = vxpose.xlu0.b32.cont [12/16] 0.0, 128
    %1958 = vxpose.xlu0.b32.cont [13/16] 0.0, 128
    %1959 = vxpose.xlu0.b32.cont [14/16] 0.0, 128
    %1960 = vxpose.xlu0.b32.cont [15/16] 0.0, 128
    %1961 = vxpose.xlu0.b32.end [16/16] 0.0, 128
    %v1962 = vpop.trf.xlu0
    %v1963 = vpop.trf.xlu0
    %v1964 = vpop.trf.xlu0
    %v1965 = vpop.trf.xlu0
    %v1966 = vpop.trf.xlu0
    %v1967 = vpop.trf.xlu0
    %v1968 = vpop.trf.xlu0
    %v1969 = vpop.trf.xlu0
    %v1970 = vpop.trf.xlu0
    %v1971 = vpop.trf.xlu0
    %v1972 = vpop.trf.xlu0
    %v1973 = vpop.trf.xlu0
    %v1974 = vpop.trf.xlu0
    %v1975 = vpop.trf.xlu0
    %v1976 = vpop.trf.xlu0
    %v1977 = vpop.trf.xlu0
    %1978 = vxpose.xlu0.b32.start [1/16] %v1842, 128
    %1979 = vxpose.xlu0.b32.cont [2/16] %v1843, 128
    %1980 = vxpose.xlu0.b32.cont [3/16] 0.0, 128
    %1981 = vxpose.xlu0.b32.cont [4/16] 0.0, 128
    %1982 = vxpose.xlu0.b32.cont [5/16] 0.0, 128
    %1983 = vxpose.xlu0.b32.cont [6/16] 0.0, 128
    %1984 = vxpose.xlu0.b32.cont [7/16] 0.0, 128
    %1985 = vxpose.xlu0.b32.cont [8/16] 0.0, 128
    %1986 = vxpose.xlu0.b32.cont [9/16] 0.0, 128
    %1987 = vxpose.xlu0.b32.cont [10/16] 0.0, 128
    %1988 = vxpose.xlu0.b32.cont [11/16] 0.0, 128
    %1989 = vxpose.xlu0.b32.cont [12/16] 0.0, 128
    %1990 = vxpose.xlu0.b32.cont [13/16] 0.0, 128
    %1991 = vxpose.xlu0.b32.cont [14/16] 0.0, 128
    %1992 = vxpose.xlu0.b32.cont [15/16] 0.0, 128
    %1993 = vxpose.xlu0.b32.end [16/16] 0.0, 128
    %v1994 = vpop.trf.xlu0
    %v1995 = vpop.trf.xlu0
    %v1996 = vpop.trf.xlu0
    %v1997 = vpop.trf.xlu0
    %v1998 = vpop.trf.xlu0
    %v1999 = vpop.trf.xlu0
    %v2000 = vpop.trf.xlu0
    %v2001 = vpop.trf.xlu0
    %v2002 = vpop.trf.xlu0
    %v2003 = vpop.trf.xlu0
    %v2004 = vpop.trf.xlu0
    %v2005 = vpop.trf.xlu0
    %v2006 = vpop.trf.xlu0
    %v2007 = vpop.trf.xlu0
    %v2008 = vpop.trf.xlu0
    %v2009 = vpop.trf.xlu0
    %2010 = vxpose.xlu0.b32.start [1/16] %v1844, 128
    %2011 = vxpose.xlu0.b32.cont [2/16] %v1845, 128
    %2012 = vxpose.xlu0.b32.cont [3/16] 0.0, 128
    %2013 = vxpose.xlu0.b32.cont [4/16] 0.0, 128
    %2014 = vxpose.xlu0.b32.cont [5/16] 0.0, 128
    %2015 = vxpose.xlu0.b32.cont [6/16] 0.0, 128
    %2016 = vxpose.xlu0.b32.cont [7/16] 0.0, 128
    %2017 = vxpose.xlu0.b32.cont [8/16] 0.0, 128
    %2018 = vxpose.xlu0.b32.cont [9/16] 0.0, 128
    %2019 = vxpose.xlu0.b32.cont [10/16] 0.0, 128
    %2020 = vxpose.xlu0.b32.cont [11/16] 0.0, 128
    %2021 = vxpose.xlu0.b32.cont [12/16] 0.0, 128
    %2022 = vxpose.xlu0.b32.cont [13/16] 0.0, 128
    %2023 = vxpose.xlu0.b32.cont [14/16] 0.0, 128
    %2024 = vxpose.xlu0.b32.cont [15/16] 0.0, 128
    %2025 = vxpose.xlu0.b32.end [16/16] 0.0, 128
    %v2026 = vpop.trf.xlu0
    %v2027 = vpop.trf.xlu0
    %v2028 = vpop.trf.xlu0
    %v2029 = vpop.trf.xlu0
    %v2030 = vpop.trf.xlu0
    %v2031 = vpop.trf.xlu0
    %v2032 = vpop.trf.xlu0
    %v2033 = vpop.trf.xlu0
    %v2034 = vpop.trf.xlu0
    %v2035 = vpop.trf.xlu0
    %v2036 = vpop.trf.xlu0
    %v2037 = vpop.trf.xlu0
    %v2038 = vpop.trf.xlu0
    %v2039 = vpop.trf.xlu0
    %v2040 = vpop.trf.xlu0
    %v2041 = vpop.trf.xlu0
    %2042 = vxpose.xlu0.b32.start [1/16] %v1846, 128
    %2043 = vxpose.xlu0.b32.cont [2/16] %v1847, 128
    %2044 = vxpose.xlu0.b32.cont [3/16] 0.0, 128
    %2045 = vxpose.xlu0.b32.cont [4/16] 0.0, 128
    %2046 = vxpose.xlu0.b32.cont [5/16] 0.0, 128
    %2047 = vxpose.xlu0.b32.cont [6/16] 0.0, 128
    %2048 = vxpose.xlu0.b32.cont [7/16] 0.0, 128
    %2049 = vxpose.xlu0.b32.cont [8/16] 0.0, 128
    %2050 = vxpose.xlu0.b32.cont [9/16] 0.0, 128
    %2051 = vxpose.xlu0.b32.cont [10/16] 0.0, 128
    %2052 = vxpose.xlu0.b32.cont [11/16] 0.0, 128
    %2053 = vxpose.xlu0.b32.cont [12/16] 0.0, 128
    %2054 = vxpose.xlu0.b32.cont [13/16] 0.0, 128
    %2055 = vxpose.xlu0.b32.cont [14/16] 0.0, 128
    %2056 = vxpose.xlu0.b32.cont [15/16] 0.0, 128
    %2057 = vxpose.xlu0.b32.end [16/16] 0.0, 128
    %v2058 = vpop.trf.xlu0
    %v2059 = vpop.trf.xlu0
    %v2060 = vpop.trf.xlu0
    %v2061 = vpop.trf.xlu0
    %v2062 = vpop.trf.xlu0
    %v2063 = vpop.trf.xlu0
    %v2064 = vpop.trf.xlu0
    %v2065 = vpop.trf.xlu0
    %v2066 = vpop.trf.xlu0
    %v2067 = vpop.trf.xlu0
    %v2068 = vpop.trf.xlu0
    %v2069 = vpop.trf.xlu0
    %v2070 = vpop.trf.xlu0
    %v2071 = vpop.trf.xlu0
    %v2072 = vpop.trf.xlu0
    %v2073 = vpop.trf.xlu0
    %2074 = vxpose.xlu0.b32.start [1/16] %v1848, 128
    %2075 = vxpose.xlu0.b32.cont [2/16] %v1849, 128
    %2076 = vxpose.xlu0.b32.cont [3/16] 0.0, 128
    %2077 = vxpose.xlu0.b32.cont [4/16] 0.0, 128
    %2078 = vxpose.xlu0.b32.cont [5/16] 0.0, 128
    %2079 = vxpose.xlu0.b32.cont [6/16] 0.0, 128
    %2080 = vxpose.xlu0.b32.cont [7/16] 0.0, 128
    %2081 = vxpose.xlu0.b32.cont [8/16] 0.0, 128
    %2082 = vxpose.xlu0.b32.cont [9/16] 0.0, 128
    %2083 = vxpose.xlu0.b32.cont [10/16] 0.0, 128
    %2084 = vxpose.xlu0.b32.cont [11/16] 0.0, 128
    %2085 = vxpose.xlu0.b32.cont [12/16] 0.0, 128
    %2086 = vxpose.xlu0.b32.cont [13/16] 0.0, 128
    %2087 = vxpose.xlu0.b32.cont [14/16] 0.0, 128
    %2088 = vxpose.xlu0.b32.cont [15/16] 0.0, 128
    %2089 = vxpose.xlu0.b32.end [16/16] 0.0, 128
    %v2090 = vpop.trf.xlu0
    %v2091 = vpop.trf.xlu0
    %v2092 = vpop.trf.xlu0
    %v2093 = vpop.trf.xlu0
    %v2094 = vpop.trf.xlu0
    %v2095 = vpop.trf.xlu0
    %v2096 = vpop.trf.xlu0
    %v2097 = vpop.trf.xlu0
    %v2098 = vpop.trf.xlu0
    %v2099 = vpop.trf.xlu0
    %v2100 = vpop.trf.xlu0
    %v2101 = vpop.trf.xlu0
    %v2102 = vpop.trf.xlu0
    %v2103 = vpop.trf.xlu0
    %v2104 = vpop.trf.xlu0
    %v2105 = vpop.trf.xlu0
    %v2106 = vld [vmem:[%s6] sm:$0xff]
    %v2107 = vld [vmem:[%s6 + $0x8] sm:$0xff]
    %v2108 = vld [vmem:[%s6 + $0x10] sm:$0xff]
    %v2109 = vld [vmem:[%s6 + $0x18] sm:$0xff]
    %v2118 = vrot.slane %v1866, 1
    %vm2119 = vcmask 1041409
    %v2120 = vsel %vm2119, %v1898, %v2118
    %v2121 = vrot.slane %v1930, 7
    %vm2122 = vcmask 1042434
    %v2123 = vsel %vm2122, %v2121, %v2120
    %v2124 = vrot.slane %v1962, 6
    %vm2125 = vcmask 1043459
    %v2126 = vsel %vm2125, %v2124, %v2123
    %v2127 = vrot.slane %v1994, 5
    %vm2128 = vcmask 1044484
    %v2129 = vsel %vm2128, %v2127, %v2126
    %v2130 = vrot.slane %v2026, 4
    %vm2131 = vcmask 1045509
    %v2132 = vsel %vm2131, %v2130, %v2129
    %v2133 = vrot.slane %v2058, 3
    %vm2134 = vcmask 1046534
    %v2135 = vsel %vm2134, %v2133, %v2132
    %v2136 = vrot.slane %v2090, 2
    %vm2137 = vcmask 1047559
    %v2138 = vsel %vm2137, %v2136, %v2135
    %v2139 = vsel %vm103, %v2138, 0
    %2141 = vmatprep.subr.mxu0 0.0
    %2142 = vmatpush1.msra.mxu0 0.0
    %2143 = vmatprep.subr.mxu0 0.0
    %2144 = vmatpush1.msra.mxu0 0.0
    %2145 = vmatprep.subr.mxu0 0.0
    %2146 = vmatpush1.msra.mxu0 0.0
    %2147 = vmatprep.subr.mxu0 0.0
    %2148 = vmatpush1.msra.mxu0 0.0
    %2149 = vmatprep.subr.mxu0 0.0
    %2150 = vmatpush1.msra.mxu0 0.0
    %2151 = vmatprep.subr.mxu0 0.0
    %2152 = vmatpush1.msra.mxu0 0.0
    %2153 = vmatprep.subr.mxu0 0.0
    %2154 = vmatpush1.msra.mxu0 0.0
    %2155 = vmatprep.subr.mxu0 0.0
    %2156 = vmatpush1.msra.mxu0 0.0
    %2157 = vmatprep.subr.mxu0 0.0
    %2158 = vmatpush1.msra.mxu0 0.0
    %2159 = vmatprep.subr.mxu0 0.0
    %2160 = vmatpush1.msra.mxu0 0.0
    %2161 = vmatprep.subr.mxu0 0.0
    %2162 = vmatpush1.msra.mxu0 0.0
    %2163 = vmatprep.subr.mxu0 0.0
    %2164 = vmatpush1.msra.mxu0 0.0
    %2165 = vmatprep.subr.mxu0 0.0
    %2166 = vmatpush1.msra.mxu0 0.0
    %2167 = vmatprep.subr.mxu0 0.0
    %2168 = vmatpush1.msra.mxu0 0.0
    %2169 = vmatprep.subr.mxu0 0.0
    %2170 = vmatpush1.msra.mxu0 %v2109
    %2171 = vmatprep.subr.mxu0 0.0
    %2172 = vmatpush1.msra.mxu0 %v2108
    %2173 = vmatprep.subr.mxu0 0.0
    %2174 = vmatpush2.msra.mxu0 0.0
    %2175 = vmatprep.subr.mxu0 0.0
    %2176 = vmatpush2.msra.mxu0 0.0
    %2177 = vmatprep.subr.mxu0 0.0
    %2178 = vmatpush2.msra.mxu0 0.0
    %2179 = vmatprep.subr.mxu0 0.0
    %2180 = vmatpush2.msra.mxu0 0.0
    %2181 = vmatprep.subr.mxu0 0.0
    %2182 = vmatpush2.msra.mxu0 0.0
    %2183 = vmatprep.subr.mxu0 0.0
    %2184 = vmatpush2.msra.mxu0 0.0
    %2185 = vmatprep.subr.mxu0 0.0
    %2186 = vmatpush2.msra.mxu0 0.0
    %2187 = vmatprep.subr.mxu0 0.0
    %2188 = vmatpush2.msra.mxu0 0.0
    %2189 = vmatprep.subr.mxu0 0.0
    %2190 = vmatpush2.msra.mxu0 0.0
    %2191 = vmatprep.subr.mxu0 0.0
    %2192 = vmatpush2.msra.mxu0 0.0
    %2193 = vmatprep.subr.mxu0 0.0
    %2194 = vmatpush2.msra.mxu0 0.0
    %2195 = vmatprep.subr.mxu0 0.0
    %2196 = vmatpush2.msra.mxu0 0.0
    %2197 = vmatprep.subr.mxu0 0.0
    %2198 = vmatpush2.msra.mxu0 0.0
    %2199 = vmatprep.subr.mxu0 0.0
    %2200 = vmatpush2.msra.mxu0 0.0
    %2201 = vmatprep.subr.mxu0 0.0
    %2202 = vmatpush2.msra.mxu0 0.0
    %2203 = vmatprep.subr.mxu0 0.0
    %2204 = vmatpush2.msra.mxu0 0.0
    %2205 = vmatprep.mubr.f32.mxu0 0.0
    %2206 = vmatmul.mubr.f32.gmra.mxu0 %v2139
    %v2207 = vpop.f32.mrf.mxu0
    %v2208 = vadd.f32 0.0, %v2207
    %v2209 = vpop.f32.mrf.mxu0
    %2210 = vdwg.mxu0
    %v2211 = vrot.slane %v1898, 7
    %v2212 = vsel %vm2119, %v2211, %v1866
    %v2213 = vrot.slane %v1930, 6
    %v2214 = vsel %vm2122, %v2213, %v2212
    %v2215 = vrot.slane %v1962, 5
    %v2216 = vsel %vm2125, %v2215, %v2214
    %v2217 = vrot.slane %v1994, 4
    %v2218 = vsel %vm2128, %v2217, %v2216
    %v2219 = vrot.slane %v2026, 3
    %v2220 = vsel %vm2131, %v2219, %v2218
    %v2221 = vrot.slane %v2058, 2
    %v2222 = vsel %vm2134, %v2221, %v2220
    %v2223 = vrot.slane %v2090, 1
    %v2224 = vsel %vm2137, %v2223, %v2222
    %v2225 = vsel %vm103, %v2224, 0
    %2227 = vmatprep.subr.mxu0 0.0
    %2228 = vmatpush1.msra.mxu0 0.0
    %2229 = vmatprep.subr.mxu0 0.0
    %2230 = vmatpush1.msra.mxu0 0.0
    %2231 = vmatprep.subr.mxu0 0.0
    %2232 = vmatpush1.msra.mxu0 0.0
    %2233 = vmatprep.subr.mxu0 0.0
    %2234 = vmatpush1.msra.mxu0 0.0
    %2235 = vmatprep.subr.mxu0 0.0
    %2236 = vmatpush1.msra.mxu0 0.0
    %2237 = vmatprep.subr.mxu0 0.0
    %2238 = vmatpush1.msra.mxu0 0.0
    %2239 = vmatprep.subr.mxu0 0.0
    %2240 = vmatpush1.msra.mxu0 0.0
    %2241 = vmatprep.subr.mxu0 0.0
    %2242 = vmatpush1.msra.mxu0 0.0
    %2243 = vmatprep.subr.mxu0 0.0
    %2244 = vmatpush1.msra.mxu0 0.0
    %2245 = vmatprep.subr.mxu0 0.0
    %2246 = vmatpush1.msra.mxu0 0.0
    %2247 = vmatprep.subr.mxu0 0.0
    %2248 = vmatpush1.msra.mxu0 0.0
    %2249 = vmatprep.subr.mxu0 0.0
    %2250 = vmatpush1.msra.mxu0 0.0
    %2251 = vmatprep.subr.mxu0 0.0
    %2252 = vmatpush1.msra.mxu0 0.0
    %2253 = vmatprep.subr.mxu0 0.0
    %2254 = vmatpush1.msra.mxu0 0.0
    %2255 = vmatprep.subr.mxu0 0.0
    %2256 = vmatpush1.msra.mxu0 %v2107
    %2257 = vmatprep.subr.mxu0 0.0
    %2258 = vmatpush1.msra.mxu0 %v2106
    %2259 = vmatprep.subr.mxu0 0.0
    %2260 = vmatpush2.msra.mxu0 0.0
    %2261 = vmatprep.subr.mxu0 0.0
    %2262 = vmatpush2.msra.mxu0 0.0
    %2263 = vmatprep.subr.mxu0 0.0
    %2264 = vmatpush2.msra.mxu0 0.0
    %2265 = vmatprep.subr.mxu0 0.0
    %2266 = vmatpush2.msra.mxu0 0.0
    %2267 = vmatprep.subr.mxu0 0.0
    %2268 = vmatpush2.msra.mxu0 0.0
    %2269 = vmatprep.subr.mxu0 0.0
    %2270 = vmatpush2.msra.mxu0 0.0
    %2271 = vmatprep.subr.mxu0 0.0
    %2272 = vmatpush2.msra.mxu0 0.0
    %2273 = vmatprep.subr.mxu0 0.0
    %2274 = vmatpush2.msra.mxu0 0.0
    %2275 = vmatprep.subr.mxu0 0.0
    %2276 = vmatpush2.msra.mxu0 0.0
    %2277 = vmatprep.subr.mxu0 0.0
    %2278 = vmatpush2.msra.mxu0 0.0
    %2279 = vmatprep.subr.mxu0 0.0
    %2280 = vmatpush2.msra.mxu0 0.0
    %2281 = vmatprep.subr.mxu0 0.0
    %2282 = vmatpush2.msra.mxu0 0.0
    %2283 = vmatprep.subr.mxu0 0.0
    %2284 = vmatpush2.msra.mxu0 0.0
    %2285 = vmatprep.subr.mxu0 0.0
    %2286 = vmatpush2.msra.mxu0 0.0
    %2287 = vmatprep.subr.mxu0 0.0
    %2288 = vmatpush2.msra.mxu0 0.0
    %2289 = vmatprep.subr.mxu0 0.0
    %2290 = vmatpush2.msra.mxu0 0.0
    %2291 = vmatprep.mubr.f32.mxu0 0.0
    %2292 = vmatmul.mubr.f32.gmra.mxu0 %v2225
    %v2293 = vpop.f32.mrf.mxu0
    %v2294 = vadd.f32 %v2208, %v2293
    %v2295 = vpop.f32.mrf.mxu0
    %2296 = vdwg.mxu0
    %v2297 = vld [vmem:[%s6 + $0x20] sm:$0xff]
    %v2298 = vld [vmem:[%s6 + $0x28] sm:$0xff]
    %v2299 = vrot.slane %v1866, 2
    %v2300 = vrot.slane %v1898, 1
    %v2301 = vsel %vm2119, %v2300, %v2299
    %v2302 = vsel %vm2122, %v1930, %v2301
    %v2303 = vrot.slane %v1962, 7
    %v2304 = vsel %vm2125, %v2303, %v2302
    %v2305 = vrot.slane %v1994, 6
    %v2306 = vsel %vm2128, %v2305, %v2304
    %v2307 = vrot.slane %v2026, 5
    %v2308 = vsel %vm2131, %v2307, %v2306
    %v2309 = vrot.slane %v2058, 4
    %v2310 = vsel %vm2134, %v2309, %v2308
    %v2311 = vrot.slane %v2090, 3
    %v2312 = vsel %vm2137, %v2311, %v2310
    %v2313 = vsel %vm103, %v2312, 0
    %2315 = vmatprep.subr.mxu0 0.0
    %2316 = vmatpush1.msra.mxu0 0.0
    %2317 = vmatprep.subr.mxu0 0.0
    %2318 = vmatpush1.msra.mxu0 0.0
    %2319 = vmatprep.subr.mxu0 0.0
    %2320 = vmatpush1.msra.mxu0 0.0
    %2321 = vmatprep.subr.mxu0 0.0
    %2322 = vmatpush1.msra.mxu0 0.0
    %2323 = vmatprep.subr.mxu0 0.0
    %2324 = vmatpush1.msra.mxu0 0.0
    %2325 = vmatprep.subr.mxu0 0.0
    %2326 = vmatpush1.msra.mxu0 0.0
    %2327 = vmatprep.subr.mxu0 0.0
    %2328 = vmatpush1.msra.mxu0 0.0
    %2329 = vmatprep.subr.mxu0 0.0
    %2330 = vmatpush1.msra.mxu0 0.0
    %2331 = vmatprep.subr.mxu0 0.0
    %2332 = vmatpush1.msra.mxu0 0.0
    %2333 = vmatprep.subr.mxu0 0.0
    %2334 = vmatpush1.msra.mxu0 0.0
    %2335 = vmatprep.subr.mxu0 0.0
    %2336 = vmatpush1.msra.mxu0 0.0
    %2337 = vmatprep.subr.mxu0 0.0
    %2338 = vmatpush1.msra.mxu0 0.0
    %2339 = vmatprep.subr.mxu0 0.0
    %2340 = vmatpush1.msra.mxu0 0.0
    %2341 = vmatprep.subr.mxu0 0.0
    %2342 = vmatpush1.msra.mxu0 0.0
    %2343 = vmatprep.subr.mxu0 0.0
    %2344 = vmatpush1.msra.mxu0 %v2298
    %2345 = vmatprep.subr.mxu0 0.0
    %2346 = vmatpush1.msra.mxu0 %v2297
    %2347 = vmatprep.subr.mxu0 0.0
    %2348 = vmatpush2.msra.mxu0 0.0
    %2349 = vmatprep.subr.mxu0 0.0
    %2350 = vmatpush2.msra.mxu0 0.0
    %2351 = vmatprep.subr.mxu0 0.0
    %2352 = vmatpush2.msra.mxu0 0.0
    %2353 = vmatprep.subr.mxu0 0.0
    %2354 = vmatpush2.msra.mxu0 0.0
    %2355 = vmatprep.subr.mxu0 0.0
    %2356 = vmatpush2.msra.mxu0 0.0
    %2357 = vmatprep.subr.mxu0 0.0
    %2358 = vmatpush2.msra.mxu0 0.0
    %2359 = vmatprep.subr.mxu0 0.0
    %2360 = vmatpush2.msra.mxu0 0.0
    %2361 = vmatprep.subr.mxu0 0.0
    %2362 = vmatpush2.msra.mxu0 0.0
    %2363 = vmatprep.subr.mxu0 0.0
    %2364 = vmatpush2.msra.mxu0 0.0
    %2365 = vmatprep.subr.mxu0 0.0
    %2366 = vmatpush2.msra.mxu0 0.0
    %2367 = vmatprep.subr.mxu0 0.0
    %2368 = vmatpush2.msra.mxu0 0.0
    %2369 = vmatprep.subr.mxu0 0.0
    %2370 = vmatpush2.msra.mxu0 0.0
    %2371 = vmatprep.subr.mxu0 0.0
    %2372 = vmatpush2.msra.mxu0 0.0
    %2373 = vmatprep.subr.mxu0 0.0
    %2374 = vmatpush2.msra.mxu0 0.0
    %2375 = vmatprep.subr.mxu0 0.0
    %2376 = vmatpush2.msra.mxu0 0.0
    %2377 = vmatprep.subr.mxu0 0.0
    %2378 = vmatpush2.msra.mxu0 0.0
    %2379 = vmatprep.mubr.f32.mxu0 0.0
    %2380 = vmatmul.mubr.f32.gmra.mxu0 %v2313
    %v2381 = vpop.f32.mrf.mxu0
    %v2382 = vadd.f32 0.0, %v2381
    %v2383 = vpop.f32.mrf.mxu0
    %2384 = vdwg.mxu0
    %v2385 = vadd.f32 %v2294, %v2382
    %v2386 = vld [vmem:[%s6 + $0x30] sm:$0xff]
    %v2387 = vld [vmem:[%s6 + $0x38] sm:$0xff]
    %v2388 = vrot.slane %v1866, 3
    %v2389 = vrot.slane %v1898, 2
    %v2390 = vsel %vm2119, %v2389, %v2388
    %v2391 = vrot.slane %v1930, 1
    %v2392 = vsel %vm2122, %v2391, %v2390
    %v2393 = vsel %vm2125, %v1962, %v2392
    %v2394 = vrot.slane %v1994, 7
    %v2395 = vsel %vm2128, %v2394, %v2393
    %v2396 = vrot.slane %v2026, 6
    %v2397 = vsel %vm2131, %v2396, %v2395
    %v2398 = vrot.slane %v2058, 5
    %v2399 = vsel %vm2134, %v2398, %v2397
    %v2400 = vrot.slane %v2090, 4
    %v2401 = vsel %vm2137, %v2400, %v2399
    %v2402 = vsel %vm103, %v2401, 0
    %2404 = vmatprep.subr.mxu0 0.0
    %2405 = vmatpush1.msra.mxu0 0.0
    %2406 = vmatprep.subr.mxu0 0.0
    %2407 = vmatpush1.msra.mxu0 0.0
    %2408 = vmatprep.subr.mxu0 0.0
    %2409 = vmatpush1.msra.mxu0 0.0
    %2410 = vmatprep.subr.mxu0 0.0
    %2411 = vmatpush1.msra.mxu0 0.0
    %2412 = vmatprep.subr.mxu0 0.0
    %2413 = vmatpush1.msra.mxu0 0.0
    %2414 = vmatprep.subr.mxu0 0.0
    %2415 = vmatpush1.msra.mxu0 0.0
    %2416 = vmatprep.subr.mxu0 0.0
    %2417 = vmatpush1.msra.mxu0 0.0
    %2418 = vmatprep.subr.mxu0 0.0
    %2419 = vmatpush1.msra.mxu0 0.0
    %2420 = vmatprep.subr.mxu0 0.0
    %2421 = vmatpush1.msra.mxu0 0.0
    %2422 = vmatprep.subr.mxu0 0.0
    %2423 = vmatpush1.msra.mxu0 0.0
    %2424 = vmatprep.subr.mxu0 0.0
    %2425 = vmatpush1.msra.mxu0 0.0
    %2426 = vmatprep.subr.mxu0 0.0
    %2427 = vmatpush1.msra.mxu0 0.0
    %2428 = vmatprep.subr.mxu0 0.0
    %2429 = vmatpush1.msra.mxu0 0.0
    %2430 = vmatprep.subr.mxu0 0.0
    %2431 = vmatpush1.msra.mxu0 0.0
    %2432 = vmatprep.subr.mxu0 0.0
    %2433 = vmatpush1.msra.mxu0 %v2387
    %2434 = vmatprep.subr.mxu0 0.0
    %2435 = vmatpush1.msra.mxu0 %v2386
    %2436 = vmatprep.subr.mxu0 0.0
    %2437 = vmatpush2.msra.mxu0 0.0
    %2438 = vmatprep.subr.mxu0 0.0
    %2439 = vmatpush2.msra.mxu0 0.0
    %2440 = vmatprep.subr.mxu0 0.0
    %2441 = vmatpush2.msra.mxu0 0.0
    %2442 = vmatprep.subr.mxu0 0.0
    %2443 = vmatpush2.msra.mxu0 0.0
    %2444 = vmatprep.subr.mxu0 0.0
    %2445 = vmatpush2.msra.mxu0 0.0
    %2446 = vmatprep.subr.mxu0 0.0
    %2447 = vmatpush2.msra.mxu0 0.0
    %2448 = vmatprep.subr.mxu0 0.0
    %2449 = vmatpush2.msra.mxu0 0.0
    %2450 = vmatprep.subr.mxu0 0.0
    %2451 = vmatpush2.msra.mxu0 0.0
    %2452 = vmatprep.subr.mxu0 0.0
    %2453 = vmatpush2.msra.mxu0 0.0
    %2454 = vmatprep.subr.mxu0 0.0
    %2455 = vmatpush2.msra.mxu0 0.0
    %2456 = vmatprep.subr.mxu0 0.0
    %2457 = vmatpush2.msra.mxu0 0.0
    %2458 = vmatprep.subr.mxu0 0.0
    %2459 = vmatpush2.msra.mxu0 0.0
    %2460 = vmatprep.subr.mxu0 0.0
    %2461 = vmatpush2.msra.mxu0 0.0
    %2462 = vmatprep.subr.mxu0 0.0
    %2463 = vmatpush2.msra.mxu0 0.0
    %2464 = vmatprep.subr.mxu0 0.0
    %2465 = vmatpush2.msra.mxu0 0.0
    %2466 = vmatprep.subr.mxu0 0.0
    %2467 = vmatpush2.msra.mxu0 0.0
    %2468 = vmatprep.mubr.f32.mxu0 0.0
    %2469 = vmatmul.mubr.f32.gmra.mxu0 %v2402
    %v2470 = vpop.f32.mrf.mxu0
    %v2471 = vadd.f32 0.0, %v2470
    %v2472 = vpop.f32.mrf.mxu0
    %2473 = vdwg.mxu0
    %v2474 = vadd.f32 %v2385, %v2471
    %v2475 = vld [vmem:[%s6 + $0x40] sm:$0xff]
    %v2476 = vld [vmem:[%s6 + $0x48] sm:$0xff]
    %v2477 = vrot.slane %v1866, 4
    %v2478 = vrot.slane %v1898, 3
    %v2479 = vsel %vm2119, %v2478, %v2477
    %v2480 = vrot.slane %v1930, 2
    %v2481 = vsel %vm2122, %v2480, %v2479
    %v2482 = vrot.slane %v1962, 1
    %v2483 = vsel %vm2125, %v2482, %v2481
    %v2484 = vsel %vm2128, %v1994, %v2483
    %v2485 = vrot.slane %v2026, 7
    %v2486 = vsel %vm2131, %v2485, %v2484
    %v2487 = vrot.slane %v2058, 6
    %v2488 = vsel %vm2134, %v2487, %v2486
    %v2489 = vrot.slane %v2090, 5
    %v2490 = vsel %vm2137, %v2489, %v2488
    %v2491 = vsel %vm103, %v2490, 0
    %2493 = vmatprep.subr.mxu0 0.0
    %2494 = vmatpush1.msra.mxu0 0.0
    %2495 = vmatprep.subr.mxu0 0.0
    %2496 = vmatpush1.msra.mxu0 0.0
    %2497 = vmatprep.subr.mxu0 0.0
    %2498 = vmatpush1.msra.mxu0 0.0
    %2499 = vmatprep.subr.mxu0 0.0
    %2500 = vmatpush1.msra.mxu0 0.0
    %2501 = vmatprep.subr.mxu0 0.0
    %2502 = vmatpush1.msra.mxu0 0.0
    %2503 = vmatprep.subr.mxu0 0.0
    %2504 = vmatpush1.msra.mxu0 0.0
    %2505 = vmatprep.subr.mxu0 0.0
    %2506 = vmatpush1.msra.mxu0 0.0
    %2507 = vmatprep.subr.mxu0 0.0
    %2508 = vmatpush1.msra.mxu0 0.0
    %2509 = vmatprep.subr.mxu0 0.0
    %2510 = vmatpush1.msra.mxu0 0.0
    %2511 = vmatprep.subr.mxu0 0.0
    %2512 = vmatpush1.msra.mxu0 0.0
    %2513 = vmatprep.subr.mxu0 0.0
    %2514 = vmatpush1.msra.mxu0 0.0
    %2515 = vmatprep.subr.mxu0 0.0
    %2516 = vmatpush1.msra.mxu0 0.0
    %2517 = vmatprep.subr.mxu0 0.0
    %2518 = vmatpush1.msra.mxu0 0.0
    %2519 = vmatprep.subr.mxu0 0.0
    %2520 = vmatpush1.msra.mxu0 0.0
    %2521 = vmatprep.subr.mxu0 0.0
    %2522 = vmatpush1.msra.mxu0 %v2476
    %2523 = vmatprep.subr.mxu0 0.0
    %2524 = vmatpush1.msra.mxu0 %v2475
    %2525 = vmatprep.subr.mxu0 0.0
    %2526 = vmatpush2.msra.mxu0 0.0
    %2527 = vmatprep.subr.mxu0 0.0
    %2528 = vmatpush2.msra.mxu0 0.0
    %2529 = vmatprep.subr.mxu0 0.0
    %2530 = vmatpush2.msra.mxu0 0.0
    %2531 = vmatprep.subr.mxu0 0.0
    %2532 = vmatpush2.msra.mxu0 0.0
    %2533 = vmatprep.subr.mxu0 0.0
    %2534 = vmatpush2.msra.mxu0 0.0
    %2535 = vmatprep.subr.mxu0 0.0
    %2536 = vmatpush2.msra.mxu0 0.0
    %2537 = vmatprep.subr.mxu0 0.0
    %2538 = vmatpush2.msra.mxu0 0.0
    %2539 = vmatprep.subr.mxu0 0.0
    %2540 = vmatpush2.msra.mxu0 0.0
    %2541 = vmatprep.subr.mxu0 0.0
    %2542 = vmatpush2.msra.mxu0 0.0
    %2543 = vmatprep.subr.mxu0 0.0
    %2544 = vmatpush2.msra.mxu0 0.0
    %2545 = vmatprep.subr.mxu0 0.0
    %2546 = vmatpush2.msra.mxu0 0.0
    %2547 = vmatprep.subr.mxu0 0.0
    %2548 = vmatpush2.msra.mxu0 0.0
    %2549 = vmatprep.subr.mxu0 0.0
    %2550 = vmatpush2.msra.mxu0 0.0
    %2551 = vmatprep.subr.mxu0 0.0
    %2552 = vmatpush2.msra.mxu0 0.0
    %2553 = vmatprep.subr.mxu0 0.0
    %2554 = vmatpush2.msra.mxu0 0.0
    %2555 = vmatprep.subr.mxu0 0.0
    %2556 = vmatpush2.msra.mxu0 0.0
    %2557 = vmatprep.mubr.f32.mxu0 0.0
    %2558 = vmatmul.mubr.f32.gmra.mxu0 %v2491
    %v2559 = vpop.f32.mrf.mxu0
    %v2560 = vadd.f32 0.0, %v2559
    %v2561 = vpop.f32.mrf.mxu0
    %2562 = vdwg.mxu0
    %v2563 = vadd.f32 %v2474, %v2560
    %v2564 = vld [vmem:[%s6 + $0x50] sm:$0xff]
    %v2565 = vld [vmem:[%s6 + $0x58] sm:$0xff]
    %v2566 = vrot.slane %v1866, 5
    %v2567 = vrot.slane %v1898, 4
    %v2568 = vsel %vm2119, %v2567, %v2566
    %v2569 = vrot.slane %v1930, 3
    %v2570 = vsel %vm2122, %v2569, %v2568
    %v2571 = vrot.slane %v1962, 2
    %v2572 = vsel %vm2125, %v2571, %v2570
    %v2573 = vrot.slane %v1994, 1
    %v2574 = vsel %vm2128, %v2573, %v2572
    %v2575 = vsel %vm2131, %v2026, %v2574
    %v2576 = vrot.slane %v2058, 7
    %v2577 = vsel %vm2134, %v2576, %v2575
    %v2578 = vrot.slane %v2090, 6
    %v2579 = vsel %vm2137, %v2578, %v2577
    %v2580 = vsel %vm103, %v2579, 0
    %2582 = vmatprep.subr.mxu0 0.0
    %2583 = vmatpush1.msra.mxu0 0.0
    %2584 = vmatprep.subr.mxu0 0.0
    %2585 = vmatpush1.msra.mxu0 0.0
    %2586 = vmatprep.subr.mxu0 0.0
    %2587 = vmatpush1.msra.mxu0 0.0
    %2588 = vmatprep.subr.mxu0 0.0
    %2589 = vmatpush1.msra.mxu0 0.0
    %2590 = vmatprep.subr.mxu0 0.0
    %2591 = vmatpush1.msra.mxu0 0.0
    %2592 = vmatprep.subr.mxu0 0.0
    %2593 = vmatpush1.msra.mxu0 0.0
    %2594 = vmatprep.subr.mxu0 0.0
    %2595 = vmatpush1.msra.mxu0 0.0
    %2596 = vmatprep.subr.mxu0 0.0
    %2597 = vmatpush1.msra.mxu0 0.0
    %2598 = vmatprep.subr.mxu0 0.0
    %2599 = vmatpush1.msra.mxu0 0.0
    %2600 = vmatprep.subr.mxu0 0.0
    %2601 = vmatpush1.msra.mxu0 0.0
    %2602 = vmatprep.subr.mxu0 0.0
    %2603 = vmatpush1.msra.mxu0 0.0
    %2604 = vmatprep.subr.mxu0 0.0
    %2605 = vmatpush1.msra.mxu0 0.0
    %2606 = vmatprep.subr.mxu0 0.0
    %2607 = vmatpush1.msra.mxu0 0.0
    %2608 = vmatprep.subr.mxu0 0.0
    %2609 = vmatpush1.msra.mxu0 0.0
    %2610 = vmatprep.subr.mxu0 0.0
    %2611 = vmatpush1.msra.mxu0 %v2565
    %2612 = vmatprep.subr.mxu0 0.0
    %2613 = vmatpush1.msra.mxu0 %v2564
    %2614 = vmatprep.subr.mxu0 0.0
    %2615 = vmatpush2.msra.mxu0 0.0
    %2616 = vmatprep.subr.mxu0 0.0
    %2617 = vmatpush2.msra.mxu0 0.0
    %2618 = vmatprep.subr.mxu0 0.0
    %2619 = vmatpush2.msra.mxu0 0.0
    %2620 = vmatprep.subr.mxu0 0.0
    %2621 = vmatpush2.msra.mxu0 0.0
    %2622 = vmatprep.subr.mxu0 0.0
    %2623 = vmatpush2.msra.mxu0 0.0
    %2624 = vmatprep.subr.mxu0 0.0
    %2625 = vmatpush2.msra.mxu0 0.0
    %2626 = vmatprep.subr.mxu0 0.0
    %2627 = vmatpush2.msra.mxu0 0.0
    %2628 = vmatprep.subr.mxu0 0.0
    %2629 = vmatpush2.msra.mxu0 0.0
    %2630 = vmatprep.subr.mxu0 0.0
    %2631 = vmatpush2.msra.mxu0 0.0
    %2632 = vmatprep.subr.mxu0 0.0
    %2633 = vmatpush2.msra.mxu0 0.0
    %2634 = vmatprep.subr.mxu0 0.0
    %2635 = vmatpush2.msra.mxu0 0.0
    %2636 = vmatprep.subr.mxu0 0.0
    %2637 = vmatpush2.msra.mxu0 0.0
    %2638 = vmatprep.subr.mxu0 0.0
    %2639 = vmatpush2.msra.mxu0 0.0
    %2640 = vmatprep.subr.mxu0 0.0
    %2641 = vmatpush2.msra.mxu0 0.0
    %2642 = vmatprep.subr.mxu0 0.0
    %2643 = vmatpush2.msra.mxu0 0.0
    %2644 = vmatprep.subr.mxu0 0.0
    %2645 = vmatpush2.msra.mxu0 0.0
    %2646 = vmatprep.mubr.f32.mxu0 0.0
    %2647 = vmatmul.mubr.f32.gmra.mxu0 %v2580
    %v2648 = vpop.f32.mrf.mxu0
    %v2649 = vadd.f32 0.0, %v2648
    %v2650 = vpop.f32.mrf.mxu0
    %2651 = vdwg.mxu0
    %v2652 = vadd.f32 %v2563, %v2649
    %v2653 = vld [vmem:[%s6 + $0x60] sm:$0xff]
    %v2654 = vld [vmem:[%s6 + $0x68] sm:$0xff]
    %v2655 = vrot.slane %v1866, 6
    %v2656 = vrot.slane %v1898, 5
    %v2657 = vsel %vm2119, %v2656, %v2655
    %v2658 = vrot.slane %v1930, 4
    %v2659 = vsel %vm2122, %v2658, %v2657
    %v2660 = vrot.slane %v1962, 3
    %v2661 = vsel %vm2125, %v2660, %v2659
    %v2662 = vrot.slane %v1994, 2
    %v2663 = vsel %vm2128, %v2662, %v2661
    %v2664 = vrot.slane %v2026, 1
    %v2665 = vsel %vm2131, %v2664, %v2663
    %v2666 = vsel %vm2134, %v2058, %v2665
    %v2667 = vrot.slane %v2090, 7
    %v2668 = vsel %vm2137, %v2667, %v2666
    %v2669 = vsel %vm103, %v2668, 0
    %2671 = vmatprep.subr.mxu0 0.0
    %2672 = vmatpush1.msra.mxu0 0.0
    %2673 = vmatprep.subr.mxu0 0.0
    %2674 = vmatpush1.msra.mxu0 0.0
    %2675 = vmatprep.subr.mxu0 0.0
    %2676 = vmatpush1.msra.mxu0 0.0
    %2677 = vmatprep.subr.mxu0 0.0
    %2678 = vmatpush1.msra.mxu0 0.0
    %2679 = vmatprep.subr.mxu0 0.0
    %2680 = vmatpush1.msra.mxu0 0.0
    %2681 = vmatprep.subr.mxu0 0.0
    %2682 = vmatpush1.msra.mxu0 0.0
    %2683 = vmatprep.subr.mxu0 0.0
    %2684 = vmatpush1.msra.mxu0 0.0
    %2685 = vmatprep.subr.mxu0 0.0
    %2686 = vmatpush1.msra.mxu0 0.0
    %2687 = vmatprep.subr.mxu0 0.0
    %2688 = vmatpush1.msra.mxu0 0.0
    %2689 = vmatprep.subr.mxu0 0.0
    %2690 = vmatpush1.msra.mxu0 0.0
    %2691 = vmatprep.subr.mxu0 0.0
    %2692 = vmatpush1.msra.mxu0 0.0
    %2693 = vmatprep.subr.mxu0 0.0
    %2694 = vmatpush1.msra.mxu0 0.0
    %2695 = vmatprep.subr.mxu0 0.0
    %2696 = vmatpush1.msra.mxu0 0.0
    %2697 = vmatprep.subr.mxu0 0.0
    %2698 = vmatpush1.msra.mxu0 0.0
    %2699 = vmatprep.subr.mxu0 0.0
    %2700 = vmatpush1.msra.mxu0 %v2654
    %2701 = vmatprep.subr.mxu0 0.0
    %2702 = vmatpush1.msra.mxu0 %v2653
    %2703 = vmatprep.subr.mxu0 0.0
    %2704 = vmatpush2.msra.mxu0 0.0
    %2705 = vmatprep.subr.mxu0 0.0
    %2706 = vmatpush2.msra.mxu0 0.0
    %2707 = vmatprep.subr.mxu0 0.0
    %2708 = vmatpush2.msra.mxu0 0.0
    %2709 = vmatprep.subr.mxu0 0.0
    %2710 = vmatpush2.msra.mxu0 0.0
    %2711 = vmatprep.subr.mxu0 0.0
    %2712 = vmatpush2.msra.mxu0 0.0
    %2713 = vmatprep.subr.mxu0 0.0
    %2714 = vmatpush2.msra.mxu0 0.0
    %2715 = vmatprep.subr.mxu0 0.0
    %2716 = vmatpush2.msra.mxu0 0.0
    %2717 = vmatprep.subr.mxu0 0.0
    %2718 = vmatpush2.msra.mxu0 0.0
    %2719 = vmatprep.subr.mxu0 0.0
    %2720 = vmatpush2.msra.mxu0 0.0
    %2721 = vmatprep.subr.mxu0 0.0
    %2722 = vmatpush2.msra.mxu0 0.0
    %2723 = vmatprep.subr.mxu0 0.0
    %2724 = vmatpush2.msra.mxu0 0.0
    %2725 = vmatprep.subr.mxu0 0.0
    %2726 = vmatpush2.msra.mxu0 0.0
    %2727 = vmatprep.subr.mxu0 0.0
    %2728 = vmatpush2.msra.mxu0 0.0
    %2729 = vmatprep.subr.mxu0 0.0
    %2730 = vmatpush2.msra.mxu0 0.0
    %2731 = vmatprep.subr.mxu0 0.0
    %2732 = vmatpush2.msra.mxu0 0.0
    %2733 = vmatprep.subr.mxu0 0.0
    %2734 = vmatpush2.msra.mxu0 0.0
    %2735 = vmatprep.mubr.f32.mxu0 0.0
    %2736 = vmatmul.mubr.f32.gmra.mxu0 %v2669
    %v2737 = vpop.f32.mrf.mxu0
    %v2738 = vadd.f32 0.0, %v2737
    %v2739 = vpop.f32.mrf.mxu0
    %2740 = vdwg.mxu0
    %v2741 = vadd.f32 %v2652, %v2738
    %v2742 = vld [vmem:[%s6 + $0x70] sm:$0xff]
    %v2743 = vld [vmem:[%s6 + $0x78] sm:$0xff]
    %v2744 = vrot.slane %v1866, 7
    %v2745 = vrot.slane %v1898, 6
    %v2746 = vsel %vm2119, %v2745, %v2744
    %v2747 = vrot.slane %v1930, 5
    %v2748 = vsel %vm2122, %v2747, %v2746
    %v2749 = vrot.slane %v1962, 4
    %v2750 = vsel %vm2125, %v2749, %v2748
    %v2751 = vrot.slane %v1994, 3
    %v2752 = vsel %vm2128, %v2751, %v2750
    %v2753 = vrot.slane %v2026, 2
    %v2754 = vsel %vm2131, %v2753, %v2752
    %v2755 = vrot.slane %v2058, 1
    %v2756 = vsel %vm2134, %v2755, %v2754
    %v2757 = vsel %vm2137, %v2090, %v2756
    %v2758 = vsel %vm103, %v2757, 0
    %2760 = vmatprep.subr.mxu0 0.0
    %2761 = vmatpush1.msra.mxu0 0.0
    %2762 = vmatprep.subr.mxu0 0.0
    %2763 = vmatpush1.msra.mxu0 0.0
    %2764 = vmatprep.subr.mxu0 0.0
    %2765 = vmatpush1.msra.mxu0 0.0
    %2766 = vmatprep.subr.mxu0 0.0
    %2767 = vmatpush1.msra.mxu0 0.0
    %2768 = vmatprep.subr.mxu0 0.0
    %2769 = vmatpush1.msra.mxu0 0.0
    %2770 = vmatprep.subr.mxu0 0.0
    %2771 = vmatpush1.msra.mxu0 0.0
    %2772 = vmatprep.subr.mxu0 0.0
    %2773 = vmatpush1.msra.mxu0 0.0
    %2774 = vmatprep.subr.mxu0 0.0
    %2775 = vmatpush1.msra.mxu0 0.0
    %2776 = vmatprep.subr.mxu0 0.0
    %2777 = vmatpush1.msra.mxu0 0.0
    %2778 = vmatprep.subr.mxu0 0.0
    %2779 = vmatpush1.msra.mxu0 0.0
    %2780 = vmatprep.subr.mxu0 0.0
    %2781 = vmatpush1.msra.mxu0 0.0
    %2782 = vmatprep.subr.mxu0 0.0
    %2783 = vmatpush1.msra.mxu0 0.0
    %2784 = vmatprep.subr.mxu0 0.0
    %2785 = vmatpush1.msra.mxu0 0.0
    %2786 = vmatprep.subr.mxu0 0.0
    %2787 = vmatpush1.msra.mxu0 0.0
    %2788 = vmatprep.subr.mxu0 0.0
    %2789 = vmatpush1.msra.mxu0 %v2743
    %2790 = vmatprep.subr.mxu0 0.0
    %2791 = vmatpush1.msra.mxu0 %v2742
    %2792 = vmatprep.subr.mxu0 0.0
    %2793 = vmatpush2.msra.mxu0 0.0
    %2794 = vmatprep.subr.mxu0 0.0
    %2795 = vmatpush2.msra.mxu0 0.0
    %2796 = vmatprep.subr.mxu0 0.0
    %2797 = vmatpush2.msra.mxu0 0.0
    %2798 = vmatprep.subr.mxu0 0.0
    %2799 = vmatpush2.msra.mxu0 0.0
    %2800 = vmatprep.subr.mxu0 0.0
    %2801 = vmatpush2.msra.mxu0 0.0
    %2802 = vmatprep.subr.mxu0 0.0
    %2803 = vmatpush2.msra.mxu0 0.0
    %2804 = vmatprep.subr.mxu0 0.0
    %2805 = vmatpush2.msra.mxu0 0.0
    %2806 = vmatprep.subr.mxu0 0.0
    %2807 = vmatpush2.msra.mxu0 0.0
    %2808 = vmatprep.subr.mxu0 0.0
    %2809 = vmatpush2.msra.mxu0 0.0
    %2810 = vmatprep.subr.mxu0 0.0
    %2811 = vmatpush2.msra.mxu0 0.0
    %2812 = vmatprep.subr.mxu0 0.0
    %2813 = vmatpush2.msra.mxu0 0.0
    %2814 = vmatprep.subr.mxu0 0.0
    %2815 = vmatpush2.msra.mxu0 0.0
    %2816 = vmatprep.subr.mxu0 0.0
    %2817 = vmatpush2.msra.mxu0 0.0
    %2818 = vmatprep.subr.mxu0 0.0
    %2819 = vmatpush2.msra.mxu0 0.0
    %2820 = vmatprep.subr.mxu0 0.0
    %2821 = vmatpush2.msra.mxu0 0.0
    %2822 = vmatprep.subr.mxu0 0.0
    %2823 = vmatpush2.msra.mxu0 0.0
    %2824 = vmatprep.mubr.f32.mxu0 0.0
    %2825 = vmatmul.mubr.f32.gmra.mxu0 %v2758
    %v2826 = vpop.f32.mrf.mxu0
    %v2827 = vadd.f32 0.0, %v2826
    %v2828 = vpop.f32.mrf.mxu0
    %2829 = vdwg.mxu0
    %v2830 = vadd.f32 %v2741, %v2827
    %v2831 = vld [vmem:[%s8] sm:$0xff]
    %v2832 = vld [vmem:[%s9] sm:$0x1f]
    %vm2833 = vcmask 39936
    %v2835 = vsel %vm2833, %v2831, 0
    %vm2837 = vcmask 1044480
    %v2839 = vsel %vm2837, %v2832, 0
    %2841 = vmatprep.subr.mxu0 0.0
    %2842 = vmatpush1.msra.mxu0 0.0
    %2843 = vmatprep.subr.mxu0 0.0
    %2844 = vmatpush1.msra.mxu0 0.0
    %2845 = vmatprep.subr.mxu0 0.0
    %2846 = vmatpush1.msra.mxu0 0.0
    %2847 = vmatprep.subr.mxu0 0.0
    %2848 = vmatpush1.msra.mxu0 0.0
    %2849 = vmatprep.subr.mxu0 0.0
    %2850 = vmatpush1.msra.mxu0 0.0
    %2851 = vmatprep.subr.mxu0 0.0
    %2852 = vmatpush1.msra.mxu0 0.0
    %2853 = vmatprep.subr.mxu0 0.0
    %2854 = vmatpush1.msra.mxu0 0.0
    %2855 = vmatprep.subr.mxu0 0.0
    %2856 = vmatpush1.msra.mxu0 0.0
    %2857 = vmatprep.subr.mxu0 0.0
    %2858 = vmatpush1.msra.mxu0 0.0
    %2859 = vmatprep.subr.mxu0 0.0
    %2860 = vmatpush1.msra.mxu0 0.0
    %2861 = vmatprep.subr.mxu0 0.0
    %2862 = vmatpush1.msra.mxu0 0.0
    %2863 = vmatprep.subr.mxu0 0.0
    %2864 = vmatpush1.msra.mxu0 0.0
    %2865 = vmatprep.subr.mxu0 0.0
    %2866 = vmatpush1.msra.mxu0 0.0
    %2867 = vmatprep.subr.mxu0 0.0
    %2868 = vmatpush1.msra.mxu0 0.0
    %2869 = vmatprep.subr.mxu0 0.0
    %2870 = vmatpush1.msra.mxu0 0.0
    %2871 = vmatprep.subr.mxu0 0.0
    %2872 = vmatpush1.msra.mxu0 %v2839
    %2873 = vmatprep.subr.mxu0 0.0
    %2874 = vmatpush2.msra.mxu0 0.0
    %2875 = vmatprep.subr.mxu0 0.0
    %2876 = vmatpush2.msra.mxu0 0.0
    %2877 = vmatprep.subr.mxu0 0.0
    %2878 = vmatpush2.msra.mxu0 0.0
    %2879 = vmatprep.subr.mxu0 0.0
    %2880 = vmatpush2.msra.mxu0 0.0
    %2881 = vmatprep.subr.mxu0 0.0
    %2882 = vmatpush2.msra.mxu0 0.0
    %2883 = vmatprep.subr.mxu0 0.0
    %2884 = vmatpush2.msra.mxu0 0.0
    %2885 = vmatprep.subr.mxu0 0.0
    %2886 = vmatpush2.msra.mxu0 0.0
    %2887 = vmatprep.subr.mxu0 0.0
    %2888 = vmatpush2.msra.mxu0 0.0
    %2889 = vmatprep.subr.mxu0 0.0
    %2890 = vmatpush2.msra.mxu0 0.0
    %2891 = vmatprep.subr.mxu0 0.0
    %2892 = vmatpush2.msra.mxu0 0.0
    %2893 = vmatprep.subr.mxu0 0.0
    %2894 = vmatpush2.msra.mxu0 0.0
    %2895 = vmatprep.subr.mxu0 0.0
    %2896 = vmatpush2.msra.mxu0 0.0
    %2897 = vmatprep.subr.mxu0 0.0
    %2898 = vmatpush2.msra.mxu0 0.0
    %2899 = vmatprep.subr.mxu0 0.0
    %2900 = vmatpush2.msra.mxu0 0.0
    %2901 = vmatprep.subr.mxu0 0.0
    %2902 = vmatpush2.msra.mxu0 0.0
    %2903 = vmatprep.subr.mxu0 0.0
    %2904 = vmatpush2.msra.mxu0 0.0
    %2905 = vmatprep.mubr.f32.mxu0 0.0
    %2906 = vmatmul.mubr.f32.gmra.mxu0 %v2835
    %v2907 = vpop.f32.mrf.mxu0
    %v2908 = vadd.f32 0.0, %v2907
    %v2909 = vpop.f32.mrf.mxu0
    %2910 = vdwg.mxu0
    %v2911 = vadd.f32 %v2830, %v2908
    %v2912 = vld [vmem:[%s7] sm:$0x1]
    %v2914 = vlaneseq
    %v2915 = vshrl.u32 %v2914, 7
    %v2916 = vsub.s32 0, %v2915
    %v2917 = vrot.slane %v2912, %v2916
    %v2919 = vadd.f32 %v2911, %v2917
    %v2920 = vmax.f32 %v2919, 0.0
    %v2921 = vld [vmem:[%s10] sm:$0xff]
    %v2922 = vld [vmem:[%s10 + $0x8] sm:$0xff]
    %v2923 = vld [vmem:[%s10 + $0x10] sm:$0xff]
    %v2924 = vld [vmem:[%s10 + $0x18] sm:$0xff]
    %v2925 = vld [vmem:[%s11] sm:$0x1]
    %v2927 = vlaneseq
    %v2928 = vshrl.u32 %v2927, 7
    %v2929 = vsub.s32 0, %v2928
    %v2930 = vrot.slane %v2925, %v2929
    %vm2932 = vcmask 261120
    %v2934 = vsel %vm2932, %v2920, 0
    %2936 = vmatprep.subr.mxu0 0.0
    %2937 = vmatpush1.msra.mxu0 0.0
    %2938 = vmatprep.subr.mxu0 0.0
    %2939 = vmatpush1.msra.mxu0 0.0
    %2940 = vmatprep.subr.mxu0 0.0
    %2941 = vmatpush1.msra.mxu0 0.0
    %2942 = vmatprep.subr.mxu0 0.0
    %2943 = vmatpush1.msra.mxu0 0.0
    %2944 = vmatprep.subr.mxu0 0.0
    %2945 = vmatpush1.msra.mxu0 0.0
    %2946 = vmatprep.subr.mxu0 0.0
    %2947 = vmatpush1.msra.mxu0 0.0
    %2948 = vmatprep.subr.mxu0 0.0
    %2949 = vmatpush1.msra.mxu0 0.0
    %2950 = vmatprep.subr.mxu0 0.0
    %2951 = vmatpush1.msra.mxu0 0.0
    %2952 = vmatprep.subr.mxu0 0.0
    %2953 = vmatpush1.msra.mxu0 0.0
    %2954 = vmatprep.subr.mxu0 0.0
    %2955 = vmatpush1.msra.mxu0 0.0
    %2956 = vmatprep.subr.mxu0 0.0
    %2957 = vmatpush1.msra.mxu0 0.0
    %2958 = vmatprep.subr.mxu0 0.0
    %2959 = vmatpush1.msra.mxu0 0.0
    %2960 = vmatprep.subr.mxu0 0.0
    %2961 = vmatpush1.msra.mxu0 %v2924
    %2962 = vmatprep.subr.mxu0 0.0
    %2963 = vmatpush1.msra.mxu0 %v2923
    %2964 = vmatprep.subr.mxu0 0.0
    %2965 = vmatpush1.msra.mxu0 %v2922
    %2966 = vmatprep.subr.mxu0 0.0
    %2967 = vmatpush1.msra.mxu0 %v2921
    %2968 = vmatprep.subr.mxu0 0.0
    %2969 = vmatpush2.msra.mxu0 0.0
    %2970 = vmatprep.subr.mxu0 0.0
    %2971 = vmatpush2.msra.mxu0 0.0
    %2972 = vmatprep.subr.mxu0 0.0
    %2973 = vmatpush2.msra.mxu0 0.0
    %2974 = vmatprep.subr.mxu0 0.0
    %2975 = vmatpush2.msra.mxu0 0.0
    %2976 = vmatprep.subr.mxu0 0.0
    %2977 = vmatpush2.msra.mxu0 0.0
    %2978 = vmatprep.subr.mxu0 0.0
    %2979 = vmatpush2.msra.mxu0 0.0
    %2980 = vmatprep.subr.mxu0 0.0
    %2981 = vmatpush2.msra.mxu0 0.0
    %2982 = vmatprep.subr.mxu0 0.0
    %2983 = vmatpush2.msra.mxu0 0.0
    %2984 = vmatprep.subr.mxu0 0.0
    %2985 = vmatpush2.msra.mxu0 0.0
    %2986 = vmatprep.subr.mxu0 0.0
    %2987 = vmatpush2.msra.mxu0 0.0
    %2988 = vmatprep.subr.mxu0 0.0
    %2989 = vmatpush2.msra.mxu0 0.0
    %2990 = vmatprep.subr.mxu0 0.0
    %2991 = vmatpush2.msra.mxu0 0.0
    %2992 = vmatprep.subr.mxu0 0.0
    %2993 = vmatpush2.msra.mxu0 0.0
    %2994 = vmatprep.subr.mxu0 0.0
    %2995 = vmatpush2.msra.mxu0 0.0
    %2996 = vmatprep.subr.mxu0 0.0
    %2997 = vmatpush2.msra.mxu0 0.0
    %2998 = vmatprep.subr.mxu0 0.0
    %2999 = vmatpush2.msra.mxu0 0.0
    %3000 = vmatprep.mubr.f32.mxu0 0.0
    %3001 = vmatmul.mubr.f32.gmra.mxu0 %v2934
    %v3002 = vpop.f32.mrf.mxu0
    %v3003 = vadd.f32 %v2930, %v3002
    %v3004 = vpop.f32.mrf.mxu0
    %3005 = vdwg.mxu0
    %3006 = vst.msk [vmem:[#allocation3] sm:$0xff] %vm103, %v3003
    // Predicated region
    $region50: #{tpu_custom_call.1} parent=1 // pred_check
      _
    $region51: #{tpu_custom_call.1} parent=1 // pred_check_branch
      %3008 = sbr.rel (0) target = $region53
    $region52: #{tpu_custom_call.1} parent=1 // pred_region
      %s3010 = ssub.s32 128, 128
      %3011 = vsyncadd [#allocation4], %s3010
      %s3013 = sshll.u32 [#allocation3], 4
      %s3014 = int_to_ptr.vmem [resolvable:$true] %s3013
      %3016 = dma.vmem_to_hbm [thread:$0]  %s3014, 128, %s12, [#allocation4]
    $region53: #{tpu_custom_call.1} parent=1 // pred_fallthru
      _
    // Predicated region
    $region54: #{tpu_custom_call.1} parent=1 // pred_check
      _
    $region55: #{tpu_custom_call.1} parent=1 // pred_check_branch
      %3018 = sbr.rel (0) target = $region57
    $region56: #{tpu_custom_call.1} parent=1 // pred_region
      %3019 = dma.done [#allocation4], 128
    $region57: #{tpu_custom_call.1} parent=1 // pred_fallthru
      _
    %3020 = vsyncpa [#allocation4], 1

</llo_original>
